<compile_context>
chip_gen: v7x
topology: tpu7x:2x2x1
jax: 0.10.0
libtpu: 0.0.40
codegen_flags: <defaults>
</compile_context>

<pallas_src>
import jax
import jax.numpy as jnp
from jax import lax
from jax.experimental import pallas as pl
from jax.experimental.pallas import tpu as pltpu


# ----------------------------------------------------------------------------
# Pallas kernels
# ----------------------------------------------------------------------------
def _conv_relu_pool_kernel(p_ref, w_ref, b_ref, o_ref):
    """Fused conv (as one matmul) + bias + ReLU + 2x2 max-pool.

    p_ref : (1, 4*PHW, K)  im2col patches for one batch element; the 4x factor
                           stacks the 4 positions of each 2x2 pool window.
    w_ref : (K, 128)       weights, Cout zero-padded to 128 (lane-dense).
    b_ref : (1, 128)
    o_ref : (1, PHW, 128)
    """
    phw = o_ref.shape[1]
    y = jnp.dot(p_ref[0], w_ref[...], preferred_element_type=jnp.float32)
    y = jnp.maximum(y + b_ref[...], 0.0)            # bias + ReLU (before pooling)
    pooled = jnp.maximum(
        jnp.maximum(y[0 * phw:1 * phw], y[1 * phw:2 * phw]),
        jnp.maximum(y[2 * phw:3 * phw], y[3 * phw:4 * phw]))
    o_ref[0, :, :] = pooled.astype(o_ref.dtype)


def _mlp_kernel(x_ref, w1_ref, b1_ref, w2_ref, b2_ref, w3_ref, b3_ref, o_ref):
    """fc1 -> ReLU -> fc2 -> ReLU -> fc3; bf16 weights/activations, f32 accum."""
    x = x_ref[...].astype(jnp.bfloat16)
    h1 = jnp.dot(x, w1_ref[...], preferred_element_type=jnp.float32) + b1_ref[...]
    h1 = jnp.maximum(h1, 0.0).astype(jnp.bfloat16)
    h2 = jnp.dot(h1, w2_ref[...], preferred_element_type=jnp.float32) + b2_ref[...]
    h2 = jnp.maximum(h2, 0.0).astype(jnp.bfloat16)
    o = jnp.dot(h2, w3_ref[...], preferred_element_type=jnp.float32) + b3_ref[...]
    o_ref[...] = o.astype(o_ref.dtype)


# ----------------------------------------------------------------------------
# pallas_call wrappers
# ----------------------------------------------------------------------------
def conv_relu_pool(p, w, b, phw):
    """p: (B, 4*phw, K) f32; w: (K, 128); b: (1, 128) -> (B, phw, 128) f32."""
    bsz, rows, k = p.shape
    cout = w.shape[1]
    assert rows == 4 * phw
    return pl.pallas_call(
        _conv_relu_pool_kernel,
        out_shape=jax.ShapeDtypeStruct((bsz, phw, cout), jnp.float32),
        grid=(bsz,),
        in_specs=[
            pl.BlockSpec((1, 4 * phw, k), lambda i: (i, 0, 0)),
            pl.BlockSpec((k, cout), lambda i: (0, 0)),      # resident weights
            pl.BlockSpec((1, cout), lambda i: (0, 0)),
        ],
        out_specs=pl.BlockSpec((1, phw, cout), lambda i: (i, 0, 0)),
        compiler_params=pltpu.CompilerParams(
            dimension_semantics=("parallel",)),             # shards v7x's 2 TCs
    )(p, w, b)


def mlp(x, w1, b1, w2, b2, w3, b3):
    bsz, din = x.shape
    d1, d2, nout = w1.shape[1], w2.shape[1], w3.shape[1]
    tb = bsz if (bsz <= 256 or bsz % 256) else 256          # batch tile (tb | bsz)
    flops = 2 * bsz * (din * d1 + d1 * d2 + d2 * nout)
    bytes_accessed = (4 * bsz * (din + nout) + 4 * (d1 + d2 + nout)
                      + 2 * (din * d1 + d1 * d2 + d2 * nout))
    return pl.pallas_call(
        _mlp_kernel,
        out_shape=jax.ShapeDtypeStruct((bsz, nout), jnp.float32),
        grid=(bsz // tb,),
        in_specs=[
            pl.BlockSpec((tb, din), lambda i: (i, 0)),
            pl.BlockSpec((din, d1), lambda i: (0, 0)),
            pl.BlockSpec((1, d1), lambda i: (0, 0)),
            pl.BlockSpec((d1, d2), lambda i: (0, 0)),
            pl.BlockSpec((1, d2), lambda i: (0, 0)),
            pl.BlockSpec((d2, nout), lambda i: (0, 0)),
            pl.BlockSpec((1, nout), lambda i: (0, 0)),
        ],
        out_specs=pl.BlockSpec((tb, nout), lambda i: (i, 0)),
        compiler_params=pltpu.CompilerParams(
            dimension_semantics=("parallel",)),
        # weight-streaming bound at small B: hint XLA to schedule transfers early
        cost_estimate=pl.CostEstimate(
            flops=flops, transcendentals=0, bytes_accessed=bytes_accessed),
    )(x, w1, b1, w2, b2, w3, b3)


# ----------------------------------------------------------------------------
# Glue: im2col + 2x2 pool-window grouping (pure data rearrangement, no FLOPs)
# ----------------------------------------------------------------------------
def im2col_pool_groups(x, k=5, pad_k_to=None):
    """x: (B,H,W,C) NHWC -> ((B, 4*PH*PW, K), PH, PW).

    Rows are ordered (pool-window-position, pooled-row, pooled-col); patch
    features are ordered (ki, kj, cin), matching the packed conv weights.
    """
    b, h, w, c = x.shape
    oh, ow = h - k + 1, w - k + 1
    ph, pw = oh // 2, ow // 2
    cols = [x[:, ki:ki + oh, kj:kj + ow, :] for ki in range(k) for kj in range(k)]
    patches = jnp.concatenate(cols, axis=-1)                  # (B, OH, OW, k*k*C)
    groups = [patches[:, p::2, q::2, :] for p in (0, 1) for q in (0, 1)]
    pm = jnp.stack(groups, axis=1).reshape(b, 4 * ph * pw, k * k * c)
    if pad_k_to is not None and pad_k_to > k * k * c:
        pm = jnp.pad(pm, ((0, 0), (0, 0), (0, pad_k_to - k * k * c)))
    return pm, ph, pw


# ----------------------------------------------------------------------------
# LeNet forward
# ----------------------------------------------------------------------------
def lenet_forward(x_nchw, params):
    b = x_nchw.shape[0]
    x = jnp.transpose(x_nchw, (0, 2, 3, 1))                   # NCHW -> NHWC

    # conv1 (1->20, 5x5) + ReLU + 2x2 pool : 28x28 -> 24x24 -> 12x12
    p1, ph, pw = im2col_pool_groups(x, 5, pad_k_to=32)        # (B, 576, 32)
    l1 = conv_relu_pool(p1, params["w1m"], params["b1"], ph * pw)   # (B, 144, 128)
    # keep 24 channels (20 real + 4 exact zeros) so conv2's K=600 stays 8-aligned
    l1 = l1.reshape(b, ph, pw, 128)[..., :24]

    # conv2 (20->50, 5x5) + ReLU + 2x2 pool : 12x12 -> 8x8 -> 4x4
    p2, ph, pw = im2col_pool_groups(l1, 5)                    # (B, 64, 600)
    l2 = conv_relu_pool(p2, params["w2m"], params["b2"], ph * pw)   # (B, 16, 128)

    # flatten in (h, w, c) order; PyTorch's NCHW .view() (c, h, w) permutation
    # is baked into the rows of wf1 at init time (zero runtime cost).
    flat = l2.reshape(b, ph, pw, 128)[..., :50].reshape(b, 50 * ph * pw)

    return mlp(flat, params["wf1"], params["bf1"],
               params["wf2"], params["bf2"],
               params["wf3"], params["bf3"])


# ----------------------------------------------------------------------------
# Parameters: raw PyTorch-layout weights + packed kernel-friendly layouts
# ----------------------------------------------------------------------------
def init_params(key):
    ks = jax.random.split(key, 5)

    def kaiming(kk, shape, fan_in):
        return jax.random.normal(kk, shape, jnp.float32) * jnp.sqrt(2.0 / fan_in)

    # raw, PyTorch-layout parameters (also consumed by the pure-JAX reference)
    w1 = kaiming(ks[0], (20, 1, 5, 5), 1 * 5 * 5)             # (Cout, Cin, KH, KW)
    w2 = kaiming(ks[1], (50, 20, 5, 5), 20 * 5 * 5)
    wf1_t = kaiming(ks[2], (800, 800), 800).astype(jnp.bfloat16)  # (in,out), torch (c,h,w) rows
    wf2 = kaiming(ks[3], (800, 500), 800).astype(jnp.bfloat16)
    wf3 = kaiming(ks[4], (500, 10), 500).astype(jnp.bfloat16)
    b1 = jnp.zeros((20,), jnp.float32)
    b2 = jnp.zeros((50,), jnp.float32)
    bf1 = jnp.zeros((800,), jnp.float32)
    bf2 = jnp.zeros((500,), jnp.float32)
    bf3 = jnp.zeros((10,), jnp.float32)

    # conv1: (ki,kj,cin) x cout, K 25->32 (sublane-aligned), Cout 20->128 (lane-dense)
    w1m = jnp.pad(jnp.transpose(w1, (2, 3, 1, 0)).reshape(25, 20), ((0, 7), (0, 108)))
    b1p = jnp.pad(b1, (0, 108)).reshape(1, 128)
    # conv2: input carried as 24 channels (20 real + 4 zero), Cout 50->128
    w2m = jnp.pad(jnp.transpose(w2, (2, 3, 1, 0)),
                  ((0, 0), (0, 0), (0, 4), (0, 78))).reshape(600, 128)
    b2p = jnp.pad(b2, (0, 78)).reshape(1, 128)
    # fc1: permute rows from torch's (c,h,w) flatten order to our (h,w,c) order
    wf1 = wf1_t.reshape(50, 4, 4, 800).transpose(1, 2, 0, 3).reshape(800, 800)

    params = {
        "w1m": w1m, "b1": b1p, "w2m": w2m, "b2": b2p,
        "wf1": wf1, "bf1": bf1.reshape(1, 800),
        "wf2": wf2, "bf2": bf2.reshape(1, 500),
        "wf3": wf3, "bf3": bf3.reshape(1, 10),
    }
    raw = {"w1": w1, "b1": b1, "w2": w2, "b2": b2,
           "wf1": wf1_t.astype(jnp.float32), "bf1": bf1,
           "wf2": wf2.astype(jnp.float32), "bf2": bf2,
           "wf3": wf3.astype(jnp.float32), "bf3": bf3}
    return params, raw


def lenet_reference(x_nchw, raw):
    """Pure-JAX (XLA) reference matching the PyTorch forward (f32 end-to-end;
    fc weights are the same bf16-rounded values cast back to f32)."""
    def conv(x, w, bias):
        y = lax.conv_general_dilated(x, w, (1, 1), "VALID",
                                     dimension_numbers=("NCHW", "OIHW", "NCHW"))
        return jnp.maximum(y + bias.reshape(1, -1, 1, 1), 0.0)

    def pool2(x):
        bsz, c, h, w = x.shape
        return x.reshape(bsz, c, h // 2, 2, w // 2, 2).max(axis=(3, 5))

    y = pool2(conv(x_nchw, raw["w1"], raw["b1"]))
    y = pool2(conv(y, raw["w2"], raw["b2"]))
    f = y.reshape(y.shape[0], -1)                            # NCHW .view() flatten
    h1 = jnp.maximum(f @ raw["wf1"] + raw["bf1"], 0.0)
    h2 = jnp.maximum(h1 @ raw["wf2"] + raw["bf2"], 0.0)
    return h2 @ raw["wf3"] + raw["bf3"]


if __name__ == "__main__":
    key = jax.random.PRNGKey(0)
    k_x, k_p = jax.random.split(key)

    # MNIST-sized input implied by fc1 = Linear(50*4*4, 800): (B, 1, 28, 28)
    x = jax.random.normal(k_x, (2, 1, 28, 28), jnp.float32)
    params, raw = init_params(k_p)

    out = jax.jit(lenet_forward)(x, params)
    out = jax.block_until_ready(out)
    assert out.shape == (2, 10) and out.dtype == jnp.float32

    ref = lenet_reference(x, raw)
    assert jnp.allclose(out, ref, rtol=5e-2, atol=2e-1), (
        f"max |diff| = {jnp.max(jnp.abs(out - ref))}")
    print("KERNEL_OK")
</pallas_src>

<mosaic_0001>
module attributes {stable_mosaic.version = 11 : i64} {
  func.func @_conv_relu_pool_kernel(%arg0: i32, %arg1: memref<1x576x32xf32, #tpu.memory_space<vmem>>, %arg2: memref<32x128xf32, #tpu.memory_space<vmem>>, %arg3: memref<1x128xf32, #tpu.memory_space<vmem>>, %arg4: memref<1x144x128xf32, #tpu.memory_space<vmem>>) attributes {dimension_semantics = [#tpu.dimension_semantics<parallel>], iteration_bounds = array<i64: 2>, scalar_prefetch = 0 : i64, scratch_operands = 0 : i64, tpu.core_type = #tpu.core_type<tc>, window_params = [{transform_indices = @transform_0, window_bounds = array<i64: 1, 576, 32>}, {pipeline_mode = #tpu.pipeline_mode<synchronous>, transform_indices = @transform_1, window_bounds = array<i64: 32, 128>}, {pipeline_mode = #tpu.pipeline_mode<synchronous>, transform_indices = @transform_2, window_bounds = array<i64: 1, 128>}, {transform_indices = @transform_3, window_bounds = array<i64: 1, 144, 128>}]} {
    %c0 = arith.constant 0 : index
    %c0_0 = arith.constant 0 : index
    %c0_1 = arith.constant 0 : index
    %0 = vector.load %arg1[%c0, %c0_0, %c0_1] : memref<1x576x32xf32, #tpu.memory_space<vmem>>, vector<1x576x32xf32>
    %1 = vector.shape_cast %0 : vector<1x576x32xf32> to vector<576x32xf32>
    %c0_2 = arith.constant 0 : index
    %c0_3 = arith.constant 0 : index
    %2 = vector.load %arg2[%c0_2, %c0_3] : memref<32x128xf32, #tpu.memory_space<vmem>>, vector<32x128xf32>
    %cst = arith.constant dense<0.000000e+00> : vector<576x128xf32>
    %3 = tpu.matmul %1, %2, %cst {dimension_numbers = #tpu.dot_dimension_numbers<[1], [0], [0], [1], [0, 0, 1, 1], [], []>} : vector<576x32xf32>, vector<32x128xf32>, vector<576x128xf32> -> vector<576x128xf32>
    %c0_4 = arith.constant 0 : index
    %c0_5 = arith.constant 0 : index
    %4 = vector.load %arg3[%c0_4, %c0_5] : memref<1x128xf32, #tpu.memory_space<vmem>>, vector<1x128xf32>
    %5 = vector.broadcast %4 : vector<1x128xf32> to vector<576x128xf32>
    %6 = arith.addf %3, %5 : vector<576x128xf32>
    %cst_6 = arith.constant 0.000000e+00 : f32
    %7 = vector.broadcast %cst_6 : f32 to vector<576x128xf32>
    %8 = arith.maximumf %6, %7 : vector<576x128xf32>
    %9 = vector.extract_strided_slice %8 {offsets = [0, 0], sizes = [144, 128], strides = [1, 1]} : vector<576x128xf32> to vector<144x128xf32>
    %10 = vector.extract_strided_slice %8 {offsets = [144, 0], sizes = [144, 128], strides = [1, 1]} : vector<576x128xf32> to vector<144x128xf32>
    %11 = arith.maximumf %9, %10 : vector<144x128xf32>
    %12 = vector.extract_strided_slice %8 {offsets = [288, 0], sizes = [144, 128], strides = [1, 1]} : vector<576x128xf32> to vector<144x128xf32>
    %13 = vector.extract_strided_slice %8 {offsets = [432, 0], sizes = [144, 128], strides = [1, 1]} : vector<576x128xf32> to vector<144x128xf32>
    %14 = arith.maximumf %12, %13 : vector<144x128xf32>
    %15 = arith.maximumf %11, %14 : vector<144x128xf32>
    %c0_7 = arith.constant 0 : index
    %c0_8 = arith.constant 0 : index
    %c0_9 = arith.constant 0 : index
    %16 = vector.load %arg4[%c0_7, %c0_8, %c0_9] : memref<1x144x128xf32, #tpu.memory_space<vmem>>, vector<1x144x128xf32>
    %17 = vector.shape_cast %16 : vector<1x144x128xf32> to vector<144x128xf32>
    %18 = vector.shape_cast %15 : vector<144x128xf32> to vector<1x144x128xf32>
    tpu.vector_store %arg4[%c0_7, %c0_8, %c0_9], %18 {strides = array<i32>} : memref<1x144x128xf32, #tpu.memory_space<vmem>>, vector<1x144x128xf32>,
    return
  }
  func.func @transform_0(%arg0: i32) -> (i32, i32, i32) {
    %c0_i32 = arith.constant 0 : i32
    %c0_i32_0 = arith.constant 0 : i32
    %c0_i32_1 = arith.constant 0 : i32
    return %arg0, %c0_i32, %c0_i32_0 : i32, i32, i32
  }
  func.func @transform_1(%arg0: i32) -> (i32, i32) {
    %c0_i32 = arith.constant 0 : i32
    %c0_i32_0 = arith.constant 0 : i32
    %c0_i32_1 = arith.constant 0 : i32
    return %c0_i32, %c0_i32_0 : i32, i32
  }
  func.func @transform_2(%arg0: i32) -> (i32, i32) {
    %c0_i32 = arith.constant 0 : i32
    %c0_i32_0 = arith.constant 0 : i32
    %c0_i32_1 = arith.constant 0 : i32
    return %c0_i32, %c0_i32_0 : i32, i32
  }
  func.func @transform_3(%arg0: i32) -> (i32, i32, i32) {
    %c0_i32 = arith.constant 0 : i32
    %c0_i32_0 = arith.constant 0 : i32
    %c0_i32_1 = arith.constant 0 : i32
    return %arg0, %c0_i32, %c0_i32_0 : i32, i32, i32
  }
}

module attributes {stable_mosaic.version = 11 : i64} {
  func.func @_conv_relu_pool_kernel(%arg0: i32, %arg1: memref<1x64x600xf32, #tpu.memory_space<vmem>>, %arg2: memref<600x128xf32, #tpu.memory_space<vmem>>, %arg3: memref<1x128xf32, #tpu.memory_space<vmem>>, %arg4: memref<1x16x128xf32, #tpu.memory_space<vmem>>) attributes {dimension_semantics = [#tpu.dimension_semantics<parallel>], iteration_bounds = array<i64: 2>, scalar_prefetch = 0 : i64, scratch_operands = 0 : i64, tpu.core_type = #tpu.core_type<tc>, window_params = [{transform_indices = @transform_0, window_bounds = array<i64: 1, 64, 600>}, {pipeline_mode = #tpu.pipeline_mode<synchronous>, transform_indices = @transform_1, window_bounds = array<i64: 600, 128>}, {pipeline_mode = #tpu.pipeline_mode<synchronous>, transform_indices = @transform_2, window_bounds = array<i64: 1, 128>}, {transform_indices = @transform_3, window_bounds = array<i64: 1, 16, 128>}]} {
    %c0 = arith.constant 0 : index
    %c0_0 = arith.constant 0 : index
    %c0_1 = arith.constant 0 : index
    %0 = vector.load %arg1[%c0, %c0_0, %c0_1] : memref<1x64x600xf32, #tpu.memory_space<vmem>>, vector<1x64x600xf32>
    %1 = vector.shape_cast %0 : vector<1x64x600xf32> to vector<64x600xf32>
    %c0_2 = arith.constant 0 : index
    %c0_3 = arith.constant 0 : index
    %2 = vector.load %arg2[%c0_2, %c0_3] : memref<600x128xf32, #tpu.memory_space<vmem>>, vector<600x128xf32>
    %cst = arith.constant dense<0.000000e+00> : vector<64x128xf32>
    %3 = tpu.matmul %1, %2, %cst {dimension_numbers = #tpu.dot_dimension_numbers<[1], [0], [0], [1], [0, 0, 1, 1], [], []>} : vector<64x600xf32>, vector<600x128xf32>, vector<64x128xf32> -> vector<64x128xf32>
    %c0_4 = arith.constant 0 : index
    %c0_5 = arith.constant 0 : index
    %4 = vector.load %arg3[%c0_4, %c0_5] : memref<1x128xf32, #tpu.memory_space<vmem>>, vector<1x128xf32>
    %5 = vector.broadcast %4 : vector<1x128xf32> to vector<64x128xf32>
    %6 = arith.addf %3, %5 : vector<64x128xf32>
    %cst_6 = arith.constant 0.000000e+00 : f32
    %7 = vector.broadcast %cst_6 : f32 to vector<64x128xf32>
    %8 = arith.maximumf %6, %7 : vector<64x128xf32>
    %9 = vector.extract_strided_slice %8 {offsets = [0, 0], sizes = [16, 128], strides = [1, 1]} : vector<64x128xf32> to vector<16x128xf32>
    %10 = vector.extract_strided_slice %8 {offsets = [16, 0], sizes = [16, 128], strides = [1, 1]} : vector<64x128xf32> to vector<16x128xf32>
    %11 = arith.maximumf %9, %10 : vector<16x128xf32>
    %12 = vector.extract_strided_slice %8 {offsets = [32, 0], sizes = [16, 128], strides = [1, 1]} : vector<64x128xf32> to vector<16x128xf32>
    %13 = vector.extract_strided_slice %8 {offsets = [48, 0], sizes = [16, 128], strides = [1, 1]} : vector<64x128xf32> to vector<16x128xf32>
    %14 = arith.maximumf %12, %13 : vector<16x128xf32>
    %15 = arith.maximumf %11, %14 : vector<16x128xf32>
    %c0_7 = arith.constant 0 : index
    %c0_8 = arith.constant 0 : index
    %c0_9 = arith.constant 0 : index
    %16 = vector.load %arg4[%c0_7, %c0_8, %c0_9] : memref<1x16x128xf32, #tpu.memory_space<vmem>>, vector<1x16x128xf32>
    %17 = vector.shape_cast %16 : vector<1x16x128xf32> to vector<16x128xf32>
    %18 = vector.shape_cast %15 : vector<16x128xf32> to vector<1x16x128xf32>
    tpu.vector_store %arg4[%c0_7, %c0_8, %c0_9], %18 {strides = array<i32>} : memref<1x16x128xf32, #tpu.memory_space<vmem>>, vector<1x16x128xf32>,
    return
  }
  func.func @transform_0(%arg0: i32) -> (i32, i32, i32) {
    %c0_i32 = arith.constant 0 : i32
    %c0_i32_0 = arith.constant 0 : i32
    %c0_i32_1 = arith.constant 0 : i32
    return %arg0, %c0_i32, %c0_i32_0 : i32, i32, i32
  }
  func.func @transform_1(%arg0: i32) -> (i32, i32) {
    %c0_i32 = arith.constant 0 : i32
    %c0_i32_0 = arith.constant 0 : i32
    %c0_i32_1 = arith.constant 0 : i32
    return %c0_i32, %c0_i32_0 : i32, i32
  }
  func.func @transform_2(%arg0: i32) -> (i32, i32) {
    %c0_i32 = arith.constant 0 : i32
    %c0_i32_0 = arith.constant 0 : i32
    %c0_i32_1 = arith.constant 0 : i32
    return %c0_i32, %c0_i32_0 : i32, i32
  }
  func.func @transform_3(%arg0: i32) -> (i32, i32, i32) {
    %c0_i32 = arith.constant 0 : i32
    %c0_i32_0 = arith.constant 0 : i32
    %c0_i32_1 = arith.constant 0 : i32
    return %arg0, %c0_i32, %c0_i32_0 : i32, i32, i32
  }
}

module attributes {stable_mosaic.version = 11 : i64} {
  func.func @_mlp_kernel(%arg0: i32, %arg1: memref<2x800xf32, #tpu.memory_space<vmem>>, %arg2: memref<800x800xbf16, #tpu.memory_space<vmem>>, %arg3: memref<1x800xf32, #tpu.memory_space<vmem>>, %arg4: memref<800x500xbf16, #tpu.memory_space<vmem>>, %arg5: memref<1x500xf32, #tpu.memory_space<vmem>>, %arg6: memref<500x10xbf16, #tpu.memory_space<vmem>>, %arg7: memref<1x10xf32, #tpu.memory_space<vmem>>, %arg8: memref<2x10xf32, #tpu.memory_space<vmem>>) attributes {dimension_semantics = [#tpu.dimension_semantics<parallel>], iteration_bounds = array<i64: 1>, scalar_prefetch = 0 : i64, scratch_operands = 0 : i64, tpu.core_type = #tpu.core_type<tc>, window_params = [{transform_indices = @transform_0, window_bounds = array<i64: 2, 800>}, {pipeline_mode = #tpu.pipeline_mode<synchronous>, transform_indices = @transform_1, window_bounds = array<i64: 800, 800>}, {pipeline_mode = #tpu.pipeline_mode<synchronous>, transform_indices = @transform_2, window_bounds = array<i64: 1, 800>}, {pipeline_mode = #tpu.pipeline_mode<synchronous>, transform_indices = @transform_3, window_bounds = array<i64: 800, 500>}, {pipeline_mode = #tpu.pipeline_mode<synchronous>, transform_indices = @transform_4, window_bounds = array<i64: 1, 500>}, {pipeline_mode = #tpu.pipeline_mode<synchronous>, transform_indices = @transform_5, window_bounds = array<i64: 500, 10>}, {pipeline_mode = #tpu.pipeline_mode<synchronous>, transform_indices = @transform_6, window_bounds = array<i64: 1, 10>}, {transform_indices = @transform_7, window_bounds = array<i64: 2, 10>}]} {
    %c0 = arith.constant 0 : index
    %c0_0 = arith.constant 0 : index
    %0 = vector.load %arg1[%c0, %c0_0] : memref<2x800xf32, #tpu.memory_space<vmem>>, vector<2x800xf32>
    %1 = arith.truncf %0 : vector<2x800xf32> to vector<2x800xbf16>
    %c0_1 = arith.constant 0 : index
    %c0_2 = arith.constant 0 : index
    %2 = vector.load %arg2[%c0_1, %c0_2] : memref<800x800xbf16, #tpu.memory_space<vmem>>, vector<800x800xbf16>
    %cst = arith.constant dense<0.000000e+00> : vector<2x800xf32>
    %3 = tpu.matmul %1, %2, %cst {dimension_numbers = #tpu.dot_dimension_numbers<[1], [0], [0], [1], [0, 0, 1, 1], [], []>} : vector<2x800xbf16>, vector<800x800xbf16>, vector<2x800xf32> -> vector<2x800xf32>
    %c0_3 = arith.constant 0 : index
    %c0_4 = arith.constant 0 : index
    %4 = vector.load %arg3[%c0_3, %c0_4] : memref<1x800xf32, #tpu.memory_space<vmem>>, vector<1x800xf32>
    %5 = vector.broadcast %4 : vector<1x800xf32> to vector<2x800xf32>
    %6 = arith.addf %3, %5 : vector<2x800xf32>
    %cst_5 = arith.constant 0.000000e+00 : f32
    %7 = vector.broadcast %cst_5 : f32 to vector<2x800xf32>
    %8 = arith.maximumf %6, %7 : vector<2x800xf32>
    %9 = arith.truncf %8 : vector<2x800xf32> to vector<2x800xbf16>
    %c0_6 = arith.constant 0 : index
    %c0_7 = arith.constant 0 : index
    %10 = vector.load %arg4[%c0_6, %c0_7] : memref<800x500xbf16, #tpu.memory_space<vmem>>, vector<800x500xbf16>
    %cst_8 = arith.constant dense<0.000000e+00> : vector<2x500xf32>
    %11 = tpu.matmul %9, %10, %cst_8 {dimension_numbers = #tpu.dot_dimension_numbers<[1], [0], [0], [1], [0, 0, 1, 1], [], []>} : vector<2x800xbf16>, vector<800x500xbf16>, vector<2x500xf32> -> vector<2x500xf32>
    %c0_9 = arith.constant 0 : index
    %c0_10 = arith.constant 0 : index
    %12 = vector.load %arg5[%c0_9, %c0_10] : memref<1x500xf32, #tpu.memory_space<vmem>>, vector<1x500xf32>
    %13 = vector.broadcast %12 : vector<1x500xf32> to vector<2x500xf32>
    %14 = arith.addf %11, %13 : vector<2x500xf32>
    %cst_11 = arith.constant 0.000000e+00 : f32
    %15 = vector.broadcast %cst_11 : f32 to vector<2x500xf32>
    %16 = arith.maximumf %14, %15 : vector<2x500xf32>
    %17 = arith.truncf %16 : vector<2x500xf32> to vector<2x500xbf16>
    %c0_12 = arith.constant 0 : index
    %c0_13 = arith.constant 0 : index
    %18 = vector.load %arg6[%c0_12, %c0_13] : memref<500x10xbf16, #tpu.memory_space<vmem>>, vector<500x10xbf16>
    %cst_14 = arith.constant dense<0.000000e+00> : vector<2x10xf32>
    %19 = tpu.matmul %17, %18, %cst_14 {dimension_numbers = #tpu.dot_dimension_numbers<[1], [0], [0], [1], [0, 0, 1, 1], [], []>} : vector<2x500xbf16>, vector<500x10xbf16>, vector<2x10xf32> -> vector<2x10xf32>
    %c0_15 = arith.constant 0 : index
    %c0_16 = arith.constant 0 : index
    %20 = vector.load %arg7[%c0_15, %c0_16] : memref<1x10xf32, #tpu.memory_space<vmem>>, vector<1x10xf32>
    %21 = vector.broadcast %20 : vector<1x10xf32> to vector<2x10xf32>
    %22 = arith.addf %19, %21 : vector<2x10xf32>
    %c0_17 = arith.constant 0 : index
    %c0_18 = arith.constant 0 : index
    %23 = vector.load %arg8[%c0_17, %c0_18] : memref<2x10xf32, #tpu.memory_space<vmem>>, vector<2x10xf32>
    tpu.vector_store %arg8[%c0_17, %c0_18], %22 {strides = array<i32>} : memref<2x10xf32, #tpu.memory_space<vmem>>, vector<2x10xf32>,
    return
  }
  func.func @transform_0(%arg0: i32) -> (i32, i32) {
    %c0_i32 = arith.constant 0 : i32
    %c0_i32_0 = arith.constant 0 : i32
    return %arg0, %c0_i32 : i32, i32
  }
  func.func @transform_1(%arg0: i32) -> (i32, i32) {
    %c0_i32 = arith.constant 0 : i32
    %c0_i32_0 = arith.constant 0 : i32
    %c0_i32_1 = arith.constant 0 : i32
    return %c0_i32, %c0_i32_0 : i32, i32
  }
  func.func @transform_2(%arg0: i32) -> (i32, i32) {
    %c0_i32 = arith.constant 0 : i32
    %c0_i32_0 = arith.constant 0 : i32
    %c0_i32_1 = arith.constant 0 : i32
    return %c0_i32, %c0_i32_0 : i32, i32
  }
  func.func @transform_3(%arg0: i32) -> (i32, i32) {
    %c0_i32 = arith.constant 0 : i32
    %c0_i32_0 = arith.constant 0 : i32
    %c0_i32_1 = arith.constant 0 : i32
    return %c0_i32, %c0_i32_0 : i32, i32
  }
  func.func @transform_4(%arg0: i32) -> (i32, i32) {
    %c0_i32 = arith.constant 0 : i32
    %c0_i32_0 = arith.constant 0 : i32
    %c0_i32_1 = arith.constant 0 : i32
    return %c0_i32, %c0_i32_0 : i32, i32
  }
  func.func @transform_5(%arg0: i32) -> (i32, i32) {
    %c0_i32 = arith.constant 0 : i32
    %c0_i32_0 = arith.constant 0 : i32
    %c0_i32_1 = arith.constant 0 : i32
    return %c0_i32, %c0_i32_0 : i32, i32
  }
  func.func @transform_6(%arg0: i32) -> (i32, i32) {
    %c0_i32 = arith.constant 0 : i32
    %c0_i32_0 = arith.constant 0 : i32
    %c0_i32_1 = arith.constant 0 : i32
    return %c0_i32, %c0_i32_0 : i32, i32
  }
  func.func @transform_7(%arg0: i32) -> (i32, i32) {
    %c0_i32 = arith.constant 0 : i32
    %c0_i32_0 = arith.constant 0 : i32
    return %arg0, %c0_i32 : i32, i32
  }
}

</mosaic_0001>

<llo_original>
// kernel: lenet_forward.3
$region0: #{lenet_forward.3}
  #allocation0 [shape = 'u32[]', space=smem, size = 0x4, offset = 0x4, fixed_abs, tag = 'smem constant byte address 0x4 - core index']
  #allocation1 [shape = 'u32[144,128]{1,0:T(1,128)}', space=vmem, size = 0x12000, scoped, tag = 'internal scratch']
  %s0 = inlined_call_operand.vmem [shape: f32[2,576,32], index: 0, kind: input, shape index: {}]
  %s1 = inlined_call_operand.vmem [shape: f32[32,128], index: 1, kind: input, shape index: {}]
  %s2 = inlined_call_operand.vmem [shape: f32[1,128], index: 2, kind: input, shape index: {}]
  %s3 = inlined_call_operand.vmem [shape: f32[2,144,128], index: 3, kind: output, shape index: {}]
  %s4 = sld [smem:[#allocation0]]
  $region45: #{lenet_forward.3} parent=0
    _
  %s6 = ssub.s32 1, %s4
  %s7 = scalar_select 0, %s6, %s4
  loop: start=0, step=1, limit=4
  $region2: #{lenet_forward.3} parent=0 // loop_pre_header
    _
  $region3: #{lenet_forward.3} parent=0 // loop_header
    %s9 = sphi 0, %s13
    %p10 = scmp.ge.s32.totalorder %s9, 4
    %s19 = sphi 0, %s21
    %s22 = sphi 0, %s19
    %s23 = sphi 0, %s22
    %s39 = sphi 0, %s23
    %s43 = sphi 0, %s43
    %s45 = sphi 0, %s43
    %s46 = sphi 0, %s45
    %s60 = sphi 0, %s46
    %s64 = sphi 0, %s64
    %s66 = sphi 0, %s64
    %s67 = sphi 0, %s66
    %s81 = sphi 0, %s67
    %s87 = sphi 0, %s89
    %s90 = sphi 0, %s87
    %s91 = sphi 0, %s90
    %s107 = sphi 0, %s91
  $region4: #{lenet_forward.3} parent=0 // loop_header_branch
    %12 = sbr.rel (%p10) target = $region8
  $region5: #{lenet_forward.3} parent=0 // loop_body
    %s14 = ssub.s32 %s9, 1
    %s15 = ssub.s32 %s9, 2
    %s16 = sadd.s32 %s9, 1
    %s17 = ssub.s32 %s9, %s16
    %p18 = scmp.eq.s32.totalorder %s17, 0
    %s20 = sadd.s32 %s19, 1
    %s21 = scalar_select %p18, %s19, %s20
    %p24 = pneg %p18
    %p25 = scmp.eq.s32.totalorder %s9, 1
    %p26 = por %p24, %p25
    %p27 = scmp.ne.s32.totalorder %s19, %s22
    %p28 = scmp.eq.s32.totalorder %s9, 0
    %p29 = por %p27, %p28
    %p30 = scmp.ne.s32.totalorder %s19, %s22
    %p31 = scmp.eq.s32.totalorder %s14, 1
    %p32 = por %p30, %p31
    %p33 = scmp.ne.s32.totalorder %s22, %s23
    %p34 = scmp.eq.s32.totalorder %s14, 0
    %p35 = por %p33, %p34
    %p36 = scmp.ne.s32.totalorder %s22, %s23
    %p37 = scmp.eq.s32.totalorder %s15, 1
    %p38 = por %p36, %p37
    %p40 = scmp.ne.s32.totalorder %s23, %s39
    %p41 = scmp.eq.s32.totalorder %s15, 0
    %p42 = por %p40, %p41
    %s44 = sadd.s32 %s43, 1
    %p47 = scmp.eq.s32.totalorder %s9, 1
    %p48 = scmp.ne.s32.totalorder %s43, %s45
    %p49 = scmp.eq.s32.totalorder %s9, 0
    %p50 = por %p48, %p49
    %p51 = scmp.ne.s32.totalorder %s43, %s45
    %p52 = scmp.eq.s32.totalorder %s14, 1
    %p53 = por %p51, %p52
    %p54 = scmp.ne.s32.totalorder %s45, %s46
    %p55 = scmp.eq.s32.totalorder %s14, 0
    %p56 = por %p54, %p55
    %p57 = scmp.ne.s32.totalorder %s45, %s46
    %p58 = scmp.eq.s32.totalorder %s15, 1
    %p59 = por %p57, %p58
    %p61 = scmp.ne.s32.totalorder %s46, %s60
    %p62 = scmp.eq.s32.totalorder %s15, 0
    %p63 = por %p61, %p62
    %s65 = sadd.s32 %s64, 1
    %p68 = scmp.eq.s32.totalorder %s9, 1
    %p69 = scmp.ne.s32.totalorder %s64, %s66
    %p70 = scmp.eq.s32.totalorder %s9, 0
    %p71 = por %p69, %p70
    %p72 = scmp.ne.s32.totalorder %s64, %s66
    %p73 = scmp.eq.s32.totalorder %s14, 1
    %p74 = por %p72, %p73
    %p75 = scmp.ne.s32.totalorder %s66, %s67
    %p76 = scmp.eq.s32.totalorder %s14, 0
    %p77 = por %p75, %p76
    %p78 = scmp.ne.s32.totalorder %s66, %s67
    %p79 = scmp.eq.s32.totalorder %s15, 1
    %p80 = por %p78, %p79
    %p82 = scmp.ne.s32.totalorder %s67, %s81
    %p83 = scmp.eq.s32.totalorder %s15, 0
    %p84 = por %p82, %p83
    %s85 = ssub.s32 %s9, %s16
    %p86 = scmp.eq.s32.totalorder %s85, 0
    %s88 = sadd.s32 %s87, 1
    %s89 = scalar_select %p86, %s87, %s88
    %p92 = pneg %p86
    %p93 = scmp.eq.s32.totalorder %s9, 1
    %p94 = por %p92, %p93
    %p95 = scmp.ne.s32.totalorder %s87, %s90
    %p96 = scmp.eq.s32.totalorder %s9, 0
    %p97 = por %p95, %p96
    %p98 = scmp.ne.s32.totalorder %s87, %s90
    %p99 = scmp.eq.s32.totalorder %s14, 1
    %p100 = por %p98, %p99
    %p101 = scmp.ne.s32.totalorder %s90, %s91
    %p102 = scmp.eq.s32.totalorder %s14, 0
    %p103 = por %p101, %p102
    %p104 = scmp.ne.s32.totalorder %s90, %s91
    %p105 = scmp.eq.s32.totalorder %s15, 1
    %p106 = por %p104, %p105
    %p108 = scmp.ne.s32.totalorder %s91, %s107
    %p109 = scmp.eq.s32.totalorder %s15, 0
    %p110 = por %p108, %p109
    %p111 = scmp.le.s32.totalorder 1, %s9
    %p112 = scmp.lt.s32.totalorder %s9, 3
    %p113 = pnand %p111, %p112
    %p114 = pneg %p113
    // Predicated region
    $region9: #{lenet_forward.3} parent=5 // pred_check
      _
    $region10: #{lenet_forward.3} parent=5 // pred_check_branch
      %116 = sbr.rel (%p113) target = $region12
    $region11: #{lenet_forward.3} parent=5 // pred_region
      %s117 = ssub.s32 %s9, 1
      // Predicated region
      $region13: #{lenet_forward.3} parent=11 // pred_check
        %p118 = pneg %p56
      $region14: #{lenet_forward.3} parent=11 // pred_check_branch
        %120 = sbr.rel (%p118) target = $region16
      $region15: #{lenet_forward.3} parent=11 // pred_region
        _
      $region16: #{lenet_forward.3} parent=11 // pred_fallthru
        _
      // Predicated region
      $region17: #{lenet_forward.3} parent=11 // pred_check
        %p121 = pneg %p77
      $region18: #{lenet_forward.3} parent=11 // pred_check_branch
        %123 = sbr.rel (%p121) target = $region20
      $region19: #{lenet_forward.3} parent=11 // pred_region
        _
      $region20: #{lenet_forward.3} parent=11 // pred_fallthru
        _
    $region12: #{lenet_forward.3} parent=5 // pred_fallthru
      _
    %p124 = scmp.lt.s32.totalorder %s9, 2
    // Predicated region
    $region21: #{lenet_forward.3} parent=5 // pred_check
      %p125 = pneg %p124
    $region22: #{lenet_forward.3} parent=5 // pred_check_branch
      %127 = sbr.rel (%p125) target = $region24
    $region23: #{lenet_forward.3} parent=5 // pred_region
      // Predicated region
      $region25: #{lenet_forward.3} parent=23 // pred_check
        %p128 = pneg %p29
      $region26: #{lenet_forward.3} parent=23 // pred_check_branch
        %130 = sbr.rel (%p128) target = $region28
      $region27: #{lenet_forward.3} parent=23 // pred_region
        %p131 = scmp.lt.s32.totalorder %s9, 1
        %s132 = scalar_select %p131, %s9, 1
        %s133 = smul.addr %s132, 72
        %s134 = smul.addr %s133, 8
        %s135 = scalar_lea.vmem %s0, %s134
      $region28: #{lenet_forward.3} parent=23 // pred_fallthru
        _
    $region24: #{lenet_forward.3} parent=5 // pred_fallthru
      _
    %p136 = scmp.le.s32.totalorder 1, %s9
    %p137 = scmp.lt.s32.totalorder %s9, 3
    %p138 = pnand %p136, %p137
    %p139 = pneg %p138
    // Predicated region
    $region29: #{lenet_forward.3} parent=5 // pred_check
      _
    $region30: #{lenet_forward.3} parent=5 // pred_check_branch
      %141 = sbr.rel (%p138) target = $region32
    $region31: #{lenet_forward.3} parent=5 // pred_region
      %s142 = ssub.s32 %s9, 1
      %p143 = scmp.lt.s32.totalorder %s14, 1
      %s144 = scalar_select %p143, %s14, 1
      %s145 = smul.addr %s144, 72
      %s146 = smul.addr %s145, 8
      %s147 = scalar_lea.vmem %s0, %s146
      %p148 = pneg %p35
      %p149 = pneg %p32
      %p150 = pneg %p56
      %p151 = pneg %p53
      %p152 = pneg %p77
      %p153 = pneg %p74
      %p154 = pneg %p103
      %p155 = pneg %p100
      %p156 = scmp.lt.s32.totalorder %s14, 1
      %s157 = scalar_select %p156, %s14, 1
      %s158 = smul.addr %s157, 18
      %s159 = smul.addr %s158, 8
      %s160 = scalar_lea.vmem %s3, %s159
      %p161 = scmp.lt.s32.totalorder %s14, 1
      %s162 = scalar_select %p161, %s14, 1
      %s163 = smul.addr %s162, 72
      %s164 = smul.addr %s163, 8
      %s165 = scalar_lea.vmem %s0, %s164
      %p166 = scmp.lt.s32.totalorder %s14, 1
      %s167 = scalar_select %p166, %s14, 1
      %s168 = smul.addr %s167, 18
      %s169 = smul.addr %s168, 8
      %s170 = scalar_lea.vmem %s3, %s169
      %v171 = vld [vmem:[%s165] sm:$0xff]
      %v172 = vld [vmem:[%s165 + $0x8] sm:$0xff]
      %v173 = vld [vmem:[%s165 + $0x10] sm:$0xff]
      %v174 = vld [vmem:[%s165 + $0x18] sm:$0xff]
      %v175 = vld [vmem:[%s165 + $0x20] sm:$0xff]
      %v176 = vld [vmem:[%s165 + $0x28] sm:$0xff]
      %v177 = vld [vmem:[%s165 + $0x30] sm:$0xff]
      %v178 = vld [vmem:[%s165 + $0x38] sm:$0xff]
      %v179 = vld [vmem:[%s165 + $0x40] sm:$0xff]
      %v180 = vld [vmem:[%s165 + $0x48] sm:$0xff]
      %v181 = vld [vmem:[%s165 + $0x50] sm:$0xff]
      %v182 = vld [vmem:[%s165 + $0x58] sm:$0xff]
      %v183 = vld [vmem:[%s165 + $0x60] sm:$0xff]
      %v184 = vld [vmem:[%s165 + $0x68] sm:$0xff]
      %v185 = vld [vmem:[%s165 + $0x70] sm:$0xff]
      %v186 = vld [vmem:[%s165 + $0x78] sm:$0xff]
      %v187 = vld [vmem:[%s165 + $0x80] sm:$0xff]
      %v188 = vld [vmem:[%s165 + $0x88] sm:$0xff]
      %v189 = vld [vmem:[%s165 + $0x90] sm:$0xff]
      %v190 = vld [vmem:[%s165 + $0x98] sm:$0xff]
      %v191 = vld [vmem:[%s165 + $0xa0] sm:$0xff]
      %v192 = vld [vmem:[%s165 + $0xa8] sm:$0xff]
      %v193 = vld [vmem:[%s165 + $0xb0] sm:$0xff]
      %v194 = vld [vmem:[%s165 + $0xb8] sm:$0xff]
      %v195 = vld [vmem:[%s165 + $0xc0] sm:$0xff]
      %v196 = vld [vmem:[%s165 + $0xc8] sm:$0xff]
      %v197 = vld [vmem:[%s165 + $0xd0] sm:$0xff]
      %v198 = vld [vmem:[%s165 + $0xd8] sm:$0xff]
      %v199 = vld [vmem:[%s165 + $0xe0] sm:$0xff]
      %v200 = vld [vmem:[%s165 + $0xe8] sm:$0xff]
      %v201 = vld [vmem:[%s165 + $0xf0] sm:$0xff]
      %v202 = vld [vmem:[%s165 + $0xf8] sm:$0xff]
      %v203 = vld [vmem:[%s165 + $0x100] sm:$0xff]
      %v204 = vld [vmem:[%s165 + $0x108] sm:$0xff]
      %v205 = vld [vmem:[%s165 + $0x110] sm:$0xff]
      %v206 = vld [vmem:[%s165 + $0x118] sm:$0xff]
      %v207 = vld [vmem:[%s165 + $0x120] sm:$0xff]
      %v208 = vld [vmem:[%s165 + $0x128] sm:$0xff]
      %v209 = vld [vmem:[%s165 + $0x130] sm:$0xff]
      %v210 = vld [vmem:[%s165 + $0x138] sm:$0xff]
      %v211 = vld [vmem:[%s165 + $0x140] sm:$0xff]
      %v212 = vld [vmem:[%s165 + $0x148] sm:$0xff]
      %v213 = vld [vmem:[%s165 + $0x150] sm:$0xff]
      %v214 = vld [vmem:[%s165 + $0x158] sm:$0xff]
      %v215 = vld [vmem:[%s165 + $0x160] sm:$0xff]
      %v216 = vld [vmem:[%s165 + $0x168] sm:$0xff]
      %v217 = vld [vmem:[%s165 + $0x170] sm:$0xff]
      %v218 = vld [vmem:[%s165 + $0x178] sm:$0xff]
      %v219 = vld [vmem:[%s165 + $0x180] sm:$0xff]
      %v220 = vld [vmem:[%s165 + $0x188] sm:$0xff]
      %v221 = vld [vmem:[%s165 + $0x190] sm:$0xff]
      %v222 = vld [vmem:[%s165 + $0x198] sm:$0xff]
      %v223 = vld [vmem:[%s165 + $0x1a0] sm:$0xff]
      %v224 = vld [vmem:[%s165 + $0x1a8] sm:$0xff]
      %v225 = vld [vmem:[%s165 + $0x1b0] sm:$0xff]
      %v226 = vld [vmem:[%s165 + $0x1b8] sm:$0xff]
      %v227 = vld [vmem:[%s165 + $0x1c0] sm:$0xff]
      %v228 = vld [vmem:[%s165 + $0x1c8] sm:$0xff]
      %v229 = vld [vmem:[%s165 + $0x1d0] sm:$0xff]
      %v230 = vld [vmem:[%s165 + $0x1d8] sm:$0xff]
      %v231 = vld [vmem:[%s165 + $0x1e0] sm:$0xff]
      %v232 = vld [vmem:[%s165 + $0x1e8] sm:$0xff]
      %v233 = vld [vmem:[%s165 + $0x1f0] sm:$0xff]
      %v234 = vld [vmem:[%s165 + $0x1f8] sm:$0xff]
      %v235 = vld [vmem:[%s165 + $0x200] sm:$0xff]
      %v236 = vld [vmem:[%s165 + $0x208] sm:$0xff]
      %v237 = vld [vmem:[%s165 + $0x210] sm:$0xff]
      %v238 = vld [vmem:[%s165 + $0x218] sm:$0xff]
      %v239 = vld [vmem:[%s165 + $0x220] sm:$0xff]
      %v240 = vld [vmem:[%s165 + $0x228] sm:$0xff]
      %v241 = vld [vmem:[%s165 + $0x230] sm:$0xff]
      %v242 = vld [vmem:[%s165 + $0x238] sm:$0xff]
      %v243 = vld [vmem:[%s1] sm:$0xff]
      %v244 = vld [vmem:[%s1 + $0x8] sm:$0xff]
      %v245 = vld [vmem:[%s1 + $0x10] sm:$0xff]
      %v246 = vld [vmem:[%s1 + $0x18] sm:$0xff]
      %v247 = vld [vmem:[%s2] sm:$0x1]
      %v249 = vlaneseq
      %v250 = vshrl.u32 %v249, 7
      %v251 = vsub.s32 0, %v250
      %v252 = vrot.slane %v247, %v251
      %vm254 = vcmask 261120
      %v256 = vsel %vm254, %v171, 0
      %v259 = vsel %vm254, %v172, 0
      %v262 = vsel %vm254, %v173, 0
      %v265 = vsel %vm254, %v174, 0
      %v268 = vsel %vm254, %v175, 0
      %v271 = vsel %vm254, %v176, 0
      %v274 = vsel %vm254, %v177, 0
      %v277 = vsel %vm254, %v178, 0
      %v280 = vsel %vm254, %v179, 0
      %v283 = vsel %vm254, %v180, 0
      %v286 = vsel %vm254, %v181, 0
      %v289 = vsel %vm254, %v182, 0
      %v292 = vsel %vm254, %v183, 0
      %v295 = vsel %vm254, %v184, 0
      %v298 = vsel %vm254, %v185, 0
      %v301 = vsel %vm254, %v186, 0
      %v304 = vsel %vm254, %v187, 0
      %v307 = vsel %vm254, %v188, 0
      %v310 = vsel %vm254, %v189, 0
      %v313 = vsel %vm254, %v190, 0
      %v316 = vsel %vm254, %v191, 0
      %v319 = vsel %vm254, %v192, 0
      %v322 = vsel %vm254, %v193, 0
      %v325 = vsel %vm254, %v194, 0
      %v328 = vsel %vm254, %v195, 0
      %v331 = vsel %vm254, %v196, 0
      %v334 = vsel %vm254, %v197, 0
      %v337 = vsel %vm254, %v198, 0
      %v340 = vsel %vm254, %v199, 0
      %v343 = vsel %vm254, %v200, 0
      %v346 = vsel %vm254, %v201, 0
      %v349 = vsel %vm254, %v202, 0
      %v352 = vsel %vm254, %v203, 0
      %v355 = vsel %vm254, %v204, 0
      %v358 = vsel %vm254, %v205, 0
      %v361 = vsel %vm254, %v206, 0
      %v364 = vsel %vm254, %v207, 0
      %v367 = vsel %vm254, %v208, 0
      %v370 = vsel %vm254, %v209, 0
      %v373 = vsel %vm254, %v210, 0
      %v376 = vsel %vm254, %v211, 0
      %v379 = vsel %vm254, %v212, 0
      %v382 = vsel %vm254, %v213, 0
      %v385 = vsel %vm254, %v214, 0
      %v388 = vsel %vm254, %v215, 0
      %v391 = vsel %vm254, %v216, 0
      %v394 = vsel %vm254, %v217, 0
      %v397 = vsel %vm254, %v218, 0
      %v400 = vsel %vm254, %v219, 0
      %v403 = vsel %vm254, %v220, 0
      %v406 = vsel %vm254, %v221, 0
      %v409 = vsel %vm254, %v222, 0
      %v412 = vsel %vm254, %v223, 0
      %v415 = vsel %vm254, %v224, 0
      %v418 = vsel %vm254, %v225, 0
      %v421 = vsel %vm254, %v226, 0
      %v424 = vsel %vm254, %v227, 0
      %v427 = vsel %vm254, %v228, 0
      %v430 = vsel %vm254, %v229, 0
      %v433 = vsel %vm254, %v230, 0
      %v436 = vsel %vm254, %v231, 0
      %v439 = vsel %vm254, %v232, 0
      %v442 = vsel %vm254, %v233, 0
      %v445 = vsel %vm254, %v234, 0
      %v448 = vsel %vm254, %v235, 0
      %v451 = vsel %vm254, %v236, 0
      %v454 = vsel %vm254, %v237, 0
      %v457 = vsel %vm254, %v238, 0
      %v460 = vsel %vm254, %v239, 0
      %v463 = vsel %vm254, %v240, 0
      %v466 = vsel %vm254, %v241, 0
      %v469 = vsel %vm254, %v242, 0
      %471 = vmatprep.subr.mxu0 0.0
      %472 = vmatpush1.msra.mxu0 %v243
      %473 = vmatprep.subr.mxu0 0.0
      %474 = vmatpush1.msra.mxu0 %v244
      %475 = vmatprep.subr.mxu0 0.0
      %476 = vmatpush1.msra.mxu0 %v245
      %477 = vmatprep.subr.mxu0 0.0
      %478 = vmatpush1.msra.mxu0 %v246
      %479 = vmatprep.subr.mxu0 0.0
      %480 = vmatpush1.msra.mxu0 0.0
      %481 = vmatprep.subr.mxu0 0.0
      %482 = vmatpush1.msra.mxu0 0.0
      %483 = vmatprep.subr.mxu0 0.0
      %484 = vmatpush1.msra.mxu0 0.0
      %485 = vmatprep.subr.mxu0 0.0
      %486 = vmatpush1.msra.mxu0 0.0
      %487 = vmatprep.subr.mxu0 0.0
      %488 = vmatpush1.msra.mxu0 0.0
      %489 = vmatprep.subr.mxu0 0.0
      %490 = vmatpush1.msra.mxu0 0.0
      %491 = vmatprep.subr.mxu0 0.0
      %492 = vmatpush1.msra.mxu0 0.0
      %493 = vmatprep.subr.mxu0 0.0
      %494 = vmatpush1.msra.mxu0 0.0
      %495 = vmatprep.subr.mxu0 0.0
      %496 = vmatpush1.msra.mxu0 0.0
      %497 = vmatprep.subr.mxu0 0.0
      %498 = vmatpush1.msra.mxu0 0.0
      %499 = vmatprep.subr.mxu0 0.0
      %500 = vmatpush1.msra.mxu0 0.0
      %501 = vmatprep.subr.mxu0 0.0
      %502 = vmatpush1.msra.mxu0 0.0
      %503 = vmatprep.subr.mxu0 0.0
      %504 = vmatpush1.msra.mxu0 0.0
      %505 = vmatprep.subr.mxu0 0.0
      %506 = vmatpush1.msra.mxu0 0.0
      %507 = vmatprep.subr.mxu0 0.0
      %508 = vmatpush1.msra.mxu0 0.0
      %509 = vmatprep.subr.mxu0 0.0
      %510 = vmatpush1.msra.mxu0 0.0
      %511 = vmatprep.subr.mxu0 0.0
      %512 = vmatpush1.msra.mxu0 0.0
      %513 = vmatprep.subr.mxu0 0.0
      %514 = vmatpush1.msra.mxu0 0.0
      %515 = vmatprep.subr.mxu0 0.0
      %516 = vmatpush1.msra.mxu0 0.0
      %517 = vmatprep.subr.mxu0 0.0
      %518 = vmatpush1.msra.mxu0 0.0
      %519 = vmatprep.subr.mxu0 0.0
      %520 = vmatpush1.msra.mxu0 0.0
      %521 = vmatprep.subr.mxu0 0.0
      %522 = vmatpush1.msra.mxu0 0.0
      %523 = vmatprep.subr.mxu0 0.0
      %524 = vmatpush1.msra.mxu0 0.0
      %525 = vmatprep.subr.mxu0 0.0
      %526 = vmatpush1.msra.mxu0 0.0
      %527 = vmatprep.subr.mxu0 0.0
      %528 = vmatpush1.msra.mxu0 0.0
      %529 = vmatprep.subr.mxu0 0.0
      %530 = vmatpush1.msra.mxu0 0.0
      %531 = vmatprep.subr.mxu0 0.0
      %532 = vmatpush1.msra.mxu0 0.0
      %533 = vmatprep.subr.mxu0 0.0
      %534 = vmatpush1.msra.mxu0 0.0
      %535 = vmatprep.mubr.f32.mxu0 0.0
      %536 = vmatmul.mubr.f32.gmra.mrb[0].mxu0 %v256
      %v537 = vpop.f32.mrb[0].mxu0
      %v538 = vadd.f32 %v252, %v537
      %v539 = vpop.f32.mrb[0].mxu0
      %540 = vmatprep.mubr.f32.mxu0 0.0
      %541 = vmatmul.mubr.f32.gmra.mrb[0].mxu0 %v259
      %v542 = vpop.f32.mrb[0].mxu0
      %v543 = vadd.f32 %v252, %v542
      %v544 = vpop.f32.mrb[0].mxu0
      %545 = vmatprep.mubr.f32.mxu0 0.0
      %546 = vmatmul.mubr.f32.gmra.mrb[0].mxu0 %v262
      %v547 = vpop.f32.mrb[0].mxu0
      %v548 = vadd.f32 %v252, %v547
      %v549 = vpop.f32.mrb[0].mxu0
      %550 = vmatprep.mubr.f32.mxu0 0.0
      %551 = vmatmul.mubr.f32.gmra.mrb[0].mxu0 %v265
      %v552 = vpop.f32.mrb[0].mxu0
      %v553 = vadd.f32 %v252, %v552
      %v554 = vpop.f32.mrb[0].mxu0
      %555 = vmatprep.mubr.f32.mxu0 0.0
      %556 = vmatmul.mubr.f32.gmra.mrb[0].mxu0 %v268
      %v557 = vpop.f32.mrb[0].mxu0
      %v558 = vadd.f32 %v252, %v557
      %v559 = vpop.f32.mrb[0].mxu0
      %560 = vmatprep.mubr.f32.mxu0 0.0
      %561 = vmatmul.mubr.f32.gmra.mrb[0].mxu0 %v271
      %v562 = vpop.f32.mrb[0].mxu0
      %v563 = vadd.f32 %v252, %v562
      %v564 = vpop.f32.mrb[0].mxu0
      %565 = vmatprep.mubr.f32.mxu0 0.0
      %566 = vmatmul.mubr.f32.gmra.mrb[0].mxu0 %v274
      %v567 = vpop.f32.mrb[0].mxu0
      %v568 = vadd.f32 %v252, %v567
      %v569 = vpop.f32.mrb[0].mxu0
      %570 = vmatprep.mubr.f32.mxu0 0.0
      %571 = vmatmul.mubr.f32.gmra.mrb[0].mxu0 %v277
      %v572 = vpop.f32.mrb[0].mxu0
      %v573 = vadd.f32 %v252, %v572
      %v574 = vpop.f32.mrb[0].mxu0
      %575 = vmatprep.mubr.f32.mxu0 0.0
      %576 = vmatmul.mubr.f32.gmra.mrb[0].mxu0 %v280
      %v577 = vpop.f32.mrb[0].mxu0
      %v578 = vadd.f32 %v252, %v577
      %v579 = vpop.f32.mrb[0].mxu0
      %580 = vmatprep.mubr.f32.mxu0 0.0
      %581 = vmatmul.mubr.f32.gmra.mrb[0].mxu0 %v283
      %v582 = vpop.f32.mrb[0].mxu0
      %v583 = vadd.f32 %v252, %v582
      %v584 = vpop.f32.mrb[0].mxu0
      %585 = vmatprep.mubr.f32.mxu0 0.0
      %586 = vmatmul.mubr.f32.gmra.mrb[0].mxu0 %v286
      %v587 = vpop.f32.mrb[0].mxu0
      %v588 = vadd.f32 %v252, %v587
      %v589 = vpop.f32.mrb[0].mxu0
      %590 = vmatprep.mubr.f32.mxu0 0.0
      %591 = vmatmul.mubr.f32.gmra.mrb[0].mxu0 %v289
      %v592 = vpop.f32.mrb[0].mxu0
      %v593 = vadd.f32 %v252, %v592
      %v594 = vpop.f32.mrb[0].mxu0
      %595 = vmatprep.mubr.f32.mxu0 0.0
      %596 = vmatmul.mubr.f32.gmra.mrb[0].mxu0 %v292
      %v597 = vpop.f32.mrb[0].mxu0
      %v598 = vadd.f32 %v252, %v597
      %v599 = vpop.f32.mrb[0].mxu0
      %600 = vmatprep.mubr.f32.mxu0 0.0
      %601 = vmatmul.mubr.f32.gmra.mrb[0].mxu0 %v295
      %v602 = vpop.f32.mrb[0].mxu0
      %v603 = vadd.f32 %v252, %v602
      %v604 = vpop.f32.mrb[0].mxu0
      %605 = vmatprep.mubr.f32.mxu0 0.0
      %606 = vmatmul.mubr.f32.gmra.mrb[0].mxu0 %v298
      %v607 = vpop.f32.mrb[0].mxu0
      %v608 = vadd.f32 %v252, %v607
      %v609 = vpop.f32.mrb[0].mxu0
      %610 = vmatprep.mubr.f32.mxu0 0.0
      %611 = vmatmul.mubr.f32.gmra.mrb[0].mxu0 %v301
      %v612 = vpop.f32.mrb[0].mxu0
      %v613 = vadd.f32 %v252, %v612
      %v614 = vpop.f32.mrb[0].mxu0
      %615 = vmatprep.mubr.f32.mxu0 0.0
      %616 = vmatmul.mubr.f32.gmra.mrb[0].mxu0 %v304
      %v617 = vpop.f32.mrb[0].mxu0
      %v618 = vadd.f32 %v252, %v617
      %v619 = vpop.f32.mrb[0].mxu0
      %620 = vmatprep.mubr.f32.mxu0 0.0
      %621 = vmatmul.mubr.f32.gmra.mrb[0].mxu0 %v307
      %v622 = vpop.f32.mrb[0].mxu0
      %v623 = vadd.f32 %v252, %v622
      %v624 = vpop.f32.mrb[0].mxu0
      %625 = vmatprep.mubr.f32.mxu0 0.0
      %626 = vmatmul.mubr.f32.gmra.mrb[0].mxu0 %v310
      %v627 = vpop.f32.mrb[0].mxu0
      %v628 = vadd.f32 %v252, %v627
      %v629 = vpop.f32.mrb[0].mxu0
      %630 = vmatprep.mubr.f32.mxu0 0.0
      %631 = vmatmul.mubr.f32.gmra.mrb[0].mxu0 %v313
      %v632 = vpop.f32.mrb[0].mxu0
      %v633 = vadd.f32 %v252, %v632
      %v634 = vpop.f32.mrb[0].mxu0
      %635 = vmatprep.mubr.f32.mxu0 0.0
      %636 = vmatmul.mubr.f32.gmra.mrb[0].mxu0 %v316
      %v637 = vpop.f32.mrb[0].mxu0
      %v638 = vadd.f32 %v252, %v637
      %v639 = vpop.f32.mrb[0].mxu0
      %640 = vmatprep.mubr.f32.mxu0 0.0
      %641 = vmatmul.mubr.f32.gmra.mrb[0].mxu0 %v319
      %v642 = vpop.f32.mrb[0].mxu0
      %v643 = vadd.f32 %v252, %v642
      %v644 = vpop.f32.mrb[0].mxu0
      %645 = vmatprep.mubr.f32.mxu0 0.0
      %646 = vmatmul.mubr.f32.gmra.mrb[0].mxu0 %v322
      %v647 = vpop.f32.mrb[0].mxu0
      %v648 = vadd.f32 %v252, %v647
      %v649 = vpop.f32.mrb[0].mxu0
      %650 = vmatprep.mubr.f32.mxu0 0.0
      %651 = vmatmul.mubr.f32.gmra.mrb[0].mxu0 %v325
      %v652 = vpop.f32.mrb[0].mxu0
      %v653 = vadd.f32 %v252, %v652
      %v654 = vpop.f32.mrb[0].mxu0
      %655 = vmatprep.mubr.f32.mxu0 0.0
      %656 = vmatmul.mubr.f32.gmra.mrb[0].mxu0 %v328
      %v657 = vpop.f32.mrb[0].mxu0
      %v658 = vadd.f32 %v252, %v657
      %v659 = vpop.f32.mrb[0].mxu0
      %660 = vmatprep.mubr.f32.mxu0 0.0
      %661 = vmatmul.mubr.f32.gmra.mrb[0].mxu0 %v331
      %v662 = vpop.f32.mrb[0].mxu0
      %v663 = vadd.f32 %v252, %v662
      %v664 = vpop.f32.mrb[0].mxu0
      %665 = vmatprep.mubr.f32.mxu0 0.0
      %666 = vmatmul.mubr.f32.gmra.mrb[0].mxu0 %v334
      %v667 = vpop.f32.mrb[0].mxu0
      %v668 = vadd.f32 %v252, %v667
      %v669 = vpop.f32.mrb[0].mxu0
      %670 = vmatprep.mubr.f32.mxu0 0.0
      %671 = vmatmul.mubr.f32.gmra.mrb[0].mxu0 %v337
      %v672 = vpop.f32.mrb[0].mxu0
      %v673 = vadd.f32 %v252, %v672
      %v674 = vpop.f32.mrb[0].mxu0
      %675 = vmatprep.mubr.f32.mxu0 0.0
      %676 = vmatmul.mubr.f32.gmra.mrb[0].mxu0 %v340
      %v677 = vpop.f32.mrb[0].mxu0
      %v678 = vadd.f32 %v252, %v677
      %v679 = vpop.f32.mrb[0].mxu0
      %680 = vmatprep.mubr.f32.mxu0 0.0
      %681 = vmatmul.mubr.f32.gmra.mrb[0].mxu0 %v343
      %v682 = vpop.f32.mrb[0].mxu0
      %v683 = vadd.f32 %v252, %v682
      %v684 = vpop.f32.mrb[0].mxu0
      %685 = vmatprep.mubr.f32.mxu0 0.0
      %686 = vmatmul.mubr.f32.gmra.mrb[0].mxu0 %v346
      %v687 = vpop.f32.mrb[0].mxu0
      %v688 = vadd.f32 %v252, %v687
      %v689 = vpop.f32.mrb[0].mxu0
      %690 = vmatprep.mubr.f32.mxu0 0.0
      %691 = vmatmul.mubr.f32.gmra.mrb[0].mxu0 %v349
      %v692 = vpop.f32.mrb[0].mxu0
      %v693 = vadd.f32 %v252, %v692
      %v694 = vpop.f32.mrb[0].mxu0
      %695 = vmatprep.mubr.f32.mxu0 0.0
      %696 = vmatmul.mubr.f32.gmra.mrb[0].mxu0 %v352
      %v697 = vpop.f32.mrb[0].mxu0
      %v698 = vadd.f32 %v252, %v697
      %v699 = vpop.f32.mrb[0].mxu0
      %700 = vmatprep.mubr.f32.mxu0 0.0
      %701 = vmatmul.mubr.f32.gmra.mrb[0].mxu0 %v355
      %v702 = vpop.f32.mrb[0].mxu0
      %v703 = vadd.f32 %v252, %v702
      %v704 = vpop.f32.mrb[0].mxu0
      %705 = vmatprep.mubr.f32.mxu0 0.0
      %706 = vmatmul.mubr.f32.gmra.mrb[0].mxu0 %v358
      %v707 = vpop.f32.mrb[0].mxu0
      %v708 = vadd.f32 %v252, %v707
      %v709 = vpop.f32.mrb[0].mxu0
      %710 = vmatprep.mubr.f32.mxu0 0.0
      %711 = vmatmul.mubr.f32.gmra.mrb[0].mxu0 %v361
      %v712 = vpop.f32.mrb[0].mxu0
      %v713 = vadd.f32 %v252, %v712
      %v714 = vpop.f32.mrb[0].mxu0
      %715 = vmatprep.mubr.f32.mxu0 0.0
      %716 = vmatmul.mubr.f32.gmra.mrb[0].mxu0 %v364
      %v717 = vpop.f32.mrb[0].mxu0
      %v718 = vadd.f32 %v252, %v717
      %v719 = vpop.f32.mrb[0].mxu0
      %720 = vmatprep.mubr.f32.mxu0 0.0
      %721 = vmatmul.mubr.f32.gmra.mrb[0].mxu0 %v367
      %v722 = vpop.f32.mrb[0].mxu0
      %v723 = vadd.f32 %v252, %v722
      %v724 = vpop.f32.mrb[0].mxu0
      %725 = vmatprep.mubr.f32.mxu0 0.0
      %726 = vmatmul.mubr.f32.gmra.mrb[0].mxu0 %v370
      %v727 = vpop.f32.mrb[0].mxu0
      %v728 = vadd.f32 %v252, %v727
      %v729 = vpop.f32.mrb[0].mxu0
      %730 = vmatprep.mubr.f32.mxu0 0.0
      %731 = vmatmul.mubr.f32.gmra.mrb[0].mxu0 %v373
      %v732 = vpop.f32.mrb[0].mxu0
      %v733 = vadd.f32 %v252, %v732
      %v734 = vpop.f32.mrb[0].mxu0
      %735 = vmatprep.mubr.f32.mxu0 0.0
      %736 = vmatmul.mubr.f32.gmra.mrb[0].mxu0 %v376
      %v737 = vpop.f32.mrb[0].mxu0
      %v738 = vadd.f32 %v252, %v737
      %v739 = vpop.f32.mrb[0].mxu0
      %740 = vmatprep.mubr.f32.mxu0 0.0
      %741 = vmatmul.mubr.f32.gmra.mrb[0].mxu0 %v379
      %v742 = vpop.f32.mrb[0].mxu0
      %v743 = vadd.f32 %v252, %v742
      %v744 = vpop.f32.mrb[0].mxu0
      %745 = vmatprep.mubr.f32.mxu0 0.0
      %746 = vmatmul.mubr.f32.gmra.mrb[0].mxu0 %v382
      %v747 = vpop.f32.mrb[0].mxu0
      %v748 = vadd.f32 %v252, %v747
      %v749 = vpop.f32.mrb[0].mxu0
      %750 = vmatprep.mubr.f32.mxu0 0.0
      %751 = vmatmul.mubr.f32.gmra.mrb[0].mxu0 %v385
      %v752 = vpop.f32.mrb[0].mxu0
      %v753 = vadd.f32 %v252, %v752
      %v754 = vpop.f32.mrb[0].mxu0
      %755 = vmatprep.mubr.f32.mxu0 0.0
      %756 = vmatmul.mubr.f32.gmra.mrb[0].mxu0 %v388
      %v757 = vpop.f32.mrb[0].mxu0
      %v758 = vadd.f32 %v252, %v757
      %v759 = vpop.f32.mrb[0].mxu0
      %760 = vmatprep.mubr.f32.mxu0 0.0
      %761 = vmatmul.mubr.f32.gmra.mrb[0].mxu0 %v391
      %v762 = vpop.f32.mrb[0].mxu0
      %v763 = vadd.f32 %v252, %v762
      %v764 = vpop.f32.mrb[0].mxu0
      %765 = vmatprep.mubr.f32.mxu0 0.0
      %766 = vmatmul.mubr.f32.gmra.mrb[0].mxu0 %v394
      %v767 = vpop.f32.mrb[0].mxu0
      %v768 = vadd.f32 %v252, %v767
      %v769 = vpop.f32.mrb[0].mxu0
      %770 = vmatprep.mubr.f32.mxu0 0.0
      %771 = vmatmul.mubr.f32.gmra.mrb[0].mxu0 %v397
      %v772 = vpop.f32.mrb[0].mxu0
      %v773 = vadd.f32 %v252, %v772
      %v774 = vpop.f32.mrb[0].mxu0
      %775 = vmatprep.mubr.f32.mxu0 0.0
      %776 = vmatmul.mubr.f32.gmra.mrb[0].mxu0 %v400
      %v777 = vpop.f32.mrb[0].mxu0
      %v778 = vadd.f32 %v252, %v777
      %v779 = vpop.f32.mrb[0].mxu0
      %780 = vmatprep.mubr.f32.mxu0 0.0
      %781 = vmatmul.mubr.f32.gmra.mrb[0].mxu0 %v403
      %v782 = vpop.f32.mrb[0].mxu0
      %v783 = vadd.f32 %v252, %v782
      %v784 = vpop.f32.mrb[0].mxu0
      %785 = vmatprep.mubr.f32.mxu0 0.0
      %786 = vmatmul.mubr.f32.gmra.mrb[0].mxu0 %v406
      %v787 = vpop.f32.mrb[0].mxu0
      %v788 = vadd.f32 %v252, %v787
      %v789 = vpop.f32.mrb[0].mxu0
      %790 = vmatprep.mubr.f32.mxu0 0.0
      %791 = vmatmul.mubr.f32.gmra.mrb[0].mxu0 %v409
      %v792 = vpop.f32.mrb[0].mxu0
      %v793 = vadd.f32 %v252, %v792
      %v794 = vpop.f32.mrb[0].mxu0
      %795 = vmatprep.mubr.f32.mxu0 0.0
      %796 = vmatmul.mubr.f32.gmra.mrb[0].mxu0 %v412
      %v797 = vpop.f32.mrb[0].mxu0
      %v798 = vadd.f32 %v252, %v797
      %v799 = vpop.f32.mrb[0].mxu0
      %800 = vmatprep.mubr.f32.mxu0 0.0
      %801 = vmatmul.mubr.f32.gmra.mrb[0].mxu0 %v415
      %v802 = vpop.f32.mrb[0].mxu0
      %v803 = vadd.f32 %v252, %v802
      %v804 = vpop.f32.mrb[0].mxu0
      %805 = vmatprep.mubr.f32.mxu0 0.0
      %806 = vmatmul.mubr.f32.gmra.mrb[0].mxu0 %v418
      %v807 = vpop.f32.mrb[0].mxu0
      %v808 = vadd.f32 %v252, %v807
      %v809 = vpop.f32.mrb[0].mxu0
      %810 = vmatprep.mubr.f32.mxu0 0.0
      %811 = vmatmul.mubr.f32.gmra.mrb[0].mxu0 %v421
      %v812 = vpop.f32.mrb[0].mxu0
      %v813 = vadd.f32 %v252, %v812
      %v814 = vpop.f32.mrb[0].mxu0
      %815 = vmatprep.mubr.f32.mxu0 0.0
      %816 = vmatmul.mubr.f32.gmra.mrb[0].mxu0 %v424
      %v817 = vpop.f32.mrb[0].mxu0
      %v818 = vadd.f32 %v252, %v817
      %v819 = vpop.f32.mrb[0].mxu0
      %820 = vmatprep.mubr.f32.mxu0 0.0
      %821 = vmatmul.mubr.f32.gmra.mrb[0].mxu0 %v427
      %v822 = vpop.f32.mrb[0].mxu0
      %v823 = vadd.f32 %v252, %v822
      %v824 = vpop.f32.mrb[0].mxu0
      %825 = vmatprep.mubr.f32.mxu0 0.0
      %826 = vmatmul.mubr.f32.gmra.mrb[0].mxu0 %v430
      %v827 = vpop.f32.mrb[0].mxu0
      %v828 = vadd.f32 %v252, %v827
      %v829 = vpop.f32.mrb[0].mxu0
      %830 = vmatprep.mubr.f32.mxu0 0.0
      %831 = vmatmul.mubr.f32.gmra.mrb[0].mxu0 %v433
      %v832 = vpop.f32.mrb[0].mxu0
      %v833 = vadd.f32 %v252, %v832
      %v834 = vpop.f32.mrb[0].mxu0
      %835 = vmatprep.mubr.f32.mxu0 0.0
      %836 = vmatmul.mubr.f32.gmra.mrb[0].mxu0 %v436
      %v837 = vpop.f32.mrb[0].mxu0
      %v838 = vadd.f32 %v252, %v837
      %v839 = vpop.f32.mrb[0].mxu0
      %840 = vmatprep.mubr.f32.mxu0 0.0
      %841 = vmatmul.mubr.f32.gmra.mrb[0].mxu0 %v439
      %v842 = vpop.f32.mrb[0].mxu0
      %v843 = vadd.f32 %v252, %v842
      %v844 = vpop.f32.mrb[0].mxu0
      %845 = vmatprep.mubr.f32.mxu0 0.0
      %846 = vmatmul.mubr.f32.gmra.mrb[0].mxu0 %v442
      %v847 = vpop.f32.mrb[0].mxu0
      %v848 = vadd.f32 %v252, %v847
      %v849 = vpop.f32.mrb[0].mxu0
      %850 = vmatprep.mubr.f32.mxu0 0.0
      %851 = vmatmul.mubr.f32.gmra.mrb[0].mxu0 %v445
      %v852 = vpop.f32.mrb[0].mxu0
      %v853 = vadd.f32 %v252, %v852
      %v854 = vpop.f32.mrb[0].mxu0
      %855 = vmatprep.mubr.f32.mxu0 0.0
      %856 = vmatmul.mubr.f32.gmra.mrb[0].mxu0 %v448
      %v857 = vpop.f32.mrb[0].mxu0
      %v858 = vadd.f32 %v252, %v857
      %v859 = vpop.f32.mrb[0].mxu0
      %860 = vmatprep.mubr.f32.mxu0 0.0
      %861 = vmatmul.mubr.f32.gmra.mrb[0].mxu0 %v451
      %v862 = vpop.f32.mrb[0].mxu0
      %v863 = vadd.f32 %v252, %v862
      %v864 = vpop.f32.mrb[0].mxu0
      %865 = vmatprep.mubr.f32.mxu0 0.0
      %866 = vmatmul.mubr.f32.gmra.mrb[0].mxu0 %v454
      %v867 = vpop.f32.mrb[0].mxu0
      %v868 = vadd.f32 %v252, %v867
      %v869 = vpop.f32.mrb[0].mxu0
      %870 = vmatprep.mubr.f32.mxu0 0.0
      %871 = vmatmul.mubr.f32.gmra.mrb[0].mxu0 %v457
      %v872 = vpop.f32.mrb[0].mxu0
      %v873 = vadd.f32 %v252, %v872
      %v874 = vpop.f32.mrb[0].mxu0
      %875 = vmatprep.mubr.f32.mxu0 0.0
      %876 = vmatmul.mubr.f32.gmra.mrb[0].mxu0 %v460
      %v877 = vpop.f32.mrb[0].mxu0
      %v878 = vadd.f32 %v252, %v877
      %v879 = vpop.f32.mrb[0].mxu0
      %880 = vmatprep.mubr.f32.mxu0 0.0
      %881 = vmatmul.mubr.f32.gmra.mrb[0].mxu0 %v463
      %v882 = vpop.f32.mrb[0].mxu0
      %v883 = vadd.f32 %v252, %v882
      %v884 = vpop.f32.mrb[0].mxu0
      %885 = vmatprep.mubr.f32.mxu0 0.0
      %886 = vmatmul.mubr.f32.gmra.mrb[0].mxu0 %v466
      %v887 = vpop.f32.mrb[0].mxu0
      %v888 = vadd.f32 %v252, %v887
      %v889 = vpop.f32.mrb[0].mxu0
      %890 = vmatprep.mubr.f32.mxu0 0.0
      %891 = vmatmul.mubr.f32.gmra.mrb[0].mxu0 %v469
      %v892 = vpop.f32.mrb[0].mxu0
      %v893 = vadd.f32 %v252, %v892
      %v894 = vpop.f32.mrb[0].mxu0
      %895 = vdwg.mxu0
      %v896 = vmax.f32 %v538, 0.0
      %v897 = vmax.f32 %v543, 0.0
      %v898 = vmax.f32 %v548, 0.0
      %v899 = vmax.f32 %v553, 0.0
      %v900 = vmax.f32 %v558, 0.0
      %v901 = vmax.f32 %v563, 0.0
      %v902 = vmax.f32 %v568, 0.0
      %v903 = vmax.f32 %v573, 0.0
      %v904 = vmax.f32 %v578, 0.0
      %v905 = vmax.f32 %v583, 0.0
      %v906 = vmax.f32 %v588, 0.0
      %v907 = vmax.f32 %v593, 0.0
      %v908 = vmax.f32 %v598, 0.0
      %v909 = vmax.f32 %v603, 0.0
      %v910 = vmax.f32 %v608, 0.0
      %v911 = vmax.f32 %v613, 0.0
      %v912 = vmax.f32 %v618, 0.0
      %v913 = vmax.f32 %v623, 0.0
      %v914 = vmax.f32 %v628, 0.0
      %v915 = vmax.f32 %v633, 0.0
      %v916 = vmax.f32 %v638, 0.0
      %v917 = vmax.f32 %v643, 0.0
      %v918 = vmax.f32 %v648, 0.0
      %v919 = vmax.f32 %v653, 0.0
      %v920 = vmax.f32 %v658, 0.0
      %v921 = vmax.f32 %v663, 0.0
      %v922 = vmax.f32 %v668, 0.0
      %v923 = vmax.f32 %v673, 0.0
      %v924 = vmax.f32 %v678, 0.0
      %v925 = vmax.f32 %v683, 0.0
      %v926 = vmax.f32 %v688, 0.0
      %v927 = vmax.f32 %v693, 0.0
      %v928 = vmax.f32 %v698, 0.0
      %v929 = vmax.f32 %v703, 0.0
      %v930 = vmax.f32 %v708, 0.0
      %v931 = vmax.f32 %v713, 0.0
      %v932 = vmax.f32 %v718, 0.0
      %v933 = vmax.f32 %v723, 0.0
      %v934 = vmax.f32 %v728, 0.0
      %v935 = vmax.f32 %v733, 0.0
      %v936 = vmax.f32 %v738, 0.0
      %v937 = vmax.f32 %v743, 0.0
      %v938 = vmax.f32 %v748, 0.0
      %v939 = vmax.f32 %v753, 0.0
      %v940 = vmax.f32 %v758, 0.0
      %v941 = vmax.f32 %v763, 0.0
      %v942 = vmax.f32 %v768, 0.0
      %v943 = vmax.f32 %v773, 0.0
      %v944 = vmax.f32 %v778, 0.0
      %v945 = vmax.f32 %v783, 0.0
      %v946 = vmax.f32 %v788, 0.0
      %v947 = vmax.f32 %v793, 0.0
      %v948 = vmax.f32 %v798, 0.0
      %v949 = vmax.f32 %v803, 0.0
      %v950 = vmax.f32 %v808, 0.0
      %v951 = vmax.f32 %v813, 0.0
      %v952 = vmax.f32 %v818, 0.0
      %v953 = vmax.f32 %v823, 0.0
      %v954 = vmax.f32 %v828, 0.0
      %v955 = vmax.f32 %v833, 0.0
      %v956 = vmax.f32 %v838, 0.0
      %v957 = vmax.f32 %v843, 0.0
      %v958 = vmax.f32 %v848, 0.0
      %v959 = vmax.f32 %v853, 0.0
      %v960 = vmax.f32 %v858, 0.0
      %v961 = vmax.f32 %v863, 0.0
      %v962 = vmax.f32 %v868, 0.0
      %v963 = vmax.f32 %v873, 0.0
      %v964 = vmax.f32 %v878, 0.0
      %v965 = vmax.f32 %v883, 0.0
      %v966 = vmax.f32 %v888, 0.0
      %v967 = vmax.f32 %v893, 0.0
      %v968 = vmax.f32 %v896, %v914
      %v969 = vmax.f32 %v897, %v915
      %v970 = vmax.f32 %v898, %v916
      %v971 = vmax.f32 %v899, %v917
      %v972 = vmax.f32 %v900, %v918
      %v973 = vmax.f32 %v901, %v919
      %v974 = vmax.f32 %v902, %v920
      %v975 = vmax.f32 %v903, %v921
      %v976 = vmax.f32 %v904, %v922
      %v977 = vmax.f32 %v905, %v923
      %v978 = vmax.f32 %v906, %v924
      %v979 = vmax.f32 %v907, %v925
      %v980 = vmax.f32 %v908, %v926
      %v981 = vmax.f32 %v909, %v927
      %v982 = vmax.f32 %v910, %v928
      %v983 = vmax.f32 %v911, %v929
      %v984 = vmax.f32 %v912, %v930
      %v985 = vmax.f32 %v913, %v931
      %v986 = vmax.f32 %v932, %v950
      %v987 = vmax.f32 %v933, %v951
      %v988 = vmax.f32 %v934, %v952
      %v989 = vmax.f32 %v935, %v953
      %v990 = vmax.f32 %v936, %v954
      %v991 = vmax.f32 %v937, %v955
      %v992 = vmax.f32 %v938, %v956
      %v993 = vmax.f32 %v939, %v957
      %v994 = vmax.f32 %v940, %v958
      %v995 = vmax.f32 %v941, %v959
      %v996 = vmax.f32 %v942, %v960
      %v997 = vmax.f32 %v943, %v961
      %v998 = vmax.f32 %v944, %v962
      %v999 = vmax.f32 %v945, %v963
      %v1000 = vmax.f32 %v946, %v964
      %v1001 = vmax.f32 %v947, %v965
      %v1002 = vmax.f32 %v948, %v966
      %v1003 = vmax.f32 %v949, %v967
      %v1004 = vmax.f32 %v968, %v986
      %v1005 = vmax.f32 %v969, %v987
      %v1006 = vmax.f32 %v970, %v988
      %v1007 = vmax.f32 %v971, %v989
      %v1008 = vmax.f32 %v972, %v990
      %v1009 = vmax.f32 %v973, %v991
      %v1010 = vmax.f32 %v974, %v992
      %v1011 = vmax.f32 %v975, %v993
      %v1012 = vmax.f32 %v976, %v994
      %v1013 = vmax.f32 %v977, %v995
      %v1014 = vmax.f32 %v978, %v996
      %v1015 = vmax.f32 %v979, %v997
      %v1016 = vmax.f32 %v980, %v998
      %v1017 = vmax.f32 %v981, %v999
      %v1018 = vmax.f32 %v982, %v1000
      %v1019 = vmax.f32 %v983, %v1001
      %v1020 = vmax.f32 %v984, %v1002
      %v1021 = vmax.f32 %v985, %v1003
      %1022 = vst [vmem:[%s170] sm:$0xff] %v1004
      %1023 = vst [vmem:[%s170 + $0x8] sm:$0xff] %v1005
      %1024 = vst [vmem:[%s170 + $0x10] sm:$0xff] %v1006
      %1025 = vst [vmem:[%s170 + $0x18] sm:$0xff] %v1007
      %1026 = vst [vmem:[%s170 + $0x20] sm:$0xff] %v1008
      %1027 = vst [vmem:[%s170 + $0x28] sm:$0xff] %v1009
      %1028 = vst [vmem:[%s170 + $0x30] sm:$0xff] %v1010
      %1029 = vst [vmem:[%s170 + $0x38] sm:$0xff] %v1011
      %1030 = vst [vmem:[%s170 + $0x40] sm:$0xff] %v1012
      %1031 = vst [vmem:[%s170 + $0x48] sm:$0xff] %v1013
      %1032 = vst [vmem:[%s170 + $0x50] sm:$0xff] %v1014
      %1033 = vst [vmem:[%s170 + $0x58] sm:$0xff] %v1015
      %1034 = vst [vmem:[%s170 + $0x60] sm:$0xff] %v1016
      %1035 = vst [vmem:[%s170 + $0x68] sm:$0xff] %v1017
      %1036 = vst [vmem:[%s170 + $0x70] sm:$0xff] %v1018
      %1037 = vst [vmem:[%s170 + $0x78] sm:$0xff] %v1019
      %1038 = vst [vmem:[%s170 + $0x80] sm:$0xff] %v1020
      %1039 = vst [vmem:[%s170 + $0x88] sm:$0xff] %v1021
      %p1040 = scmp.lt.s32.totalorder %s14, 1
      %s1041 = scalar_select %p1040, %s14, 1
      %s1042 = smul.addr %s1041, 18
      %s1043 = smul.addr %s1042, 8
      %s1044 = scalar_lea.vmem %s3, %s1043
      // Predicated region
      $region33: #{lenet_forward.3} parent=31 // pred_check
        %p1045 = pneg %p100
      $region34: #{lenet_forward.3} parent=31 // pred_check_branch
        %1047 = sbr.rel (%p1045) target = $region36
      $region35: #{lenet_forward.3} parent=31 // pred_region
        _
      $region36: #{lenet_forward.3} parent=31 // pred_fallthru
        _
    $region32: #{lenet_forward.3} parent=5 // pred_fallthru
      _
    %p1048 = scmp.le.s32.totalorder 2, %s9
    // Predicated region
    $region37: #{lenet_forward.3} parent=5 // pred_check
      %p1049 = pneg %p1048
    $region38: #{lenet_forward.3} parent=5 // pred_check_branch
      %1051 = sbr.rel (%p1049) target = $region40
    $region39: #{lenet_forward.3} parent=5 // pred_region
      %s1052 = ssub.s32 %s9, 2
      // Predicated region
      $region41: #{lenet_forward.3} parent=39 // pred_check
        %p1053 = pneg %p106
      $region42: #{lenet_forward.3} parent=39 // pred_check_branch
        %1055 = sbr.rel (%p1053) target = $region44
      $region43: #{lenet_forward.3} parent=39 // pred_region
        %p1056 = scmp.lt.s32.totalorder %s15, 1
        %s1057 = scalar_select %p1056, %s15, 1
        %s1058 = smul.addr %s1057, 18
        %s1059 = smul.addr %s1058, 8
        %s1060 = scalar_lea.vmem %s3, %s1059
      $region44: #{lenet_forward.3} parent=39 // pred_fallthru
        _
    $region40: #{lenet_forward.3} parent=5 // pred_fallthru
      _
  $region6: #{lenet_forward.3} parent=0 // loop_footer
    %s13 = sadd.s32 1, %s9
  $region7: #{lenet_forward.3} parent=0 // loop_footer_branch
    %8 = sbr.rel target = $region3
  $region8: #{lenet_forward.3} parent=0 // loop_exit
    _

// kernel: lenet_forward.4
$region0: #{lenet_forward.4}
  #allocation0 [shape = 'u32[]', space=smem, size = 0x4, offset = 0x4, fixed_abs, tag = 'smem constant byte address 0x4 - core index']
  #allocation1 [shape = 'u32[144,128]{1,0:T(1,128)}', space=vmem, size = 0x12000, scoped, tag = 'internal scratch']
  %s0 = inlined_call_operand.vmem [shape: f32[2,64,600], index: 0, kind: input, shape index: {}]
  %s1 = inlined_call_operand.vmem [shape: f32[600,128], index: 1, kind: input, shape index: {}]
  %s2 = inlined_call_operand.vmem [shape: f32[1,128], index: 2, kind: input, shape index: {}]
  %s3 = inlined_call_operand.vmem [shape: f32[2,16,128], index: 3, kind: output, shape index: {}]
  %s4 = sld [smem:[#allocation0]]
  $region45: #{lenet_forward.4} parent=0
    _
  %s6 = ssub.s32 1, %s4
  %s7 = scalar_select 0, %s6, %s4
  loop: start=0, step=1, limit=4
  $region2: #{lenet_forward.4} parent=0 // loop_pre_header
    _
  $region3: #{lenet_forward.4} parent=0 // loop_header
    %s9 = sphi 0, %s13
    %p10 = scmp.ge.s32.totalorder %s9, 4
    %s19 = sphi 0, %s21
    %s22 = sphi 0, %s19
    %s23 = sphi 0, %s22
    %s39 = sphi 0, %s23
    %s43 = sphi 0, %s43
    %s45 = sphi 0, %s43
    %s46 = sphi 0, %s45
    %s60 = sphi 0, %s46
    %s64 = sphi 0, %s64
    %s66 = sphi 0, %s64
    %s67 = sphi 0, %s66
    %s81 = sphi 0, %s67
    %s87 = sphi 0, %s89
    %s90 = sphi 0, %s87
    %s91 = sphi 0, %s90
    %s107 = sphi 0, %s91
  $region4: #{lenet_forward.4} parent=0 // loop_header_branch
    %12 = sbr.rel (%p10) target = $region8
  $region5: #{lenet_forward.4} parent=0 // loop_body
    %s14 = ssub.s32 %s9, 1
    %s15 = ssub.s32 %s9, 2
    %s16 = sadd.s32 %s9, 1
    %s17 = ssub.s32 %s9, %s16
    %p18 = scmp.eq.s32.totalorder %s17, 0
    %s20 = sadd.s32 %s19, 1
    %s21 = scalar_select %p18, %s19, %s20
    %p24 = pneg %p18
    %p25 = scmp.eq.s32.totalorder %s9, 1
    %p26 = por %p24, %p25
    %p27 = scmp.ne.s32.totalorder %s19, %s22
    %p28 = scmp.eq.s32.totalorder %s9, 0
    %p29 = por %p27, %p28
    %p30 = scmp.ne.s32.totalorder %s19, %s22
    %p31 = scmp.eq.s32.totalorder %s14, 1
    %p32 = por %p30, %p31
    %p33 = scmp.ne.s32.totalorder %s22, %s23
    %p34 = scmp.eq.s32.totalorder %s14, 0
    %p35 = por %p33, %p34
    %p36 = scmp.ne.s32.totalorder %s22, %s23
    %p37 = scmp.eq.s32.totalorder %s15, 1
    %p38 = por %p36, %p37
    %p40 = scmp.ne.s32.totalorder %s23, %s39
    %p41 = scmp.eq.s32.totalorder %s15, 0
    %p42 = por %p40, %p41
    %s44 = sadd.s32 %s43, 1
    %p47 = scmp.eq.s32.totalorder %s9, 1
    %p48 = scmp.ne.s32.totalorder %s43, %s45
    %p49 = scmp.eq.s32.totalorder %s9, 0
    %p50 = por %p48, %p49
    %p51 = scmp.ne.s32.totalorder %s43, %s45
    %p52 = scmp.eq.s32.totalorder %s14, 1
    %p53 = por %p51, %p52
    %p54 = scmp.ne.s32.totalorder %s45, %s46
    %p55 = scmp.eq.s32.totalorder %s14, 0
    %p56 = por %p54, %p55
    %p57 = scmp.ne.s32.totalorder %s45, %s46
    %p58 = scmp.eq.s32.totalorder %s15, 1
    %p59 = por %p57, %p58
    %p61 = scmp.ne.s32.totalorder %s46, %s60
    %p62 = scmp.eq.s32.totalorder %s15, 0
    %p63 = por %p61, %p62
    %s65 = sadd.s32 %s64, 1
    %p68 = scmp.eq.s32.totalorder %s9, 1
    %p69 = scmp.ne.s32.totalorder %s64, %s66
    %p70 = scmp.eq.s32.totalorder %s9, 0
    %p71 = por %p69, %p70
    %p72 = scmp.ne.s32.totalorder %s64, %s66
    %p73 = scmp.eq.s32.totalorder %s14, 1
    %p74 = por %p72, %p73
    %p75 = scmp.ne.s32.totalorder %s66, %s67
    %p76 = scmp.eq.s32.totalorder %s14, 0
    %p77 = por %p75, %p76
    %p78 = scmp.ne.s32.totalorder %s66, %s67
    %p79 = scmp.eq.s32.totalorder %s15, 1
    %p80 = por %p78, %p79
    %p82 = scmp.ne.s32.totalorder %s67, %s81
    %p83 = scmp.eq.s32.totalorder %s15, 0
    %p84 = por %p82, %p83
    %s85 = ssub.s32 %s9, %s16
    %p86 = scmp.eq.s32.totalorder %s85, 0
    %s88 = sadd.s32 %s87, 1
    %s89 = scalar_select %p86, %s87, %s88
    %p92 = pneg %p86
    %p93 = scmp.eq.s32.totalorder %s9, 1
    %p94 = por %p92, %p93
    %p95 = scmp.ne.s32.totalorder %s87, %s90
    %p96 = scmp.eq.s32.totalorder %s9, 0
    %p97 = por %p95, %p96
    %p98 = scmp.ne.s32.totalorder %s87, %s90
    %p99 = scmp.eq.s32.totalorder %s14, 1
    %p100 = por %p98, %p99
    %p101 = scmp.ne.s32.totalorder %s90, %s91
    %p102 = scmp.eq.s32.totalorder %s14, 0
    %p103 = por %p101, %p102
    %p104 = scmp.ne.s32.totalorder %s90, %s91
    %p105 = scmp.eq.s32.totalorder %s15, 1
    %p106 = por %p104, %p105
    %p108 = scmp.ne.s32.totalorder %s91, %s107
    %p109 = scmp.eq.s32.totalorder %s15, 0
    %p110 = por %p108, %p109
    %p111 = scmp.le.s32.totalorder 1, %s9
    %p112 = scmp.lt.s32.totalorder %s9, 3
    %p113 = pnand %p111, %p112
    %p114 = pneg %p113
    // Predicated region
    $region9: #{lenet_forward.4} parent=5 // pred_check
      _
    $region10: #{lenet_forward.4} parent=5 // pred_check_branch
      %116 = sbr.rel (%p113) target = $region12
    $region11: #{lenet_forward.4} parent=5 // pred_region
      %s117 = ssub.s32 %s9, 1
      // Predicated region
      $region13: #{lenet_forward.4} parent=11 // pred_check
        %p118 = pneg %p56
      $region14: #{lenet_forward.4} parent=11 // pred_check_branch
        %120 = sbr.rel (%p118) target = $region16
      $region15: #{lenet_forward.4} parent=11 // pred_region
        _
      $region16: #{lenet_forward.4} parent=11 // pred_fallthru
        _
      // Predicated region
      $region17: #{lenet_forward.4} parent=11 // pred_check
        %p121 = pneg %p77
      $region18: #{lenet_forward.4} parent=11 // pred_check_branch
        %123 = sbr.rel (%p121) target = $region20
      $region19: #{lenet_forward.4} parent=11 // pred_region
        _
      $region20: #{lenet_forward.4} parent=11 // pred_fallthru
        _
    $region12: #{lenet_forward.4} parent=5 // pred_fallthru
      _
    %p124 = scmp.lt.s32.totalorder %s9, 2
    // Predicated region
    $region21: #{lenet_forward.4} parent=5 // pred_check
      %p125 = pneg %p124
    $region22: #{lenet_forward.4} parent=5 // pred_check_branch
      %127 = sbr.rel (%p125) target = $region24
    $region23: #{lenet_forward.4} parent=5 // pred_region
      // Predicated region
      $region25: #{lenet_forward.4} parent=23 // pred_check
        %p128 = pneg %p29
      $region26: #{lenet_forward.4} parent=23 // pred_check_branch
        %130 = sbr.rel (%p128) target = $region28
      $region27: #{lenet_forward.4} parent=23 // pred_region
        %p131 = scmp.lt.s32.totalorder %s9, 1
        %s132 = scalar_select %p131, %s9, 1
        %s133 = smul.addr %s132, 40
        %s134 = smul.addr %s133, 8
        %s135 = scalar_lea.vmem %s0, %s134
      $region28: #{lenet_forward.4} parent=23 // pred_fallthru
        _
    $region24: #{lenet_forward.4} parent=5 // pred_fallthru
      _
    %p136 = scmp.le.s32.totalorder 1, %s9
    %p137 = scmp.lt.s32.totalorder %s9, 3
    %p138 = pnand %p136, %p137
    %p139 = pneg %p138
    // Predicated region
    $region29: #{lenet_forward.4} parent=5 // pred_check
      _
    $region30: #{lenet_forward.4} parent=5 // pred_check_branch
      %141 = sbr.rel (%p138) target = $region32
    $region31: #{lenet_forward.4} parent=5 // pred_region
      %s142 = ssub.s32 %s9, 1
      %p143 = scmp.lt.s32.totalorder %s14, 1
      %s144 = scalar_select %p143, %s14, 1
      %s145 = smul.addr %s144, 40
      %s146 = smul.addr %s145, 8
      %s147 = scalar_lea.vmem %s0, %s146
      %p148 = pneg %p35
      %p149 = pneg %p32
      %p150 = pneg %p56
      %p151 = pneg %p53
      %p152 = pneg %p77
      %p153 = pneg %p74
      %p154 = pneg %p103
      %p155 = pneg %p100
      %p156 = scmp.lt.s32.totalorder %s14, 1
      %s157 = scalar_select %p156, %s14, 1
      %s158 = smul.addr %s157, 2
      %s159 = smul.addr %s158, 8
      %s160 = scalar_lea.vmem %s3, %s159
      %p161 = scmp.lt.s32.totalorder %s14, 1
      %s162 = scalar_select %p161, %s14, 1
      %s163 = smul.addr %s162, 40
      %s164 = smul.addr %s163, 8
      %s165 = scalar_lea.vmem %s0, %s164
      %p166 = scmp.lt.s32.totalorder %s14, 1
      %s167 = scalar_select %p166, %s14, 1
      %s168 = smul.addr %s167, 2
      %s169 = smul.addr %s168, 8
      %s170 = scalar_lea.vmem %s3, %s169
      %v171 = vld [vmem:[%s165] sm:$0xff]
      %v172 = vld [vmem:[%s165 + $0x8] sm:$0xff]
      %v173 = vld [vmem:[%s165 + $0x10] sm:$0xff]
      %v174 = vld [vmem:[%s165 + $0x18] sm:$0xff]
      %v175 = vld [vmem:[%s165 + $0x20] sm:$0xff]
      %v176 = vld [vmem:[%s165 + $0x28] sm:$0xff]
      %v177 = vld [vmem:[%s165 + $0x30] sm:$0xff]
      %v178 = vld [vmem:[%s165 + $0x38] sm:$0xff]
      %v179 = vld [vmem:[%s165 + $0x40] sm:$0xff]
      %v180 = vld [vmem:[%s165 + $0x48] sm:$0xff]
      %v181 = vld [vmem:[%s165 + $0x50] sm:$0xff]
      %v182 = vld [vmem:[%s165 + $0x58] sm:$0xff]
      %v183 = vld [vmem:[%s165 + $0x60] sm:$0xff]
      %v184 = vld [vmem:[%s165 + $0x68] sm:$0xff]
      %v185 = vld [vmem:[%s165 + $0x70] sm:$0xff]
      %v186 = vld [vmem:[%s165 + $0x78] sm:$0xff]
      %v187 = vld [vmem:[%s165 + $0x80] sm:$0xff]
      %v188 = vld [vmem:[%s165 + $0x88] sm:$0xff]
      %v189 = vld [vmem:[%s165 + $0x90] sm:$0xff]
      %v190 = vld [vmem:[%s165 + $0x98] sm:$0xff]
      %v191 = vld [vmem:[%s165 + $0xa0] sm:$0xff]
      %v192 = vld [vmem:[%s165 + $0xa8] sm:$0xff]
      %v193 = vld [vmem:[%s165 + $0xb0] sm:$0xff]
      %v194 = vld [vmem:[%s165 + $0xb8] sm:$0xff]
      %v195 = vld [vmem:[%s165 + $0xc0] sm:$0xff]
      %v196 = vld [vmem:[%s165 + $0xc8] sm:$0xff]
      %v197 = vld [vmem:[%s165 + $0xd0] sm:$0xff]
      %v198 = vld [vmem:[%s165 + $0xd8] sm:$0xff]
      %v199 = vld [vmem:[%s165 + $0xe0] sm:$0xff]
      %v200 = vld [vmem:[%s165 + $0xe8] sm:$0xff]
      %v201 = vld [vmem:[%s165 + $0xf0] sm:$0xff]
      %v202 = vld [vmem:[%s165 + $0xf8] sm:$0xff]
      %v203 = vld [vmem:[%s165 + $0x100] sm:$0xff]
      %v204 = vld [vmem:[%s165 + $0x108] sm:$0xff]
      %v205 = vld [vmem:[%s165 + $0x110] sm:$0xff]
      %v206 = vld [vmem:[%s165 + $0x118] sm:$0xff]
      %v207 = vld [vmem:[%s165 + $0x120] sm:$0xff]
      %v208 = vld [vmem:[%s165 + $0x128] sm:$0xff]
      %v209 = vld [vmem:[%s165 + $0x130] sm:$0xff]
      %v210 = vld [vmem:[%s165 + $0x138] sm:$0xff]
      %v211 = vld [vmem:[%s1] sm:$0xff]
      %v212 = vld [vmem:[%s1 + $0x8] sm:$0xff]
      %v213 = vld [vmem:[%s1 + $0x10] sm:$0xff]
      %v214 = vld [vmem:[%s1 + $0x18] sm:$0xff]
      %v215 = vld [vmem:[%s1 + $0x20] sm:$0xff]
      %v216 = vld [vmem:[%s1 + $0x28] sm:$0xff]
      %v217 = vld [vmem:[%s1 + $0x30] sm:$0xff]
      %v218 = vld [vmem:[%s1 + $0x38] sm:$0xff]
      %v219 = vld [vmem:[%s1 + $0x40] sm:$0xff]
      %v220 = vld [vmem:[%s1 + $0x48] sm:$0xff]
      %v221 = vld [vmem:[%s1 + $0x50] sm:$0xff]
      %v222 = vld [vmem:[%s1 + $0x58] sm:$0xff]
      %v223 = vld [vmem:[%s1 + $0x60] sm:$0xff]
      %v224 = vld [vmem:[%s1 + $0x68] sm:$0xff]
      %v225 = vld [vmem:[%s1 + $0x70] sm:$0xff]
      %v226 = vld [vmem:[%s1 + $0x78] sm:$0xff]
      %v227 = vld [vmem:[%s1 + $0x80] sm:$0xff]
      %v228 = vld [vmem:[%s1 + $0x88] sm:$0xff]
      %v229 = vld [vmem:[%s1 + $0x90] sm:$0xff]
      %v230 = vld [vmem:[%s1 + $0x98] sm:$0xff]
      %v231 = vld [vmem:[%s1 + $0xa0] sm:$0xff]
      %v232 = vld [vmem:[%s1 + $0xa8] sm:$0xff]
      %v233 = vld [vmem:[%s1 + $0xb0] sm:$0xff]
      %v234 = vld [vmem:[%s1 + $0xb8] sm:$0xff]
      %v235 = vld [vmem:[%s1 + $0xc0] sm:$0xff]
      %v236 = vld [vmem:[%s1 + $0xc8] sm:$0xff]
      %v237 = vld [vmem:[%s1 + $0xd0] sm:$0xff]
      %v238 = vld [vmem:[%s1 + $0xd8] sm:$0xff]
      %v239 = vld [vmem:[%s1 + $0xe0] sm:$0xff]
      %v240 = vld [vmem:[%s1 + $0xe8] sm:$0xff]
      %v241 = vld [vmem:[%s1 + $0xf0] sm:$0xff]
      %v242 = vld [vmem:[%s1 + $0xf8] sm:$0xff]
      %v243 = vld [vmem:[%s1 + $0x100] sm:$0xff]
      %v244 = vld [vmem:[%s1 + $0x108] sm:$0xff]
      %v245 = vld [vmem:[%s1 + $0x110] sm:$0xff]
      %v246 = vld [vmem:[%s1 + $0x118] sm:$0xff]
      %v247 = vld [vmem:[%s1 + $0x120] sm:$0xff]
      %v248 = vld [vmem:[%s1 + $0x128] sm:$0xff]
      %v249 = vld [vmem:[%s1 + $0x130] sm:$0xff]
      %v250 = vld [vmem:[%s1 + $0x138] sm:$0xff]
      %v251 = vld [vmem:[%s1 + $0x140] sm:$0xff]
      %v252 = vld [vmem:[%s1 + $0x148] sm:$0xff]
      %v253 = vld [vmem:[%s1 + $0x150] sm:$0xff]
      %v254 = vld [vmem:[%s1 + $0x158] sm:$0xff]
      %v255 = vld [vmem:[%s1 + $0x160] sm:$0xff]
      %v256 = vld [vmem:[%s1 + $0x168] sm:$0xff]
      %v257 = vld [vmem:[%s1 + $0x170] sm:$0xff]
      %v258 = vld [vmem:[%s1 + $0x178] sm:$0xff]
      %v259 = vld [vmem:[%s1 + $0x180] sm:$0xff]
      %v260 = vld [vmem:[%s1 + $0x188] sm:$0xff]
      %v261 = vld [vmem:[%s1 + $0x190] sm:$0xff]
      %v262 = vld [vmem:[%s1 + $0x198] sm:$0xff]
      %v263 = vld [vmem:[%s1 + $0x1a0] sm:$0xff]
      %v264 = vld [vmem:[%s1 + $0x1a8] sm:$0xff]
      %v265 = vld [vmem:[%s1 + $0x1b0] sm:$0xff]
      %v266 = vld [vmem:[%s1 + $0x1b8] sm:$0xff]
      %v267 = vld [vmem:[%s1 + $0x1c0] sm:$0xff]
      %v268 = vld [vmem:[%s1 + $0x1c8] sm:$0xff]
      %v269 = vld [vmem:[%s1 + $0x1d0] sm:$0xff]
      %v270 = vld [vmem:[%s1 + $0x1d8] sm:$0xff]
      %v271 = vld [vmem:[%s1 + $0x1e0] sm:$0xff]
      %v272 = vld [vmem:[%s1 + $0x1e8] sm:$0xff]
      %v273 = vld [vmem:[%s1 + $0x1f0] sm:$0xff]
      %v274 = vld [vmem:[%s1 + $0x1f8] sm:$0xff]
      %v275 = vld [vmem:[%s1 + $0x200] sm:$0xff]
      %v276 = vld [vmem:[%s1 + $0x208] sm:$0xff]
      %v277 = vld [vmem:[%s1 + $0x210] sm:$0xff]
      %v278 = vld [vmem:[%s1 + $0x218] sm:$0xff]
      %v279 = vld [vmem:[%s1 + $0x220] sm:$0xff]
      %v280 = vld [vmem:[%s1 + $0x228] sm:$0xff]
      %v281 = vld [vmem:[%s1 + $0x230] sm:$0xff]
      %v282 = vld [vmem:[%s1 + $0x238] sm:$0xff]
      %v283 = vld [vmem:[%s1 + $0x240] sm:$0xff]
      %v284 = vld [vmem:[%s1 + $0x248] sm:$0xff]
      %v285 = vld [vmem:[%s1 + $0x250] sm:$0xff]
      %v286 = vld [vmem:[%s2] sm:$0x1]
      %v288 = vlaneseq
      %v289 = vshrl.u32 %v288, 7
      %v290 = vsub.s32 0, %v289
      %v291 = vrot.slane %v286, %v290
      %vm293 = vcmask 719872
      %v295 = vsel %vm293, %v175, 0
      %v298 = vsel %vm293, %v180, 0
      %v301 = vsel %vm293, %v185, 0
      %v304 = vsel %vm293, %v190, 0
      %v307 = vsel %vm293, %v195, 0
      %v310 = vsel %vm293, %v200, 0
      %v313 = vsel %vm293, %v205, 0
      %v316 = vsel %vm293, %v210, 0
      %318 = vmatprep.subr.mxu0 0.0
      %319 = vmatpush1.msra.mxu0 %v211
      %320 = vmatprep.subr.mxu0 0.0
      %321 = vmatpush1.msra.mxu0 %v212
      %322 = vmatprep.subr.mxu0 0.0
      %323 = vmatpush1.msra.mxu0 %v213
      %324 = vmatprep.subr.mxu0 0.0
      %325 = vmatpush1.msra.mxu0 %v214
      %326 = vmatprep.subr.mxu0 0.0
      %327 = vmatpush1.msra.mxu0 %v215
      %328 = vmatprep.subr.mxu0 0.0
      %329 = vmatpush1.msra.mxu0 %v216
      %330 = vmatprep.subr.mxu0 0.0
      %331 = vmatpush1.msra.mxu0 %v217
      %332 = vmatprep.subr.mxu0 0.0
      %333 = vmatpush1.msra.mxu0 %v218
      %334 = vmatprep.subr.mxu0 0.0
      %335 = vmatpush1.msra.mxu0 %v219
      %336 = vmatprep.subr.mxu0 0.0
      %337 = vmatpush1.msra.mxu0 %v220
      %338 = vmatprep.subr.mxu0 0.0
      %339 = vmatpush1.msra.mxu0 %v221
      %340 = vmatprep.subr.mxu0 0.0
      %341 = vmatpush1.msra.mxu0 %v222
      %342 = vmatprep.subr.mxu0 0.0
      %343 = vmatpush1.msra.mxu0 %v223
      %344 = vmatprep.subr.mxu0 0.0
      %345 = vmatpush1.msra.mxu0 %v224
      %346 = vmatprep.subr.mxu0 0.0
      %347 = vmatpush1.msra.mxu0 %v225
      %348 = vmatprep.subr.mxu0 0.0
      %349 = vmatpush1.msra.mxu0 %v226
      %350 = vmatprep.subr.mxu0 0.0
      %351 = vmatpush1.msra.mxu0 %v227
      %352 = vmatprep.subr.mxu0 0.0
      %353 = vmatpush1.msra.mxu0 %v228
      %354 = vmatprep.subr.mxu0 0.0
      %355 = vmatpush1.msra.mxu0 %v229
      %356 = vmatprep.subr.mxu0 0.0
      %357 = vmatpush1.msra.mxu0 %v230
      %358 = vmatprep.subr.mxu0 0.0
      %359 = vmatpush1.msra.mxu0 %v231
      %360 = vmatprep.subr.mxu0 0.0
      %361 = vmatpush1.msra.mxu0 %v232
      %362 = vmatprep.subr.mxu0 0.0
      %363 = vmatpush1.msra.mxu0 %v233
      %364 = vmatprep.subr.mxu0 0.0
      %365 = vmatpush1.msra.mxu0 %v234
      %366 = vmatprep.subr.mxu0 0.0
      %367 = vmatpush1.msra.mxu0 %v235
      %368 = vmatprep.subr.mxu0 0.0
      %369 = vmatpush1.msra.mxu0 %v236
      %370 = vmatprep.subr.mxu0 0.0
      %371 = vmatpush1.msra.mxu0 %v237
      %372 = vmatprep.subr.mxu0 0.0
      %373 = vmatpush1.msra.mxu0 %v238
      %374 = vmatprep.subr.mxu0 0.0
      %375 = vmatpush1.msra.mxu0 %v239
      %376 = vmatprep.subr.mxu0 0.0
      %377 = vmatpush1.msra.mxu0 %v240
      %378 = vmatprep.subr.mxu0 0.0
      %379 = vmatpush1.msra.mxu0 %v241
      %380 = vmatprep.subr.mxu0 0.0
      %381 = vmatpush1.msra.mxu0 %v242
      %382 = vmatprep.mubr.f32.mxu0 %v172
      %383 = vmatmul.mubr.f32.gmra.mrb[0].mxu0 %v171
      %v384 = vpop.f32.mrb[0].mxu0
      %v385 = vadd.f32 %v291, %v384
      %v386 = vpop.f32.mrb[0].mxu0
      %387 = vmatprep.mubr.f32.mxu0 %v177
      %388 = vmatmul.mubr.f32.gmra.mrb[0].mxu0 %v176
      %v389 = vpop.f32.mrb[0].mxu0
      %v390 = vadd.f32 %v291, %v389
      %v391 = vpop.f32.mrb[0].mxu0
      %392 = vmatprep.mubr.f32.mxu0 %v182
      %393 = vmatmul.mubr.f32.gmra.mrb[0].mxu0 %v181
      %v394 = vpop.f32.mrb[0].mxu0
      %v395 = vadd.f32 %v291, %v394
      %v396 = vpop.f32.mrb[0].mxu0
      %397 = vmatprep.mubr.f32.mxu0 %v187
      %398 = vmatmul.mubr.f32.gmra.mrb[0].mxu0 %v186
      %v399 = vpop.f32.mrb[0].mxu0
      %v400 = vadd.f32 %v291, %v399
      %v401 = vpop.f32.mrb[0].mxu0
      %402 = vmatprep.mubr.f32.mxu0 %v192
      %403 = vmatmul.mubr.f32.gmra.mrb[0].mxu0 %v191
      %v404 = vpop.f32.mrb[0].mxu0
      %v405 = vadd.f32 %v291, %v404
      %v406 = vpop.f32.mrb[0].mxu0
      %407 = vmatprep.mubr.f32.mxu0 %v197
      %408 = vmatmul.mubr.f32.gmra.mrb[0].mxu0 %v196
      %v409 = vpop.f32.mrb[0].mxu0
      %v410 = vadd.f32 %v291, %v409
      %v411 = vpop.f32.mrb[0].mxu0
      %412 = vmatprep.mubr.f32.mxu0 %v202
      %413 = vmatmul.mubr.f32.gmra.mrb[0].mxu0 %v201
      %v414 = vpop.f32.mrb[0].mxu0
      %v415 = vadd.f32 %v291, %v414
      %v416 = vpop.f32.mrb[0].mxu0
      %417 = vmatprep.mubr.f32.mxu0 %v207
      %418 = vmatmul.mubr.f32.gmra.mrb[0].mxu0 %v206
      %v419 = vpop.f32.mrb[0].mxu0
      %v420 = vadd.f32 %v291, %v419
      %v421 = vpop.f32.mrb[0].mxu0
      %422 = vdwg.mxu0
      %423 = vmatprep.subr.mxu0 0.0
      %424 = vmatpush1.msra.mxu0 %v243
      %425 = vmatprep.subr.mxu0 0.0
      %426 = vmatpush1.msra.mxu0 %v244
      %427 = vmatprep.subr.mxu0 0.0
      %428 = vmatpush1.msra.mxu0 %v245
      %429 = vmatprep.subr.mxu0 0.0
      %430 = vmatpush1.msra.mxu0 %v246
      %431 = vmatprep.subr.mxu0 0.0
      %432 = vmatpush1.msra.mxu0 %v247
      %433 = vmatprep.subr.mxu0 0.0
      %434 = vmatpush1.msra.mxu0 %v248
      %435 = vmatprep.subr.mxu0 0.0
      %436 = vmatpush1.msra.mxu0 %v249
      %437 = vmatprep.subr.mxu0 0.0
      %438 = vmatpush1.msra.mxu0 %v250
      %439 = vmatprep.subr.mxu0 0.0
      %440 = vmatpush1.msra.mxu0 %v251
      %441 = vmatprep.subr.mxu0 0.0
      %442 = vmatpush1.msra.mxu0 %v252
      %443 = vmatprep.subr.mxu0 0.0
      %444 = vmatpush1.msra.mxu0 %v253
      %445 = vmatprep.subr.mxu0 0.0
      %446 = vmatpush1.msra.mxu0 %v254
      %447 = vmatprep.subr.mxu0 0.0
      %448 = vmatpush1.msra.mxu0 %v255
      %449 = vmatprep.subr.mxu0 0.0
      %450 = vmatpush1.msra.mxu0 %v256
      %451 = vmatprep.subr.mxu0 0.0
      %452 = vmatpush1.msra.mxu0 %v257
      %453 = vmatprep.subr.mxu0 0.0
      %454 = vmatpush1.msra.mxu0 %v258
      %455 = vmatprep.subr.mxu0 0.0
      %456 = vmatpush1.msra.mxu0 %v259
      %457 = vmatprep.subr.mxu0 0.0
      %458 = vmatpush1.msra.mxu0 %v260
      %459 = vmatprep.subr.mxu0 0.0
      %460 = vmatpush1.msra.mxu0 %v261
      %461 = vmatprep.subr.mxu0 0.0
      %462 = vmatpush1.msra.mxu0 %v262
      %463 = vmatprep.subr.mxu0 0.0
      %464 = vmatpush1.msra.mxu0 %v263
      %465 = vmatprep.subr.mxu0 0.0
      %466 = vmatpush1.msra.mxu0 %v264
      %467 = vmatprep.subr.mxu0 0.0
      %468 = vmatpush1.msra.mxu0 %v265
      %469 = vmatprep.subr.mxu0 0.0
      %470 = vmatpush1.msra.mxu0 %v266
      %471 = vmatprep.subr.mxu0 0.0
      %472 = vmatpush1.msra.mxu0 %v267
      %473 = vmatprep.subr.mxu0 0.0
      %474 = vmatpush1.msra.mxu0 %v268
      %475 = vmatprep.subr.mxu0 0.0
      %476 = vmatpush1.msra.mxu0 %v269
      %477 = vmatprep.subr.mxu0 0.0
      %478 = vmatpush1.msra.mxu0 %v270
      %479 = vmatprep.subr.mxu0 0.0
      %480 = vmatpush1.msra.mxu0 %v271
      %481 = vmatprep.subr.mxu0 0.0
      %482 = vmatpush1.msra.mxu0 %v272
      %483 = vmatprep.subr.mxu0 0.0
      %484 = vmatpush1.msra.mxu0 %v273
      %485 = vmatprep.subr.mxu0 0.0
      %486 = vmatpush1.msra.mxu0 %v274
      %487 = vmatprep.mubr.f32.mxu0 %v174
      %488 = vmatmul.mubr.f32.gmra.mrb[0].mxu0 %v173
      %v489 = vpop.f32.mrb[0].mxu0
      %v490 = vadd.f32 %v385, %v489
      %v491 = vpop.f32.mrb[0].mxu0
      %492 = vmatprep.mubr.f32.mxu0 %v179
      %493 = vmatmul.mubr.f32.gmra.mrb[0].mxu0 %v178
      %v494 = vpop.f32.mrb[0].mxu0
      %v495 = vadd.f32 %v390, %v494
      %v496 = vpop.f32.mrb[0].mxu0
      %497 = vmatprep.mubr.f32.mxu0 %v184
      %498 = vmatmul.mubr.f32.gmra.mrb[0].mxu0 %v183
      %v499 = vpop.f32.mrb[0].mxu0
      %v500 = vadd.f32 %v395, %v499
      %v501 = vpop.f32.mrb[0].mxu0
      %502 = vmatprep.mubr.f32.mxu0 %v189
      %503 = vmatmul.mubr.f32.gmra.mrb[0].mxu0 %v188
      %v504 = vpop.f32.mrb[0].mxu0
      %v505 = vadd.f32 %v400, %v504
      %v506 = vpop.f32.mrb[0].mxu0
      %507 = vmatprep.mubr.f32.mxu0 %v194
      %508 = vmatmul.mubr.f32.gmra.mrb[0].mxu0 %v193
      %v509 = vpop.f32.mrb[0].mxu0
      %v510 = vadd.f32 %v405, %v509
      %v511 = vpop.f32.mrb[0].mxu0
      %512 = vmatprep.mubr.f32.mxu0 %v199
      %513 = vmatmul.mubr.f32.gmra.mrb[0].mxu0 %v198
      %v514 = vpop.f32.mrb[0].mxu0
      %v515 = vadd.f32 %v410, %v514
      %v516 = vpop.f32.mrb[0].mxu0
      %517 = vmatprep.mubr.f32.mxu0 %v204
      %518 = vmatmul.mubr.f32.gmra.mrb[0].mxu0 %v203
      %v519 = vpop.f32.mrb[0].mxu0
      %v520 = vadd.f32 %v415, %v519
      %v521 = vpop.f32.mrb[0].mxu0
      %522 = vmatprep.mubr.f32.mxu0 %v209
      %523 = vmatmul.mubr.f32.gmra.mrb[0].mxu0 %v208
      %v524 = vpop.f32.mrb[0].mxu0
      %v525 = vadd.f32 %v420, %v524
      %v526 = vpop.f32.mrb[0].mxu0
      %527 = vdwg.mxu0
      %528 = vmatprep.subr.mxu0 0.0
      %529 = vmatpush1.msra.mxu0 %v275
      %530 = vmatprep.subr.mxu0 0.0
      %531 = vmatpush1.msra.mxu0 %v276
      %532 = vmatprep.subr.mxu0 0.0
      %533 = vmatpush1.msra.mxu0 %v277
      %534 = vmatprep.subr.mxu0 0.0
      %535 = vmatpush1.msra.mxu0 %v278
      %536 = vmatprep.subr.mxu0 0.0
      %537 = vmatpush1.msra.mxu0 %v279
      %538 = vmatprep.subr.mxu0 0.0
      %539 = vmatpush1.msra.mxu0 %v280
      %540 = vmatprep.subr.mxu0 0.0
      %541 = vmatpush1.msra.mxu0 %v281
      %542 = vmatprep.subr.mxu0 0.0
      %543 = vmatpush1.msra.mxu0 %v282
      %544 = vmatprep.subr.mxu0 0.0
      %545 = vmatpush1.msra.mxu0 %v283
      %546 = vmatprep.subr.mxu0 0.0
      %547 = vmatpush1.msra.mxu0 %v284
      %548 = vmatprep.subr.mxu0 0.0
      %549 = vmatpush1.msra.mxu0 %v285
      %550 = vmatprep.subr.mxu0 0.0
      %551 = vmatpush1.msra.mxu0 0.0
      %552 = vmatprep.subr.mxu0 0.0
      %553 = vmatpush1.msra.mxu0 0.0
      %554 = vmatprep.subr.mxu0 0.0
      %555 = vmatpush1.msra.mxu0 0.0
      %556 = vmatprep.subr.mxu0 0.0
      %557 = vmatpush1.msra.mxu0 0.0
      %558 = vmatprep.subr.mxu0 0.0
      %559 = vmatpush1.msra.mxu0 0.0
      %560 = vmatprep.subr.mxu0 0.0
      %561 = vmatpush1.msra.mxu0 0.0
      %562 = vmatprep.subr.mxu0 0.0
      %563 = vmatpush1.msra.mxu0 0.0
      %564 = vmatprep.subr.mxu0 0.0
      %565 = vmatpush1.msra.mxu0 0.0
      %566 = vmatprep.subr.mxu0 0.0
      %567 = vmatpush1.msra.mxu0 0.0
      %568 = vmatprep.subr.mxu0 0.0
      %569 = vmatpush1.msra.mxu0 0.0
      %570 = vmatprep.subr.mxu0 0.0
      %571 = vmatpush1.msra.mxu0 0.0
      %572 = vmatprep.subr.mxu0 0.0
      %573 = vmatpush1.msra.mxu0 0.0
      %574 = vmatprep.subr.mxu0 0.0
      %575 = vmatpush1.msra.mxu0 0.0
      %576 = vmatprep.subr.mxu0 0.0
      %577 = vmatpush1.msra.mxu0 0.0
      %578 = vmatprep.subr.mxu0 0.0
      %579 = vmatpush1.msra.mxu0 0.0
      %580 = vmatprep.subr.mxu0 0.0
      %581 = vmatpush1.msra.mxu0 0.0
      %582 = vmatprep.subr.mxu0 0.0
      %583 = vmatpush1.msra.mxu0 0.0
      %584 = vmatprep.subr.mxu0 0.0
      %585 = vmatpush1.msra.mxu0 0.0
      %586 = vmatprep.subr.mxu0 0.0
      %587 = vmatpush1.msra.mxu0 0.0
      %588 = vmatprep.subr.mxu0 0.0
      %589 = vmatpush1.msra.mxu0 0.0
      %590 = vmatprep.subr.mxu0 0.0
      %591 = vmatpush1.msra.mxu0 0.0
      %592 = vmatprep.mubr.f32.mxu0 0.0
      %593 = vmatmul.mubr.f32.gmra.mrb[0].mxu0 %v295
      %v594 = vpop.f32.mrb[0].mxu0
      %v595 = vadd.f32 %v490, %v594
      %v596 = vpop.f32.mrb[0].mxu0
      %597 = vmatprep.mubr.f32.mxu0 0.0
      %598 = vmatmul.mubr.f32.gmra.mrb[0].mxu0 %v298
      %v599 = vpop.f32.mrb[0].mxu0
      %v600 = vadd.f32 %v495, %v599
      %v601 = vpop.f32.mrb[0].mxu0
      %602 = vmatprep.mubr.f32.mxu0 0.0
      %603 = vmatmul.mubr.f32.gmra.mrb[0].mxu0 %v301
      %v604 = vpop.f32.mrb[0].mxu0
      %v605 = vadd.f32 %v500, %v604
      %v606 = vpop.f32.mrb[0].mxu0
      %607 = vmatprep.mubr.f32.mxu0 0.0
      %608 = vmatmul.mubr.f32.gmra.mrb[0].mxu0 %v304
      %v609 = vpop.f32.mrb[0].mxu0
      %v610 = vadd.f32 %v505, %v609
      %v611 = vpop.f32.mrb[0].mxu0
      %612 = vmatprep.mubr.f32.mxu0 0.0
      %613 = vmatmul.mubr.f32.gmra.mrb[0].mxu0 %v307
      %v614 = vpop.f32.mrb[0].mxu0
      %v615 = vadd.f32 %v510, %v614
      %v616 = vpop.f32.mrb[0].mxu0
      %617 = vmatprep.mubr.f32.mxu0 0.0
      %618 = vmatmul.mubr.f32.gmra.mrb[0].mxu0 %v310
      %v619 = vpop.f32.mrb[0].mxu0
      %v620 = vadd.f32 %v515, %v619
      %v621 = vpop.f32.mrb[0].mxu0
      %622 = vmatprep.mubr.f32.mxu0 0.0
      %623 = vmatmul.mubr.f32.gmra.mrb[0].mxu0 %v313
      %v624 = vpop.f32.mrb[0].mxu0
      %v625 = vadd.f32 %v520, %v624
      %v626 = vpop.f32.mrb[0].mxu0
      %627 = vmatprep.mubr.f32.mxu0 0.0
      %628 = vmatmul.mubr.f32.gmra.mrb[0].mxu0 %v316
      %v629 = vpop.f32.mrb[0].mxu0
      %v630 = vadd.f32 %v525, %v629
      %v631 = vpop.f32.mrb[0].mxu0
      %632 = vdwg.mxu0
      %v633 = vmax.f32 %v595, 0.0
      %v634 = vmax.f32 %v600, 0.0
      %v635 = vmax.f32 %v605, 0.0
      %v636 = vmax.f32 %v610, 0.0
      %v637 = vmax.f32 %v615, 0.0
      %v638 = vmax.f32 %v620, 0.0
      %v639 = vmax.f32 %v625, 0.0
      %v640 = vmax.f32 %v630, 0.0
      %v641 = vmax.f32 %v633, %v635
      %v642 = vmax.f32 %v634, %v636
      %v643 = vmax.f32 %v637, %v639
      %v644 = vmax.f32 %v638, %v640
      %v645 = vmax.f32 %v641, %v643
      %v646 = vmax.f32 %v642, %v644
      %647 = vst [vmem:[%s170] sm:$0xff] %v645
      %648 = vst [vmem:[%s170 + $0x8] sm:$0xff] %v646
      %p649 = scmp.lt.s32.totalorder %s14, 1
      %s650 = scalar_select %p649, %s14, 1
      %s651 = smul.addr %s650, 2
      %s652 = smul.addr %s651, 8
      %s653 = scalar_lea.vmem %s3, %s652
      // Predicated region
      $region33: #{lenet_forward.4} parent=31 // pred_check
        %p654 = pneg %p100
      $region34: #{lenet_forward.4} parent=31 // pred_check_branch
        %656 = sbr.rel (%p654) target = $region36
      $region35: #{lenet_forward.4} parent=31 // pred_region
        _
      $region36: #{lenet_forward.4} parent=31 // pred_fallthru
        _
    $region32: #{lenet_forward.4} parent=5 // pred_fallthru
      _
    %p657 = scmp.le.s32.totalorder 2, %s9
    // Predicated region
    $region37: #{lenet_forward.4} parent=5 // pred_check
      %p658 = pneg %p657
    $region38: #{lenet_forward.4} parent=5 // pred_check_branch
      %660 = sbr.rel (%p658) target = $region40
    $region39: #{lenet_forward.4} parent=5 // pred_region
      %s661 = ssub.s32 %s9, 2
      // Predicated region
      $region41: #{lenet_forward.4} parent=39 // pred_check
        %p662 = pneg %p106
      $region42: #{lenet_forward.4} parent=39 // pred_check_branch
        %664 = sbr.rel (%p662) target = $region44
      $region43: #{lenet_forward.4} parent=39 // pred_region
        %p665 = scmp.lt.s32.totalorder %s15, 1
        %s666 = scalar_select %p665, %s15, 1
        %s667 = smul.addr %s666, 2
        %s668 = smul.addr %s667, 8
        %s669 = scalar_lea.vmem %s3, %s668
      $region44: #{lenet_forward.4} parent=39 // pred_fallthru
        _
    $region40: #{lenet_forward.4} parent=5 // pred_fallthru
      _
  $region6: #{lenet_forward.4} parent=0 // loop_footer
    %s13 = sadd.s32 1, %s9
  $region7: #{lenet_forward.4} parent=0 // loop_footer_branch
    %8 = sbr.rel target = $region3
  $region8: #{lenet_forward.4} parent=0 // loop_exit
    _

// kernel: lenet_forward.5
$region0: #{lenet_forward.5}
  #allocation0 [shape = 'u32[]', space=smem, size = 0x4, offset = 0x4, fixed_abs, tag = 'smem constant byte address 0x4 - core index']
  #allocation1 [shape = 'u32[144,128]{1,0:T(1,128)}', space=vmem, size = 0x12000, scoped, tag = 'internal scratch']
  %s0 = inlined_call_operand.vmem [shape: f32[2,800], index: 0, kind: input, shape index: {}]
  %s1 = inlined_call_operand.vmem [shape: bf16[800,800], index: 1, kind: input, shape index: {}]
  %s2 = inlined_call_operand.vmem [shape: f32[1,800], index: 2, kind: input, shape index: {}]
  %s3 = inlined_call_operand.vmem [shape: bf16[800,500], index: 3, kind: input, shape index: {}]
  %s4 = inlined_call_operand.vmem [shape: f32[1,500], index: 4, kind: input, shape index: {}]
  %s5 = inlined_call_operand.vmem [shape: bf16[500,10], index: 5, kind: input, shape index: {}]
  %s6 = inlined_call_operand.vmem [shape: f32[1,10], index: 6, kind: input, shape index: {}]
  %s7 = inlined_call_operand.hbm [shape: f32[2,10], index: 7, kind: output, shape index: {}]
  %s8 = sld [smem:[#allocation0]]
  $region38: #{lenet_forward.5} parent=0
    _
  %s10 = ssub.s32 1, %s8
  %s11 = scalar_select 0, %s10, %s8
  $region1: #{lenet_forward.5} parent=0
    #allocation2 [shape = 'u8[1024]{0}', space=vmem, size = 0x400, scoped, tag = 'output window, operand 0, single buffered']
    #allocation3 [shape = 's32[1]{0}', space=sflag, size = 0x4, scoped, tag = 'scoped memory for lenet_forward.5']
    %12 = vsyncpa [#allocation3], 0
    // Predicated region
    $region2: #{lenet_forward.5} parent=1 // pred_check
      _
    $region3: #{lenet_forward.5} parent=1 // pred_check_branch
      %14 = sbr.rel (0) target = $region5
    $region4: #{lenet_forward.5} parent=1 // pred_region
      _
    $region5: #{lenet_forward.5} parent=1 // pred_fallthru
      _
    // Predicated region
    $region6: #{lenet_forward.5} parent=1 // pred_check
      _
    $region7: #{lenet_forward.5} parent=1 // pred_check_branch
      %16 = sbr.rel (0) target = $region9
    $region8: #{lenet_forward.5} parent=1 // pred_region
      _
    $region9: #{lenet_forward.5} parent=1 // pred_fallthru
      _
    // Predicated region
    $region10: #{lenet_forward.5} parent=1 // pred_check
      _
    $region11: #{lenet_forward.5} parent=1 // pred_check_branch
      %18 = sbr.rel (0) target = $region13
    $region12: #{lenet_forward.5} parent=1 // pred_region
      _
    $region13: #{lenet_forward.5} parent=1 // pred_fallthru
      _
    // Predicated region
    $region14: #{lenet_forward.5} parent=1 // pred_check
      _
    $region15: #{lenet_forward.5} parent=1 // pred_check_branch
      %20 = sbr.rel (0) target = $region17
    $region16: #{lenet_forward.5} parent=1 // pred_region
      _
    $region17: #{lenet_forward.5} parent=1 // pred_fallthru
      _
    // Predicated region
    $region18: #{lenet_forward.5} parent=1 // pred_check
      _
    $region19: #{lenet_forward.5} parent=1 // pred_check_branch
      %22 = sbr.rel (0) target = $region21
    $region20: #{lenet_forward.5} parent=1 // pred_region
      _
    $region21: #{lenet_forward.5} parent=1 // pred_fallthru
      _
    // Predicated region
    $region22: #{lenet_forward.5} parent=1 // pred_check
      _
    $region23: #{lenet_forward.5} parent=1 // pred_check_branch
      %24 = sbr.rel (0) target = $region25
    $region24: #{lenet_forward.5} parent=1 // pred_region
      _
    $region25: #{lenet_forward.5} parent=1 // pred_fallthru
      _
    // Predicated region
    $region26: #{lenet_forward.5} parent=1 // pred_check
      _
    $region27: #{lenet_forward.5} parent=1 // pred_check_branch
      %26 = sbr.rel (0) target = $region29
    $region28: #{lenet_forward.5} parent=1 // pred_region
      _
    $region29: #{lenet_forward.5} parent=1 // pred_fallthru
      _
    %v28 = vld [vmem:[%s0] sm:$0xff]
    %v29 = vld [vmem:[%s0 + $0x8] sm:$0x3f]
    %v32 = vcombine.high %v28, %v28
    %v34 = vunpack.c.l.s4 1983009808
    %v35 = vunpack.c.0.s8 %v34
    %v36 = vlaneseq
    %v37 = vshrl.u32 %v36, 7
    %v38 = vsub.s32 %v35, %v37
    %v39 = vrot.slane %v28, %v38
    %v41 = vunpack.c.l.s4 1983009808
    %v42 = vunpack.c.0.s8 %v41
    %v43 = vlaneseq
    %v44 = vshrl.u32 %v43, 7
    %v45 = vsub.s32 %v42, %v44
    %v46 = vrot.slane %v32, %v45
    %v47 = vcombine.high %v39, %v39
    %v48 = vcombine.high %v46, %v46
    %v49 = vcombine.high %v29, %v29
    %v51 = vunpack.c.l.s4 1983009808
    %v52 = vunpack.c.0.s8 %v51
    %v53 = vlaneseq
    %v54 = vshrl.u32 %v53, 7
    %v55 = vsub.s32 %v52, %v54
    %v56 = vrot.slane %v29, %v55
    %v58 = vunpack.c.l.s4 1983009808
    %v59 = vunpack.c.0.s8 %v58
    %v60 = vlaneseq
    %v61 = vshrl.u32 %v60, 7
    %v62 = vsub.s32 %v59, %v61
    %v63 = vrot.slane %v49, %v62
    %v64 = vcombine.high %v56, %v56
    %v72 = vpack.c.bf16 %v39, %v39
    %v73 = vpack.c.bf16 %v47, %v47
    %v74 = vpack.c.bf16 %v46, %v46
    %v75 = vpack.c.bf16 %v48, %v48
    %v76 = vpack.c.bf16 %v56, %v56
    %v77 = vpack.c.bf16 %v64, %v64
    %v78 = vpack.c.bf16 %v63, %v63
    %v79 = vld [vmem:[%s1] sm:$0xff]
    %v80 = vld [vmem:[%s1 + $0x8] sm:$0xff]
    %v81 = vld [vmem:[%s1 + $0x10] sm:$0xff]
    %v82 = vld [vmem:[%s1 + $0x18] sm:$0xf]
    %v83 = vld [vmem:[%s1 + $0x1c] sm:$0xff]
    %v84 = vld [vmem:[%s1 + $0x24] sm:$0xff]
    %v85 = vld [vmem:[%s1 + $0x2c] sm:$0xff]
    %v86 = vld [vmem:[%s1 + $0x34] sm:$0xf]
    %v87 = vld [vmem:[%s1 + $0x38] sm:$0xff]
    %v88 = vld [vmem:[%s1 + $0x40] sm:$0xff]
    %v89 = vld [vmem:[%s1 + $0x48] sm:$0xff]
    %v90 = vld [vmem:[%s1 + $0x50] sm:$0xf]
    %v91 = vld [vmem:[%s1 + $0x54] sm:$0xff]
    %v92 = vld [vmem:[%s1 + $0x5c] sm:$0xff]
    %v93 = vld [vmem:[%s1 + $0x64] sm:$0xff]
    %v94 = vld [vmem:[%s1 + $0x6c] sm:$0xf]
    %v95 = vld [vmem:[%s1 + $0x70] sm:$0xff]
    %v96 = vld [vmem:[%s1 + $0x78] sm:$0xff]
    %v97 = vld [vmem:[%s1 + $0x80] sm:$0xff]
    %v98 = vld [vmem:[%s1 + $0x88] sm:$0xf]
    %v99 = vld [vmem:[%s1 + $0x8c] sm:$0xff]
    %v100 = vld [vmem:[%s1 + $0x94] sm:$0xff]
    %v101 = vld [vmem:[%s1 + $0x9c] sm:$0xff]
    %v102 = vld [vmem:[%s1 + $0xa4] sm:$0xf]
    %v103 = vld [vmem:[%s1 + $0xa8] sm:$0xff]
    %v104 = vld [vmem:[%s1 + $0xb0] sm:$0xff]
    %v105 = vld [vmem:[%s1 + $0xb8] sm:$0xff]
    %v106 = vld [vmem:[%s1 + $0xc0] sm:$0xf]
    %v107 = vld [vmem:[%s1 + $0xc4] sm:$0xff]
    %v108 = vld [vmem:[%s1 + $0xcc] sm:$0xff]
    %v109 = vld [vmem:[%s1 + $0xd4] sm:$0xff]
    %v110 = vld [vmem:[%s1 + $0xdc] sm:$0xf]
    %v111 = vld [vmem:[%s1 + $0xe0] sm:$0xff]
    %v112 = vld [vmem:[%s1 + $0xe8] sm:$0xff]
    %v113 = vld [vmem:[%s1 + $0xf0] sm:$0xff]
    %v114 = vld [vmem:[%s1 + $0xf8] sm:$0xf]
    %v115 = vld [vmem:[%s1 + $0xfc] sm:$0xff]
    %v116 = vld [vmem:[%s1 + $0x104] sm:$0xff]
    %v117 = vld [vmem:[%s1 + $0x10c] sm:$0xff]
    %v118 = vld [vmem:[%s1 + $0x114] sm:$0xf]
    %v119 = vld [vmem:[%s1 + $0x118] sm:$0xff]
    %v120 = vld [vmem:[%s1 + $0x120] sm:$0xff]
    %v121 = vld [vmem:[%s1 + $0x128] sm:$0xff]
    %v122 = vld [vmem:[%s1 + $0x130] sm:$0xf]
    %v123 = vld [vmem:[%s1 + $0x134] sm:$0xff]
    %v124 = vld [vmem:[%s1 + $0x13c] sm:$0xff]
    %v125 = vld [vmem:[%s1 + $0x144] sm:$0xff]
    %v126 = vld [vmem:[%s1 + $0x14c] sm:$0xf]
    %v127 = vld [vmem:[%s1 + $0x150] sm:$0xff]
    %v128 = vld [vmem:[%s1 + $0x158] sm:$0xff]
    %v129 = vld [vmem:[%s1 + $0x160] sm:$0xff]
    %v130 = vld [vmem:[%s1 + $0x168] sm:$0xf]
    %v131 = vld [vmem:[%s1 + $0x16c] sm:$0xff]
    %v132 = vld [vmem:[%s1 + $0x174] sm:$0xff]
    %v133 = vld [vmem:[%s1 + $0x17c] sm:$0xff]
    %v134 = vld [vmem:[%s1 + $0x184] sm:$0xf]
    %v135 = vld [vmem:[%s1 + $0x188] sm:$0xff]
    %v136 = vld [vmem:[%s1 + $0x190] sm:$0xff]
    %v137 = vld [vmem:[%s1 + $0x198] sm:$0xff]
    %v138 = vld [vmem:[%s1 + $0x1a0] sm:$0xf]
    %v139 = vld [vmem:[%s1 + $0x1a4] sm:$0xff]
    %v140 = vld [vmem:[%s1 + $0x1ac] sm:$0xff]
    %v141 = vld [vmem:[%s1 + $0x1b4] sm:$0xff]
    %v142 = vld [vmem:[%s1 + $0x1bc] sm:$0xf]
    %v143 = vld [vmem:[%s1 + $0x1c0] sm:$0xff]
    %v144 = vld [vmem:[%s1 + $0x1c8] sm:$0xff]
    %v145 = vld [vmem:[%s1 + $0x1d0] sm:$0xff]
    %v146 = vld [vmem:[%s1 + $0x1d8] sm:$0xf]
    %v147 = vld [vmem:[%s1 + $0x1dc] sm:$0xff]
    %v148 = vld [vmem:[%s1 + $0x1e4] sm:$0xff]
    %v149 = vld [vmem:[%s1 + $0x1ec] sm:$0xff]
    %v150 = vld [vmem:[%s1 + $0x1f4] sm:$0xf]
    %v151 = vld [vmem:[%s1 + $0x1f8] sm:$0xff]
    %v152 = vld [vmem:[%s1 + $0x200] sm:$0xff]
    %v153 = vld [vmem:[%s1 + $0x208] sm:$0xff]
    %v154 = vld [vmem:[%s1 + $0x210] sm:$0xf]
    %v155 = vld [vmem:[%s1 + $0x214] sm:$0xff]
    %v156 = vld [vmem:[%s1 + $0x21c] sm:$0xff]
    %v157 = vld [vmem:[%s1 + $0x224] sm:$0xff]
    %v158 = vld [vmem:[%s1 + $0x22c] sm:$0xf]
    %v159 = vld [vmem:[%s1 + $0x230] sm:$0xff]
    %v160 = vld [vmem:[%s1 + $0x238] sm:$0xff]
    %v161 = vld [vmem:[%s1 + $0x240] sm:$0xff]
    %v162 = vld [vmem:[%s1 + $0x248] sm:$0xf]
    %v163 = vld [vmem:[%s1 + $0x24c] sm:$0xff]
    %v164 = vld [vmem:[%s1 + $0x254] sm:$0xff]
    %v165 = vld [vmem:[%s1 + $0x25c] sm:$0xff]
    %v166 = vld [vmem:[%s1 + $0x264] sm:$0xf]
    %v167 = vld [vmem:[%s1 + $0x268] sm:$0xff]
    %v168 = vld [vmem:[%s1 + $0x270] sm:$0xff]
    %v169 = vld [vmem:[%s1 + $0x278] sm:$0xff]
    %v170 = vld [vmem:[%s1 + $0x280] sm:$0xf]
    %v171 = vld [vmem:[%s1 + $0x284] sm:$0xff]
    %v172 = vld [vmem:[%s1 + $0x28c] sm:$0xff]
    %v173 = vld [vmem:[%s1 + $0x294] sm:$0xff]
    %v174 = vld [vmem:[%s1 + $0x29c] sm:$0xf]
    %v175 = vld [vmem:[%s1 + $0x2a0] sm:$0xff]
    %v176 = vld [vmem:[%s1 + $0x2a8] sm:$0xff]
    %v177 = vld [vmem:[%s1 + $0x2b0] sm:$0xff]
    %v178 = vld [vmem:[%s1 + $0x2b8] sm:$0xf]
    %v179 = vld [vmem:[%s1 + $0x2bc] sm:$0xff]
    %v180 = vld [vmem:[%s1 + $0x2c4] sm:$0xff]
    %v181 = vld [vmem:[%s1 + $0x2cc] sm:$0xff]
    %v182 = vld [vmem:[%s1 + $0x2d4] sm:$0xf]
    %v183 = vld [vmem:[%s1 + $0x2d8] sm:$0xff]
    %v184 = vld [vmem:[%s1 + $0x2e0] sm:$0xff]
    %v185 = vld [vmem:[%s1 + $0x2e8] sm:$0xff]
    %v186 = vld [vmem:[%s1 + $0x2f0] sm:$0xf]
    %v187 = vld [vmem:[%s1 + $0x2f4] sm:$0xff]
    %v188 = vld [vmem:[%s1 + $0x2fc] sm:$0xff]
    %v189 = vld [vmem:[%s1 + $0x304] sm:$0xff]
    %v190 = vld [vmem:[%s1 + $0x30c] sm:$0xf]
    %v191 = vld [vmem:[%s1 + $0x310] sm:$0xff]
    %v192 = vld [vmem:[%s1 + $0x318] sm:$0xff]
    %v193 = vld [vmem:[%s1 + $0x320] sm:$0xff]
    %v194 = vld [vmem:[%s1 + $0x328] sm:$0xf]
    %v195 = vld [vmem:[%s1 + $0x32c] sm:$0xff]
    %v196 = vld [vmem:[%s1 + $0x334] sm:$0xff]
    %v197 = vld [vmem:[%s1 + $0x33c] sm:$0xff]
    %v198 = vld [vmem:[%s1 + $0x344] sm:$0xf]
    %v199 = vld [vmem:[%s1 + $0x348] sm:$0xff]
    %v200 = vld [vmem:[%s1 + $0x350] sm:$0xff]
    %v201 = vld [vmem:[%s1 + $0x358] sm:$0xff]
    %v202 = vld [vmem:[%s1 + $0x360] sm:$0xf]
    %v203 = vld [vmem:[%s1 + $0x364] sm:$0xff]
    %v204 = vld [vmem:[%s1 + $0x36c] sm:$0xff]
    %v205 = vld [vmem:[%s1 + $0x374] sm:$0xff]
    %v206 = vld [vmem:[%s1 + $0x37c] sm:$0xf]
    %v207 = vld [vmem:[%s1 + $0x380] sm:$0xff]
    %v208 = vld [vmem:[%s1 + $0x388] sm:$0xff]
    %v209 = vld [vmem:[%s1 + $0x390] sm:$0xff]
    %v210 = vld [vmem:[%s1 + $0x398] sm:$0xf]
    %v211 = vld [vmem:[%s1 + $0x39c] sm:$0xff]
    %v212 = vld [vmem:[%s1 + $0x3a4] sm:$0xff]
    %v213 = vld [vmem:[%s1 + $0x3ac] sm:$0xff]
    %v214 = vld [vmem:[%s1 + $0x3b4] sm:$0xf]
    %v215 = vld [vmem:[%s1 + $0x3b8] sm:$0xff]
    %v216 = vld [vmem:[%s1 + $0x3c0] sm:$0xff]
    %v217 = vld [vmem:[%s1 + $0x3c8] sm:$0xff]
    %v218 = vld [vmem:[%s1 + $0x3d0] sm:$0xf]
    %v219 = vld [vmem:[%s1 + $0x3d4] sm:$0xff]
    %v220 = vld [vmem:[%s1 + $0x3dc] sm:$0xff]
    %v221 = vld [vmem:[%s1 + $0x3e4] sm:$0xff]
    %v222 = vld [vmem:[%s1 + $0x3ec] sm:$0xf]
    %v223 = vld [vmem:[%s1 + $0x3f0] sm:$0xff]
    %v224 = vld [vmem:[%s1 + $0x3f8] sm:$0xff]
    %v225 = vld [vmem:[%s1 + $0x400] sm:$0xff]
    %v226 = vld [vmem:[%s1 + $0x408] sm:$0xf]
    %v227 = vld [vmem:[%s1 + $0x40c] sm:$0xff]
    %v228 = vld [vmem:[%s1 + $0x414] sm:$0xff]
    %v229 = vld [vmem:[%s1 + $0x41c] sm:$0xff]
    %v230 = vld [vmem:[%s1 + $0x424] sm:$0xf]
    %v231 = vld [vmem:[%s1 + $0x428] sm:$0xff]
    %v232 = vld [vmem:[%s1 + $0x430] sm:$0xff]
    %v233 = vld [vmem:[%s1 + $0x438] sm:$0xff]
    %v234 = vld [vmem:[%s1 + $0x440] sm:$0xf]
    %v235 = vld [vmem:[%s1 + $0x444] sm:$0xff]
    %v236 = vld [vmem:[%s1 + $0x44c] sm:$0xff]
    %v237 = vld [vmem:[%s1 + $0x454] sm:$0xff]
    %v238 = vld [vmem:[%s1 + $0x45c] sm:$0xf]
    %v239 = vld [vmem:[%s1 + $0x460] sm:$0xff]
    %v240 = vld [vmem:[%s1 + $0x468] sm:$0xff]
    %v241 = vld [vmem:[%s1 + $0x470] sm:$0xff]
    %v242 = vld [vmem:[%s1 + $0x478] sm:$0xf]
    %v243 = vld [vmem:[%s1 + $0x47c] sm:$0xff]
    %v244 = vld [vmem:[%s1 + $0x484] sm:$0xff]
    %v245 = vld [vmem:[%s1 + $0x48c] sm:$0xff]
    %v246 = vld [vmem:[%s1 + $0x494] sm:$0xf]
    %v247 = vld [vmem:[%s1 + $0x498] sm:$0xff]
    %v248 = vld [vmem:[%s1 + $0x4a0] sm:$0xff]
    %v249 = vld [vmem:[%s1 + $0x4a8] sm:$0xff]
    %v250 = vld [vmem:[%s1 + $0x4b0] sm:$0xf]
    %v251 = vld [vmem:[%s1 + $0x4b4] sm:$0xff]
    %v252 = vld [vmem:[%s1 + $0x4bc] sm:$0xff]
    %v253 = vld [vmem:[%s1 + $0x4c4] sm:$0xff]
    %v254 = vld [vmem:[%s1 + $0x4cc] sm:$0xf]
    %v255 = vld [vmem:[%s1 + $0x4d0] sm:$0xff]
    %v256 = vld [vmem:[%s1 + $0x4d8] sm:$0xff]
    %v257 = vld [vmem:[%s1 + $0x4e0] sm:$0xff]
    %v258 = vld [vmem:[%s1 + $0x4e8] sm:$0xf]
    %v259 = vld [vmem:[%s1 + $0x4ec] sm:$0xff]
    %v260 = vld [vmem:[%s1 + $0x4f4] sm:$0xff]
    %v261 = vld [vmem:[%s1 + $0x4fc] sm:$0xff]
    %v262 = vld [vmem:[%s1 + $0x504] sm:$0xf]
    %v263 = vld [vmem:[%s1 + $0x508] sm:$0xff]
    %v264 = vld [vmem:[%s1 + $0x510] sm:$0xff]
    %v265 = vld [vmem:[%s1 + $0x518] sm:$0xff]
    %v266 = vld [vmem:[%s1 + $0x520] sm:$0xf]
    %v267 = vld [vmem:[%s1 + $0x524] sm:$0xff]
    %v268 = vld [vmem:[%s1 + $0x52c] sm:$0xff]
    %v269 = vld [vmem:[%s1 + $0x534] sm:$0xff]
    %v270 = vld [vmem:[%s1 + $0x53c] sm:$0xf]
    %v271 = vld [vmem:[%s1 + $0x540] sm:$0xff]
    %v272 = vld [vmem:[%s1 + $0x548] sm:$0xff]
    %v273 = vld [vmem:[%s1 + $0x550] sm:$0xff]
    %v274 = vld [vmem:[%s1 + $0x558] sm:$0xf]
    %v275 = vld [vmem:[%s1 + $0x55c] sm:$0xff]
    %v276 = vld [vmem:[%s1 + $0x564] sm:$0xff]
    %v277 = vld [vmem:[%s1 + $0x56c] sm:$0xff]
    %v278 = vld [vmem:[%s1 + $0x574] sm:$0xf]
    %v279 = vld [vmem:[%s1 + $0x578] sm:$0xff]
    %v280 = vld [vmem:[%s1 + $0x580] sm:$0xff]
    %v281 = vld [vmem:[%s1 + $0x588] sm:$0xff]
    %v282 = vld [vmem:[%s1 + $0x590] sm:$0xf]
    %v283 = vld [vmem:[%s1 + $0x594] sm:$0xff]
    %v284 = vld [vmem:[%s1 + $0x59c] sm:$0xff]
    %v285 = vld [vmem:[%s1 + $0x5a4] sm:$0xff]
    %v286 = vld [vmem:[%s1 + $0x5ac] sm:$0xf]
    %v287 = vld [vmem:[%s1 + $0x5b0] sm:$0xff]
    %v288 = vld [vmem:[%s1 + $0x5b8] sm:$0xff]
    %v289 = vld [vmem:[%s1 + $0x5c0] sm:$0xff]
    %v290 = vld [vmem:[%s1 + $0x5c8] sm:$0xf]
    %v291 = vld [vmem:[%s1 + $0x5cc] sm:$0xff]
    %v292 = vld [vmem:[%s1 + $0x5d4] sm:$0xff]
    %v293 = vld [vmem:[%s1 + $0x5dc] sm:$0xff]
    %v294 = vld [vmem:[%s1 + $0x5e4] sm:$0xf]
    %v295 = vld [vmem:[%s1 + $0x5e8] sm:$0xff]
    %v296 = vld [vmem:[%s1 + $0x5f0] sm:$0xff]
    %v297 = vld [vmem:[%s1 + $0x5f8] sm:$0xff]
    %v298 = vld [vmem:[%s1 + $0x600] sm:$0xf]
    %v299 = vld [vmem:[%s1 + $0x604] sm:$0xff]
    %v300 = vld [vmem:[%s1 + $0x60c] sm:$0xff]
    %v301 = vld [vmem:[%s1 + $0x614] sm:$0xff]
    %v302 = vld [vmem:[%s1 + $0x61c] sm:$0xf]
    %v303 = vld [vmem:[%s1 + $0x620] sm:$0xff]
    %v304 = vld [vmem:[%s1 + $0x628] sm:$0xff]
    %v305 = vld [vmem:[%s1 + $0x630] sm:$0xff]
    %v306 = vld [vmem:[%s1 + $0x638] sm:$0xf]
    %v307 = vld [vmem:[%s1 + $0x63c] sm:$0xff]
    %v308 = vld [vmem:[%s1 + $0x644] sm:$0xff]
    %v309 = vld [vmem:[%s1 + $0x64c] sm:$0xff]
    %v310 = vld [vmem:[%s1 + $0x654] sm:$0xf]
    %v311 = vld [vmem:[%s1 + $0x658] sm:$0xff]
    %v312 = vld [vmem:[%s1 + $0x660] sm:$0xff]
    %v313 = vld [vmem:[%s1 + $0x668] sm:$0xff]
    %v314 = vld [vmem:[%s1 + $0x670] sm:$0xf]
    %v315 = vld [vmem:[%s1 + $0x674] sm:$0xff]
    %v316 = vld [vmem:[%s1 + $0x67c] sm:$0xff]
    %v317 = vld [vmem:[%s1 + $0x684] sm:$0xff]
    %v318 = vld [vmem:[%s1 + $0x68c] sm:$0xf]
    %v319 = vld [vmem:[%s1 + $0x690] sm:$0xff]
    %v320 = vld [vmem:[%s1 + $0x698] sm:$0xff]
    %v321 = vld [vmem:[%s1 + $0x6a0] sm:$0xff]
    %v322 = vld [vmem:[%s1 + $0x6a8] sm:$0xf]
    %v323 = vld [vmem:[%s1 + $0x6ac] sm:$0xff]
    %v324 = vld [vmem:[%s1 + $0x6b4] sm:$0xff]
    %v325 = vld [vmem:[%s1 + $0x6bc] sm:$0xff]
    %v326 = vld [vmem:[%s1 + $0x6c4] sm:$0xf]
    %v327 = vld [vmem:[%s1 + $0x6c8] sm:$0xff]
    %v328 = vld [vmem:[%s1 + $0x6d0] sm:$0xff]
    %v329 = vld [vmem:[%s1 + $0x6d8] sm:$0xff]
    %v330 = vld [vmem:[%s1 + $0x6e0] sm:$0xf]
    %v331 = vld [vmem:[%s1 + $0x6e4] sm:$0xff]
    %v332 = vld [vmem:[%s1 + $0x6ec] sm:$0xff]
    %v333 = vld [vmem:[%s1 + $0x6f4] sm:$0xff]
    %v334 = vld [vmem:[%s1 + $0x6fc] sm:$0xf]
    %v335 = vld [vmem:[%s1 + $0x700] sm:$0xff]
    %v336 = vld [vmem:[%s1 + $0x708] sm:$0xff]
    %v337 = vld [vmem:[%s1 + $0x710] sm:$0xff]
    %v338 = vld [vmem:[%s1 + $0x718] sm:$0xf]
    %v339 = vld [vmem:[%s1 + $0x71c] sm:$0xff]
    %v340 = vld [vmem:[%s1 + $0x724] sm:$0xff]
    %v341 = vld [vmem:[%s1 + $0x72c] sm:$0xff]
    %v342 = vld [vmem:[%s1 + $0x734] sm:$0xf]
    %v343 = vld [vmem:[%s1 + $0x738] sm:$0xff]
    %v344 = vld [vmem:[%s1 + $0x740] sm:$0xff]
    %v345 = vld [vmem:[%s1 + $0x748] sm:$0xff]
    %v346 = vld [vmem:[%s1 + $0x750] sm:$0xf]
    %v347 = vld [vmem:[%s1 + $0x754] sm:$0xff]
    %v348 = vld [vmem:[%s1 + $0x75c] sm:$0xff]
    %v349 = vld [vmem:[%s1 + $0x764] sm:$0xff]
    %v350 = vld [vmem:[%s1 + $0x76c] sm:$0xf]
    %v351 = vld [vmem:[%s1 + $0x770] sm:$0xff]
    %v352 = vld [vmem:[%s1 + $0x778] sm:$0xff]
    %v353 = vld [vmem:[%s1 + $0x780] sm:$0xff]
    %v354 = vld [vmem:[%s1 + $0x788] sm:$0xf]
    %v355 = vld [vmem:[%s1 + $0x78c] sm:$0xff]
    %v356 = vld [vmem:[%s1 + $0x794] sm:$0xff]
    %v357 = vld [vmem:[%s1 + $0x79c] sm:$0xff]
    %v358 = vld [vmem:[%s1 + $0x7a4] sm:$0xf]
    %v359 = vld [vmem:[%s1 + $0x7a8] sm:$0xff]
    %v360 = vld [vmem:[%s1 + $0x7b0] sm:$0xff]
    %v361 = vld [vmem:[%s1 + $0x7b8] sm:$0xff]
    %v362 = vld [vmem:[%s1 + $0x7c0] sm:$0xf]
    %v363 = vld [vmem:[%s1 + $0x7c4] sm:$0xff]
    %v364 = vld [vmem:[%s1 + $0x7cc] sm:$0xff]
    %v365 = vld [vmem:[%s1 + $0x7d4] sm:$0xff]
    %v366 = vld [vmem:[%s1 + $0x7dc] sm:$0xf]
    %v367 = vld [vmem:[%s1 + $0x7e0] sm:$0xff]
    %v368 = vld [vmem:[%s1 + $0x7e8] sm:$0xff]
    %v369 = vld [vmem:[%s1 + $0x7f0] sm:$0xff]
    %v370 = vld [vmem:[%s1 + $0x7f8] sm:$0xf]
    %v371 = vld [vmem:[%s1 + $0x7fc] sm:$0xff]
    %v372 = vld [vmem:[%s1 + $0x804] sm:$0xff]
    %v373 = vld [vmem:[%s1 + $0x80c] sm:$0xff]
    %v374 = vld [vmem:[%s1 + $0x814] sm:$0xf]
    %v375 = vld [vmem:[%s1 + $0x818] sm:$0xff]
    %v376 = vld [vmem:[%s1 + $0x820] sm:$0xff]
    %v377 = vld [vmem:[%s1 + $0x828] sm:$0xff]
    %v378 = vld [vmem:[%s1 + $0x830] sm:$0xf]
    %v379 = vld [vmem:[%s1 + $0x834] sm:$0xff]
    %v380 = vld [vmem:[%s1 + $0x83c] sm:$0xff]
    %v381 = vld [vmem:[%s1 + $0x844] sm:$0xff]
    %v382 = vld [vmem:[%s1 + $0x84c] sm:$0xf]
    %v383 = vld [vmem:[%s1 + $0x850] sm:$0xff]
    %v384 = vld [vmem:[%s1 + $0x858] sm:$0xff]
    %v385 = vld [vmem:[%s1 + $0x860] sm:$0xff]
    %v386 = vld [vmem:[%s1 + $0x868] sm:$0xf]
    %v387 = vld [vmem:[%s1 + $0x86c] sm:$0xff]
    %v388 = vld [vmem:[%s1 + $0x874] sm:$0xff]
    %v389 = vld [vmem:[%s1 + $0x87c] sm:$0xff]
    %v390 = vld [vmem:[%s1 + $0x884] sm:$0xf]
    %v391 = vld [vmem:[%s1 + $0x888] sm:$0xff]
    %v392 = vld [vmem:[%s1 + $0x890] sm:$0xff]
    %v393 = vld [vmem:[%s1 + $0x898] sm:$0xff]
    %v394 = vld [vmem:[%s1 + $0x8a0] sm:$0xf]
    %v395 = vld [vmem:[%s1 + $0x8a4] sm:$0xff]
    %v396 = vld [vmem:[%s1 + $0x8ac] sm:$0xff]
    %v397 = vld [vmem:[%s1 + $0x8b4] sm:$0xff]
    %v398 = vld [vmem:[%s1 + $0x8bc] sm:$0xf]
    %v399 = vld [vmem:[%s1 + $0x8c0] sm:$0xff]
    %v400 = vld [vmem:[%s1 + $0x8c8] sm:$0xff]
    %v401 = vld [vmem:[%s1 + $0x8d0] sm:$0xff]
    %v402 = vld [vmem:[%s1 + $0x8d8] sm:$0xf]
    %v403 = vld [vmem:[%s1 + $0x8dc] sm:$0xff]
    %v404 = vld [vmem:[%s1 + $0x8e4] sm:$0xff]
    %v405 = vld [vmem:[%s1 + $0x8ec] sm:$0xff]
    %v406 = vld [vmem:[%s1 + $0x8f4] sm:$0xf]
    %v407 = vld [vmem:[%s1 + $0x8f8] sm:$0xff]
    %v408 = vld [vmem:[%s1 + $0x900] sm:$0xff]
    %v409 = vld [vmem:[%s1 + $0x908] sm:$0xff]
    %v410 = vld [vmem:[%s1 + $0x910] sm:$0xf]
    %v411 = vld [vmem:[%s1 + $0x914] sm:$0xff]
    %v412 = vld [vmem:[%s1 + $0x91c] sm:$0xff]
    %v413 = vld [vmem:[%s1 + $0x924] sm:$0xff]
    %v414 = vld [vmem:[%s1 + $0x92c] sm:$0xf]
    %v415 = vld [vmem:[%s1 + $0x930] sm:$0xff]
    %v416 = vld [vmem:[%s1 + $0x938] sm:$0xff]
    %v417 = vld [vmem:[%s1 + $0x940] sm:$0xff]
    %v418 = vld [vmem:[%s1 + $0x948] sm:$0xf]
    %v419 = vld [vmem:[%s1 + $0x94c] sm:$0xff]
    %v420 = vld [vmem:[%s1 + $0x954] sm:$0xff]
    %v421 = vld [vmem:[%s1 + $0x95c] sm:$0xff]
    %v422 = vld [vmem:[%s1 + $0x964] sm:$0xf]
    %v423 = vld [vmem:[%s1 + $0x968] sm:$0xff]
    %v424 = vld [vmem:[%s1 + $0x970] sm:$0xff]
    %v425 = vld [vmem:[%s1 + $0x978] sm:$0xff]
    %v426 = vld [vmem:[%s1 + $0x980] sm:$0xf]
    %v427 = vld [vmem:[%s1 + $0x984] sm:$0xff]
    %v428 = vld [vmem:[%s1 + $0x98c] sm:$0xff]
    %v429 = vld [vmem:[%s1 + $0x994] sm:$0xff]
    %v430 = vld [vmem:[%s1 + $0x99c] sm:$0xf]
    %v431 = vld [vmem:[%s1 + $0x9a0] sm:$0xff]
    %v432 = vld [vmem:[%s1 + $0x9a8] sm:$0xff]
    %v433 = vld [vmem:[%s1 + $0x9b0] sm:$0xff]
    %v434 = vld [vmem:[%s1 + $0x9b8] sm:$0xf]
    %v435 = vld [vmem:[%s1 + $0x9bc] sm:$0xff]
    %v436 = vld [vmem:[%s1 + $0x9c4] sm:$0xff]
    %v437 = vld [vmem:[%s1 + $0x9cc] sm:$0xff]
    %v438 = vld [vmem:[%s1 + $0x9d4] sm:$0xf]
    %v439 = vld [vmem:[%s1 + $0x9d8] sm:$0xff]
    %v440 = vld [vmem:[%s1 + $0x9e0] sm:$0xff]
    %v441 = vld [vmem:[%s1 + $0x9e8] sm:$0xff]
    %v442 = vld [vmem:[%s1 + $0x9f0] sm:$0xf]
    %v443 = vld [vmem:[%s1 + $0x9f4] sm:$0xff]
    %v444 = vld [vmem:[%s1 + $0x9fc] sm:$0xff]
    %v445 = vld [vmem:[%s1 + $0xa04] sm:$0xff]
    %v446 = vld [vmem:[%s1 + $0xa0c] sm:$0xf]
    %v447 = vld [vmem:[%s1 + $0xa10] sm:$0xff]
    %v448 = vld [vmem:[%s1 + $0xa18] sm:$0xff]
    %v449 = vld [vmem:[%s1 + $0xa20] sm:$0xff]
    %v450 = vld [vmem:[%s1 + $0xa28] sm:$0xf]
    %v451 = vld [vmem:[%s1 + $0xa2c] sm:$0xff]
    %v452 = vld [vmem:[%s1 + $0xa34] sm:$0xff]
    %v453 = vld [vmem:[%s1 + $0xa3c] sm:$0xff]
    %v454 = vld [vmem:[%s1 + $0xa44] sm:$0xf]
    %v455 = vld [vmem:[%s1 + $0xa48] sm:$0xff]
    %v456 = vld [vmem:[%s1 + $0xa50] sm:$0xff]
    %v457 = vld [vmem:[%s1 + $0xa58] sm:$0xff]
    %v458 = vld [vmem:[%s1 + $0xa60] sm:$0xf]
    %v459 = vld [vmem:[%s1 + $0xa64] sm:$0xff]
    %v460 = vld [vmem:[%s1 + $0xa6c] sm:$0xff]
    %v461 = vld [vmem:[%s1 + $0xa74] sm:$0xff]
    %v462 = vld [vmem:[%s1 + $0xa7c] sm:$0xf]
    %v463 = vld [vmem:[%s1 + $0xa80] sm:$0xff]
    %v464 = vld [vmem:[%s1 + $0xa88] sm:$0xff]
    %v465 = vld [vmem:[%s1 + $0xa90] sm:$0xff]
    %v466 = vld [vmem:[%s1 + $0xa98] sm:$0xf]
    %v467 = vld [vmem:[%s1 + $0xa9c] sm:$0xff]
    %v468 = vld [vmem:[%s1 + $0xaa4] sm:$0xff]
    %v469 = vld [vmem:[%s1 + $0xaac] sm:$0xff]
    %v470 = vld [vmem:[%s1 + $0xab4] sm:$0xf]
    %v471 = vld [vmem:[%s1 + $0xab8] sm:$0xff]
    %v472 = vld [vmem:[%s1 + $0xac0] sm:$0xff]
    %v473 = vld [vmem:[%s1 + $0xac8] sm:$0xff]
    %v474 = vld [vmem:[%s1 + $0xad0] sm:$0xf]
    %v475 = vld [vmem:[%s1 + $0xad4] sm:$0xff]
    %v476 = vld [vmem:[%s1 + $0xadc] sm:$0xff]
    %v477 = vld [vmem:[%s1 + $0xae4] sm:$0xff]
    %v478 = vld [vmem:[%s1 + $0xaec] sm:$0xf]
    %v479 = vld [vmem:[%s2] sm:$0x7f]
    %v481 = vlaneseq
    %v482 = vshrl.u32 %v481, 7
    %v483 = vsub.s32 0, %v482
    %v484 = vrot.slane %v479, %v483
    %v485 = vlaneseq
    %v486 = vshrl.u32 %v485, 7
    %v487 = vsub.s32 1, %v486
    %v488 = vrot.slane %v479, %v487
    %v489 = vlaneseq
    %v490 = vshrl.u32 %v489, 7
    %v491 = vsub.s32 2, %v490
    %v492 = vrot.slane %v479, %v491
    %v493 = vlaneseq
    %v494 = vshrl.u32 %v493, 7
    %v495 = vsub.s32 3, %v494
    %v496 = vrot.slane %v479, %v495
    %v497 = vlaneseq
    %v498 = vshrl.u32 %v497, 7
    %v499 = vsub.s32 4, %v498
    %v500 = vrot.slane %v479, %v499
    %v501 = vlaneseq
    %v502 = vshrl.u32 %v501, 7
    %v503 = vsub.s32 5, %v502
    %v504 = vrot.slane %v479, %v503
    %v505 = vlaneseq
    %v506 = vshrl.u32 %v505, 7
    %v507 = vsub.s32 6, %v506
    %v508 = vrot.slane %v479, %v507
    %v916 = vunpack.c.l.b16 %v79
    %v917 = vunpack.c.h.b16 %v79
    %v918 = vunpack.c.l.b16 %v80
    %v919 = vunpack.c.h.b16 %v80
    %v920 = vunpack.c.l.b16 %v81
    %v921 = vunpack.c.h.b16 %v81
    %v922 = vunpack.c.l.b16 %v82
    %v923 = vunpack.c.l.b16 %v83
    %v924 = vunpack.c.h.b16 %v83
    %v925 = vunpack.c.l.b16 %v84
    %v926 = vunpack.c.h.b16 %v84
    %v927 = vunpack.c.l.b16 %v85
    %v928 = vunpack.c.h.b16 %v85
    %v929 = vunpack.c.l.b16 %v86
    %v930 = vunpack.c.l.b16 %v87
    %v931 = vunpack.c.h.b16 %v87
    %v932 = vunpack.c.l.b16 %v88
    %v933 = vunpack.c.h.b16 %v88
    %v934 = vunpack.c.l.b16 %v89
    %v935 = vunpack.c.h.b16 %v89
    %v936 = vunpack.c.l.b16 %v90
    %v937 = vunpack.c.l.b16 %v91
    %v938 = vunpack.c.h.b16 %v91
    %v939 = vunpack.c.l.b16 %v92
    %v940 = vunpack.c.h.b16 %v92
    %v941 = vunpack.c.l.b16 %v93
    %v942 = vunpack.c.h.b16 %v93
    %v943 = vunpack.c.l.b16 %v94
    %v944 = vunpack.c.l.b16 %v95
    %v945 = vunpack.c.h.b16 %v95
    %v946 = vunpack.c.l.b16 %v96
    %v947 = vunpack.c.h.b16 %v96
    %v948 = vunpack.c.l.b16 %v97
    %v949 = vunpack.c.h.b16 %v97
    %v950 = vunpack.c.l.b16 %v98
    %v951 = vunpack.c.l.b16 %v99
    %v952 = vunpack.c.h.b16 %v99
    %v953 = vunpack.c.l.b16 %v100
    %v954 = vunpack.c.h.b16 %v100
    %v955 = vunpack.c.l.b16 %v101
    %v956 = vunpack.c.h.b16 %v101
    %v957 = vunpack.c.l.b16 %v102
    %v958 = vunpack.c.l.b16 %v103
    %v959 = vunpack.c.h.b16 %v103
    %v960 = vunpack.c.l.b16 %v104
    %v961 = vunpack.c.h.b16 %v104
    %v962 = vunpack.c.l.b16 %v105
    %v963 = vunpack.c.h.b16 %v105
    %v964 = vunpack.c.l.b16 %v106
    %v965 = vunpack.c.l.b16 %v107
    %v966 = vunpack.c.h.b16 %v107
    %v967 = vunpack.c.l.b16 %v108
    %v968 = vunpack.c.h.b16 %v108
    %v969 = vunpack.c.l.b16 %v109
    %v970 = vunpack.c.h.b16 %v109
    %v971 = vunpack.c.l.b16 %v110
    %v972 = vunpack.c.l.b16 %v111
    %v973 = vunpack.c.h.b16 %v111
    %v974 = vunpack.c.l.b16 %v112
    %v975 = vunpack.c.h.b16 %v112
    %v976 = vunpack.c.l.b16 %v113
    %v977 = vunpack.c.h.b16 %v113
    %v978 = vunpack.c.l.b16 %v114
    %v979 = vunpack.c.l.b16 %v115
    %v980 = vunpack.c.h.b16 %v115
    %v981 = vunpack.c.l.b16 %v116
    %v982 = vunpack.c.h.b16 %v116
    %v983 = vunpack.c.l.b16 %v117
    %v984 = vunpack.c.h.b16 %v117
    %v985 = vunpack.c.l.b16 %v118
    %v986 = vunpack.c.l.b16 %v119
    %v987 = vunpack.c.h.b16 %v119
    %v988 = vunpack.c.l.b16 %v120
    %v989 = vunpack.c.h.b16 %v120
    %v990 = vunpack.c.l.b16 %v121
    %v991 = vunpack.c.h.b16 %v121
    %v992 = vunpack.c.l.b16 %v122
    %v993 = vunpack.c.l.b16 %v123
    %v994 = vunpack.c.h.b16 %v123
    %v995 = vunpack.c.l.b16 %v124
    %v996 = vunpack.c.h.b16 %v124
    %v997 = vunpack.c.l.b16 %v125
    %v998 = vunpack.c.h.b16 %v125
    %v999 = vunpack.c.l.b16 %v126
    %v1000 = vunpack.c.l.b16 %v127
    %v1001 = vunpack.c.h.b16 %v127
    %v1002 = vunpack.c.l.b16 %v128
    %v1003 = vunpack.c.h.b16 %v128
    %v1004 = vunpack.c.l.b16 %v129
    %v1005 = vunpack.c.h.b16 %v129
    %v1006 = vunpack.c.l.b16 %v130
    %v1007 = vunpack.c.l.b16 %v131
    %v1008 = vunpack.c.h.b16 %v131
    %v1009 = vunpack.c.l.b16 %v132
    %v1010 = vunpack.c.h.b16 %v132
    %v1011 = vunpack.c.l.b16 %v133
    %v1012 = vunpack.c.h.b16 %v133
    %v1013 = vunpack.c.l.b16 %v134
    %v1014 = vunpack.c.l.b16 %v135
    %v1015 = vunpack.c.h.b16 %v135
    %v1016 = vunpack.c.l.b16 %v136
    %v1017 = vunpack.c.h.b16 %v136
    %v1018 = vunpack.c.l.b16 %v137
    %v1019 = vunpack.c.h.b16 %v137
    %v1020 = vunpack.c.l.b16 %v138
    %v1021 = vunpack.c.l.b16 %v139
    %v1022 = vunpack.c.h.b16 %v139
    %v1023 = vunpack.c.l.b16 %v140
    %v1024 = vunpack.c.h.b16 %v140
    %v1025 = vunpack.c.l.b16 %v141
    %v1026 = vunpack.c.h.b16 %v141
    %v1027 = vunpack.c.l.b16 %v142
    %v1028 = vunpack.c.l.b16 %v143
    %v1029 = vunpack.c.h.b16 %v143
    %v1030 = vunpack.c.l.b16 %v144
    %v1031 = vunpack.c.h.b16 %v144
    %v1032 = vunpack.c.l.b16 %v145
    %v1033 = vunpack.c.h.b16 %v145
    %v1034 = vunpack.c.l.b16 %v146
    %v1035 = vunpack.c.l.b16 %v147
    %v1036 = vunpack.c.h.b16 %v147
    %v1037 = vunpack.c.l.b16 %v148
    %v1038 = vunpack.c.h.b16 %v148
    %v1039 = vunpack.c.l.b16 %v149
    %v1040 = vunpack.c.h.b16 %v149
    %v1041 = vunpack.c.l.b16 %v150
    %v1042 = vunpack.c.l.b16 %v151
    %v1043 = vunpack.c.h.b16 %v151
    %v1044 = vunpack.c.l.b16 %v152
    %v1045 = vunpack.c.h.b16 %v152
    %v1046 = vunpack.c.l.b16 %v153
    %v1047 = vunpack.c.h.b16 %v153
    %v1048 = vunpack.c.l.b16 %v154
    %v1049 = vunpack.c.l.b16 %v155
    %v1050 = vunpack.c.h.b16 %v155
    %v1051 = vunpack.c.l.b16 %v156
    %v1052 = vunpack.c.h.b16 %v156
    %v1053 = vunpack.c.l.b16 %v157
    %v1054 = vunpack.c.h.b16 %v157
    %v1055 = vunpack.c.l.b16 %v158
    %v1056 = vunpack.c.l.b16 %v159
    %v1057 = vunpack.c.h.b16 %v159
    %v1058 = vunpack.c.l.b16 %v160
    %v1059 = vunpack.c.h.b16 %v160
    %v1060 = vunpack.c.l.b16 %v161
    %v1061 = vunpack.c.h.b16 %v161
    %v1062 = vunpack.c.l.b16 %v162
    %v1063 = vunpack.c.l.b16 %v163
    %v1064 = vunpack.c.h.b16 %v163
    %v1065 = vunpack.c.l.b16 %v164
    %v1066 = vunpack.c.h.b16 %v164
    %v1067 = vunpack.c.l.b16 %v165
    %v1068 = vunpack.c.h.b16 %v165
    %v1069 = vunpack.c.l.b16 %v166
    %v1070 = vunpack.c.l.b16 %v167
    %v1071 = vunpack.c.h.b16 %v167
    %v1072 = vunpack.c.l.b16 %v168
    %v1073 = vunpack.c.h.b16 %v168
    %v1074 = vunpack.c.l.b16 %v169
    %v1075 = vunpack.c.h.b16 %v169
    %v1076 = vunpack.c.l.b16 %v170
    %v1077 = vunpack.c.l.b16 %v171
    %v1078 = vunpack.c.h.b16 %v171
    %v1079 = vunpack.c.l.b16 %v172
    %v1080 = vunpack.c.h.b16 %v172
    %v1081 = vunpack.c.l.b16 %v173
    %v1082 = vunpack.c.h.b16 %v173
    %v1083 = vunpack.c.l.b16 %v174
    %v1084 = vunpack.c.l.b16 %v175
    %v1085 = vunpack.c.h.b16 %v175
    %v1086 = vunpack.c.l.b16 %v176
    %v1087 = vunpack.c.h.b16 %v176
    %v1088 = vunpack.c.l.b16 %v177
    %v1089 = vunpack.c.h.b16 %v177
    %v1090 = vunpack.c.l.b16 %v178
    %v1091 = vunpack.c.l.b16 %v179
    %v1092 = vunpack.c.h.b16 %v179
    %v1093 = vunpack.c.l.b16 %v180
    %v1094 = vunpack.c.h.b16 %v180
    %v1095 = vunpack.c.l.b16 %v181
    %v1096 = vunpack.c.h.b16 %v181
    %v1097 = vunpack.c.l.b16 %v182
    %v1098 = vunpack.c.l.b16 %v183
    %v1099 = vunpack.c.h.b16 %v183
    %v1100 = vunpack.c.l.b16 %v184
    %v1101 = vunpack.c.h.b16 %v184
    %v1102 = vunpack.c.l.b16 %v185
    %v1103 = vunpack.c.h.b16 %v185
    %v1104 = vunpack.c.l.b16 %v186
    %v1105 = vunpack.c.l.b16 %v187
    %v1106 = vunpack.c.h.b16 %v187
    %v1107 = vunpack.c.l.b16 %v188
    %v1108 = vunpack.c.h.b16 %v188
    %v1109 = vunpack.c.l.b16 %v189
    %v1110 = vunpack.c.h.b16 %v189
    %v1111 = vunpack.c.l.b16 %v190
    %v1112 = vunpack.c.l.b16 %v191
    %v1113 = vunpack.c.h.b16 %v191
    %v1114 = vunpack.c.l.b16 %v192
    %v1115 = vunpack.c.h.b16 %v192
    %v1116 = vunpack.c.l.b16 %v193
    %v1117 = vunpack.c.h.b16 %v193
    %v1118 = vunpack.c.l.b16 %v194
    %v1119 = vunpack.c.l.b16 %v195
    %v1120 = vunpack.c.h.b16 %v195
    %v1121 = vunpack.c.l.b16 %v196
    %v1122 = vunpack.c.h.b16 %v196
    %v1123 = vunpack.c.l.b16 %v197
    %v1124 = vunpack.c.h.b16 %v197
    %v1125 = vunpack.c.l.b16 %v198
    %v1126 = vunpack.c.l.b16 %v199
    %v1127 = vunpack.c.h.b16 %v199
    %v1128 = vunpack.c.l.b16 %v200
    %v1129 = vunpack.c.h.b16 %v200
    %v1130 = vunpack.c.l.b16 %v201
    %v1131 = vunpack.c.h.b16 %v201
    %v1132 = vunpack.c.l.b16 %v202
    %v1133 = vunpack.c.l.b16 %v203
    %v1134 = vunpack.c.h.b16 %v203
    %v1135 = vunpack.c.l.b16 %v204
    %v1136 = vunpack.c.h.b16 %v204
    %v1137 = vunpack.c.l.b16 %v205
    %v1138 = vunpack.c.h.b16 %v205
    %v1139 = vunpack.c.l.b16 %v206
    %v1140 = vunpack.c.l.b16 %v207
    %v1141 = vunpack.c.h.b16 %v207
    %v1142 = vunpack.c.l.b16 %v208
    %v1143 = vunpack.c.h.b16 %v208
    %v1144 = vunpack.c.l.b16 %v209
    %v1145 = vunpack.c.h.b16 %v209
    %v1146 = vunpack.c.l.b16 %v210
    %v1147 = vunpack.c.l.b16 %v211
    %v1148 = vunpack.c.h.b16 %v211
    %v1149 = vunpack.c.l.b16 %v212
    %v1150 = vunpack.c.h.b16 %v212
    %v1151 = vunpack.c.l.b16 %v213
    %v1152 = vunpack.c.h.b16 %v213
    %v1153 = vunpack.c.l.b16 %v214
    %v1154 = vunpack.c.l.b16 %v215
    %v1155 = vunpack.c.h.b16 %v215
    %v1156 = vunpack.c.l.b16 %v216
    %v1157 = vunpack.c.h.b16 %v216
    %v1158 = vunpack.c.l.b16 %v217
    %v1159 = vunpack.c.h.b16 %v217
    %v1160 = vunpack.c.l.b16 %v218
    %v1161 = vunpack.c.l.b16 %v219
    %v1162 = vunpack.c.h.b16 %v219
    %v1163 = vunpack.c.l.b16 %v220
    %v1164 = vunpack.c.h.b16 %v220
    %v1165 = vunpack.c.l.b16 %v221
    %v1166 = vunpack.c.h.b16 %v221
    %v1167 = vunpack.c.l.b16 %v222
    %v1168 = vunpack.c.l.b16 %v223
    %v1169 = vunpack.c.h.b16 %v223
    %v1170 = vunpack.c.l.b16 %v224
    %v1171 = vunpack.c.h.b16 %v224
    %v1172 = vunpack.c.l.b16 %v225
    %v1173 = vunpack.c.h.b16 %v225
    %v1174 = vunpack.c.l.b16 %v226
    %v1175 = vunpack.c.l.b16 %v227
    %v1176 = vunpack.c.h.b16 %v227
    %v1177 = vunpack.c.l.b16 %v228
    %v1178 = vunpack.c.h.b16 %v228
    %v1179 = vunpack.c.l.b16 %v229
    %v1180 = vunpack.c.h.b16 %v229
    %v1181 = vunpack.c.l.b16 %v230
    %v1182 = vunpack.c.l.b16 %v231
    %v1183 = vunpack.c.h.b16 %v231
    %v1184 = vunpack.c.l.b16 %v232
    %v1185 = vunpack.c.h.b16 %v232
    %v1186 = vunpack.c.l.b16 %v233
    %v1187 = vunpack.c.h.b16 %v233
    %v1188 = vunpack.c.l.b16 %v234
    %v1189 = vunpack.c.l.b16 %v235
    %v1190 = vunpack.c.h.b16 %v235
    %v1191 = vunpack.c.l.b16 %v236
    %v1192 = vunpack.c.h.b16 %v236
    %v1193 = vunpack.c.l.b16 %v237
    %v1194 = vunpack.c.h.b16 %v237
    %v1195 = vunpack.c.l.b16 %v238
    %v1196 = vunpack.c.l.b16 %v239
    %v1197 = vunpack.c.h.b16 %v239
    %v1198 = vunpack.c.l.b16 %v240
    %v1199 = vunpack.c.h.b16 %v240
    %v1200 = vunpack.c.l.b16 %v241
    %v1201 = vunpack.c.h.b16 %v241
    %v1202 = vunpack.c.l.b16 %v242
    %v1203 = vunpack.c.l.b16 %v243
    %v1204 = vunpack.c.h.b16 %v243
    %v1205 = vunpack.c.l.b16 %v244
    %v1206 = vunpack.c.h.b16 %v244
    %v1207 = vunpack.c.l.b16 %v245
    %v1208 = vunpack.c.h.b16 %v245
    %v1209 = vunpack.c.l.b16 %v246
    %v1210 = vunpack.c.l.b16 %v247
    %v1211 = vunpack.c.h.b16 %v247
    %v1212 = vunpack.c.l.b16 %v248
    %v1213 = vunpack.c.h.b16 %v248
    %v1214 = vunpack.c.l.b16 %v249
    %v1215 = vunpack.c.h.b16 %v249
    %v1216 = vunpack.c.l.b16 %v250
    %v1217 = vunpack.c.l.b16 %v251
    %v1218 = vunpack.c.h.b16 %v251
    %v1219 = vunpack.c.l.b16 %v252
    %v1220 = vunpack.c.h.b16 %v252
    %v1221 = vunpack.c.l.b16 %v253
    %v1222 = vunpack.c.h.b16 %v253
    %v1223 = vunpack.c.l.b16 %v254
    %v1224 = vunpack.c.l.b16 %v255
    %v1225 = vunpack.c.h.b16 %v255
    %v1226 = vunpack.c.l.b16 %v256
    %v1227 = vunpack.c.h.b16 %v256
    %v1228 = vunpack.c.l.b16 %v257
    %v1229 = vunpack.c.h.b16 %v257
    %v1230 = vunpack.c.l.b16 %v258
    %v1231 = vunpack.c.l.b16 %v259
    %v1232 = vunpack.c.h.b16 %v259
    %v1233 = vunpack.c.l.b16 %v260
    %v1234 = vunpack.c.h.b16 %v260
    %v1235 = vunpack.c.l.b16 %v261
    %v1236 = vunpack.c.h.b16 %v261
    %v1237 = vunpack.c.l.b16 %v262
    %v1238 = vunpack.c.l.b16 %v263
    %v1239 = vunpack.c.h.b16 %v263
    %v1240 = vunpack.c.l.b16 %v264
    %v1241 = vunpack.c.h.b16 %v264
    %v1242 = vunpack.c.l.b16 %v265
    %v1243 = vunpack.c.h.b16 %v265
    %v1244 = vunpack.c.l.b16 %v266
    %v1245 = vunpack.c.l.b16 %v267
    %v1246 = vunpack.c.h.b16 %v267
    %v1247 = vunpack.c.l.b16 %v268
    %v1248 = vunpack.c.h.b16 %v268
    %v1249 = vunpack.c.l.b16 %v269
    %v1250 = vunpack.c.h.b16 %v269
    %v1251 = vunpack.c.l.b16 %v270
    %v1252 = vunpack.c.l.b16 %v271
    %v1253 = vunpack.c.h.b16 %v271
    %v1254 = vunpack.c.l.b16 %v272
    %v1255 = vunpack.c.h.b16 %v272
    %v1256 = vunpack.c.l.b16 %v273
    %v1257 = vunpack.c.h.b16 %v273
    %v1258 = vunpack.c.l.b16 %v274
    %v1259 = vunpack.c.l.b16 %v275
    %v1260 = vunpack.c.h.b16 %v275
    %v1261 = vunpack.c.l.b16 %v276
    %v1262 = vunpack.c.h.b16 %v276
    %v1263 = vunpack.c.l.b16 %v277
    %v1264 = vunpack.c.h.b16 %v277
    %v1265 = vunpack.c.l.b16 %v278
    %v1266 = vunpack.c.l.b16 %v279
    %v1267 = vunpack.c.h.b16 %v279
    %v1268 = vunpack.c.l.b16 %v280
    %v1269 = vunpack.c.h.b16 %v280
    %v1270 = vunpack.c.l.b16 %v281
    %v1271 = vunpack.c.h.b16 %v281
    %v1272 = vunpack.c.l.b16 %v282
    %v1273 = vunpack.c.l.b16 %v283
    %v1274 = vunpack.c.h.b16 %v283
    %v1275 = vunpack.c.l.b16 %v284
    %v1276 = vunpack.c.h.b16 %v284
    %v1277 = vunpack.c.l.b16 %v285
    %v1278 = vunpack.c.h.b16 %v285
    %v1279 = vunpack.c.l.b16 %v286
    %v1280 = vunpack.c.l.b16 %v287
    %v1281 = vunpack.c.h.b16 %v287
    %v1282 = vunpack.c.l.b16 %v288
    %v1283 = vunpack.c.h.b16 %v288
    %v1284 = vunpack.c.l.b16 %v289
    %v1285 = vunpack.c.h.b16 %v289
    %v1286 = vunpack.c.l.b16 %v290
    %v1287 = vunpack.c.l.b16 %v291
    %v1288 = vunpack.c.h.b16 %v291
    %v1289 = vunpack.c.l.b16 %v292
    %v1290 = vunpack.c.h.b16 %v292
    %v1291 = vunpack.c.l.b16 %v293
    %v1292 = vunpack.c.h.b16 %v293
    %v1293 = vunpack.c.l.b16 %v294
    %v1294 = vunpack.c.l.b16 %v295
    %v1295 = vunpack.c.h.b16 %v295
    %v1296 = vunpack.c.l.b16 %v296
    %v1297 = vunpack.c.h.b16 %v296
    %v1298 = vunpack.c.l.b16 %v297
    %v1299 = vunpack.c.h.b16 %v297
    %v1300 = vunpack.c.l.b16 %v298
    %v1301 = vunpack.c.l.b16 %v299
    %v1302 = vunpack.c.h.b16 %v299
    %v1303 = vunpack.c.l.b16 %v300
    %v1304 = vunpack.c.h.b16 %v300
    %v1305 = vunpack.c.l.b16 %v301
    %v1306 = vunpack.c.h.b16 %v301
    %v1307 = vunpack.c.l.b16 %v302
    %v1308 = vunpack.c.l.b16 %v303
    %v1309 = vunpack.c.h.b16 %v303
    %v1310 = vunpack.c.l.b16 %v304
    %v1311 = vunpack.c.h.b16 %v304
    %v1312 = vunpack.c.l.b16 %v305
    %v1313 = vunpack.c.h.b16 %v305
    %v1314 = vunpack.c.l.b16 %v306
    %v1315 = vunpack.c.l.b16 %v307
    %v1316 = vunpack.c.h.b16 %v307
    %v1317 = vunpack.c.l.b16 %v308
    %v1318 = vunpack.c.h.b16 %v308
    %v1319 = vunpack.c.l.b16 %v309
    %v1320 = vunpack.c.h.b16 %v309
    %v1321 = vunpack.c.l.b16 %v310
    %v1322 = vunpack.c.l.b16 %v311
    %v1323 = vunpack.c.h.b16 %v311
    %v1324 = vunpack.c.l.b16 %v312
    %v1325 = vunpack.c.h.b16 %v312
    %v1326 = vunpack.c.l.b16 %v313
    %v1327 = vunpack.c.h.b16 %v313
    %v1328 = vunpack.c.l.b16 %v314
    %v1329 = vunpack.c.l.b16 %v315
    %v1330 = vunpack.c.h.b16 %v315
    %v1331 = vunpack.c.l.b16 %v316
    %v1332 = vunpack.c.h.b16 %v316
    %v1333 = vunpack.c.l.b16 %v317
    %v1334 = vunpack.c.h.b16 %v317
    %v1335 = vunpack.c.l.b16 %v318
    %v1336 = vunpack.c.l.b16 %v319
    %v1337 = vunpack.c.h.b16 %v319
    %v1338 = vunpack.c.l.b16 %v320
    %v1339 = vunpack.c.h.b16 %v320
    %v1340 = vunpack.c.l.b16 %v321
    %v1341 = vunpack.c.h.b16 %v321
    %v1342 = vunpack.c.l.b16 %v322
    %v1343 = vunpack.c.l.b16 %v323
    %v1344 = vunpack.c.h.b16 %v323
    %v1345 = vunpack.c.l.b16 %v324
    %v1346 = vunpack.c.h.b16 %v324
    %v1347 = vunpack.c.l.b16 %v325
    %v1348 = vunpack.c.h.b16 %v325
    %v1349 = vunpack.c.l.b16 %v326
    %v1350 = vunpack.c.l.b16 %v327
    %v1351 = vunpack.c.h.b16 %v327
    %v1352 = vunpack.c.l.b16 %v328
    %v1353 = vunpack.c.h.b16 %v328
    %v1354 = vunpack.c.l.b16 %v329
    %v1355 = vunpack.c.h.b16 %v329
    %v1356 = vunpack.c.l.b16 %v330
    %v1357 = vunpack.c.l.b16 %v331
    %v1358 = vunpack.c.h.b16 %v331
    %v1359 = vunpack.c.l.b16 %v332
    %v1360 = vunpack.c.h.b16 %v332
    %v1361 = vunpack.c.l.b16 %v333
    %v1362 = vunpack.c.h.b16 %v333
    %v1363 = vunpack.c.l.b16 %v334
    %v1364 = vunpack.c.l.b16 %v335
    %v1365 = vunpack.c.h.b16 %v335
    %v1366 = vunpack.c.l.b16 %v336
    %v1367 = vunpack.c.h.b16 %v336
    %v1368 = vunpack.c.l.b16 %v337
    %v1369 = vunpack.c.h.b16 %v337
    %v1370 = vunpack.c.l.b16 %v338
    %v1371 = vunpack.c.l.b16 %v339
    %v1372 = vunpack.c.h.b16 %v339
    %v1373 = vunpack.c.l.b16 %v340
    %v1374 = vunpack.c.h.b16 %v340
    %v1375 = vunpack.c.l.b16 %v341
    %v1376 = vunpack.c.h.b16 %v341
    %v1377 = vunpack.c.l.b16 %v342
    %v1378 = vunpack.c.l.b16 %v343
    %v1379 = vunpack.c.h.b16 %v343
    %v1380 = vunpack.c.l.b16 %v344
    %v1381 = vunpack.c.h.b16 %v344
    %v1382 = vunpack.c.l.b16 %v345
    %v1383 = vunpack.c.h.b16 %v345
    %v1384 = vunpack.c.l.b16 %v346
    %v1385 = vunpack.c.l.b16 %v347
    %v1386 = vunpack.c.h.b16 %v347
    %v1387 = vunpack.c.l.b16 %v348
    %v1388 = vunpack.c.h.b16 %v348
    %v1389 = vunpack.c.l.b16 %v349
    %v1390 = vunpack.c.h.b16 %v349
    %v1391 = vunpack.c.l.b16 %v350
    %v1392 = vunpack.c.l.b16 %v351
    %v1393 = vunpack.c.h.b16 %v351
    %v1394 = vunpack.c.l.b16 %v352
    %v1395 = vunpack.c.h.b16 %v352
    %v1396 = vunpack.c.l.b16 %v353
    %v1397 = vunpack.c.h.b16 %v353
    %v1398 = vunpack.c.l.b16 %v354
    %v1399 = vunpack.c.l.b16 %v355
    %v1400 = vunpack.c.h.b16 %v355
    %v1401 = vunpack.c.l.b16 %v356
    %v1402 = vunpack.c.h.b16 %v356
    %v1403 = vunpack.c.l.b16 %v357
    %v1404 = vunpack.c.h.b16 %v357
    %v1405 = vunpack.c.l.b16 %v358
    %v1406 = vunpack.c.l.b16 %v359
    %v1407 = vunpack.c.h.b16 %v359
    %v1408 = vunpack.c.l.b16 %v360
    %v1409 = vunpack.c.h.b16 %v360
    %v1410 = vunpack.c.l.b16 %v361
    %v1411 = vunpack.c.h.b16 %v361
    %v1412 = vunpack.c.l.b16 %v362
    %v1413 = vunpack.c.l.b16 %v363
    %v1414 = vunpack.c.h.b16 %v363
    %v1415 = vunpack.c.l.b16 %v364
    %v1416 = vunpack.c.h.b16 %v364
    %v1417 = vunpack.c.l.b16 %v365
    %v1418 = vunpack.c.h.b16 %v365
    %v1419 = vunpack.c.l.b16 %v366
    %v1420 = vunpack.c.l.b16 %v367
    %v1421 = vunpack.c.h.b16 %v367
    %v1422 = vunpack.c.l.b16 %v368
    %v1423 = vunpack.c.h.b16 %v368
    %v1424 = vunpack.c.l.b16 %v369
    %v1425 = vunpack.c.h.b16 %v369
    %v1426 = vunpack.c.l.b16 %v370
    %v1427 = vunpack.c.l.b16 %v371
    %v1428 = vunpack.c.h.b16 %v371
    %v1429 = vunpack.c.l.b16 %v372
    %v1430 = vunpack.c.h.b16 %v372
    %v1431 = vunpack.c.l.b16 %v373
    %v1432 = vunpack.c.h.b16 %v373
    %v1433 = vunpack.c.l.b16 %v374
    %v1434 = vunpack.c.l.b16 %v375
    %v1435 = vunpack.c.h.b16 %v375
    %v1436 = vunpack.c.l.b16 %v376
    %v1437 = vunpack.c.h.b16 %v376
    %v1438 = vunpack.c.l.b16 %v377
    %v1439 = vunpack.c.h.b16 %v377
    %v1440 = vunpack.c.l.b16 %v378
    %v1441 = vunpack.c.l.b16 %v379
    %v1442 = vunpack.c.h.b16 %v379
    %v1443 = vunpack.c.l.b16 %v380
    %v1444 = vunpack.c.h.b16 %v380
    %v1445 = vunpack.c.l.b16 %v381
    %v1446 = vunpack.c.h.b16 %v381
    %v1447 = vunpack.c.l.b16 %v382
    %v1448 = vunpack.c.l.b16 %v383
    %v1449 = vunpack.c.h.b16 %v383
    %v1450 = vunpack.c.l.b16 %v384
    %v1451 = vunpack.c.h.b16 %v384
    %v1452 = vunpack.c.l.b16 %v385
    %v1453 = vunpack.c.h.b16 %v385
    %v1454 = vunpack.c.l.b16 %v386
    %v1455 = vunpack.c.l.b16 %v387
    %v1456 = vunpack.c.h.b16 %v387
    %v1457 = vunpack.c.l.b16 %v388
    %v1458 = vunpack.c.h.b16 %v388
    %v1459 = vunpack.c.l.b16 %v389
    %v1460 = vunpack.c.h.b16 %v389
    %v1461 = vunpack.c.l.b16 %v390
    %v1462 = vunpack.c.l.b16 %v391
    %v1463 = vunpack.c.h.b16 %v391
    %v1464 = vunpack.c.l.b16 %v392
    %v1465 = vunpack.c.h.b16 %v392
    %v1466 = vunpack.c.l.b16 %v393
    %v1467 = vunpack.c.h.b16 %v393
    %v1468 = vunpack.c.l.b16 %v394
    %v1469 = vunpack.c.l.b16 %v395
    %v1470 = vunpack.c.h.b16 %v395
    %v1471 = vunpack.c.l.b16 %v396
    %v1472 = vunpack.c.h.b16 %v396
    %v1473 = vunpack.c.l.b16 %v397
    %v1474 = vunpack.c.h.b16 %v397
    %v1475 = vunpack.c.l.b16 %v398
    %v1476 = vunpack.c.l.b16 %v399
    %v1477 = vunpack.c.h.b16 %v399
    %v1478 = vunpack.c.l.b16 %v400
    %v1479 = vunpack.c.h.b16 %v400
    %v1480 = vunpack.c.l.b16 %v401
    %v1481 = vunpack.c.h.b16 %v401
    %v1482 = vunpack.c.l.b16 %v402
    %v1483 = vunpack.c.l.b16 %v403
    %v1484 = vunpack.c.h.b16 %v403
    %v1485 = vunpack.c.l.b16 %v404
    %v1486 = vunpack.c.h.b16 %v404
    %v1487 = vunpack.c.l.b16 %v405
    %v1488 = vunpack.c.h.b16 %v405
    %v1489 = vunpack.c.l.b16 %v406
    %v1490 = vunpack.c.l.b16 %v407
    %v1491 = vunpack.c.h.b16 %v407
    %v1492 = vunpack.c.l.b16 %v408
    %v1493 = vunpack.c.h.b16 %v408
    %v1494 = vunpack.c.l.b16 %v409
    %v1495 = vunpack.c.h.b16 %v409
    %v1496 = vunpack.c.l.b16 %v410
    %v1497 = vunpack.c.l.b16 %v411
    %v1498 = vunpack.c.h.b16 %v411
    %v1499 = vunpack.c.l.b16 %v412
    %v1500 = vunpack.c.h.b16 %v412
    %v1501 = vunpack.c.l.b16 %v413
    %v1502 = vunpack.c.h.b16 %v413
    %v1503 = vunpack.c.l.b16 %v414
    %v1504 = vunpack.c.l.b16 %v415
    %v1505 = vunpack.c.h.b16 %v415
    %v1506 = vunpack.c.l.b16 %v416
    %v1507 = vunpack.c.h.b16 %v416
    %v1508 = vunpack.c.l.b16 %v417
    %v1509 = vunpack.c.h.b16 %v417
    %v1510 = vunpack.c.l.b16 %v418
    %v1511 = vunpack.c.l.b16 %v419
    %v1512 = vunpack.c.h.b16 %v419
    %v1513 = vunpack.c.l.b16 %v420
    %v1514 = vunpack.c.h.b16 %v420
    %v1515 = vunpack.c.l.b16 %v421
    %v1516 = vunpack.c.h.b16 %v421
    %v1517 = vunpack.c.l.b16 %v422
    %v1518 = vunpack.c.l.b16 %v423
    %v1519 = vunpack.c.h.b16 %v423
    %v1520 = vunpack.c.l.b16 %v424
    %v1521 = vunpack.c.h.b16 %v424
    %v1522 = vunpack.c.l.b16 %v425
    %v1523 = vunpack.c.h.b16 %v425
    %v1524 = vunpack.c.l.b16 %v426
    %v1525 = vunpack.c.l.b16 %v427
    %v1526 = vunpack.c.h.b16 %v427
    %v1527 = vunpack.c.l.b16 %v428
    %v1528 = vunpack.c.h.b16 %v428
    %v1529 = vunpack.c.l.b16 %v429
    %v1530 = vunpack.c.h.b16 %v429
    %v1531 = vunpack.c.l.b16 %v430
    %v1532 = vunpack.c.l.b16 %v431
    %v1533 = vunpack.c.h.b16 %v431
    %v1534 = vunpack.c.l.b16 %v432
    %v1535 = vunpack.c.h.b16 %v432
    %v1536 = vunpack.c.l.b16 %v433
    %v1537 = vunpack.c.h.b16 %v433
    %v1538 = vunpack.c.l.b16 %v434
    %v1539 = vunpack.c.l.b16 %v435
    %v1540 = vunpack.c.h.b16 %v435
    %v1541 = vunpack.c.l.b16 %v436
    %v1542 = vunpack.c.h.b16 %v436
    %v1543 = vunpack.c.l.b16 %v437
    %v1544 = vunpack.c.h.b16 %v437
    %v1545 = vunpack.c.l.b16 %v438
    %v1546 = vunpack.c.l.b16 %v439
    %v1547 = vunpack.c.h.b16 %v439
    %v1548 = vunpack.c.l.b16 %v440
    %v1549 = vunpack.c.h.b16 %v440
    %v1550 = vunpack.c.l.b16 %v441
    %v1551 = vunpack.c.h.b16 %v441
    %v1552 = vunpack.c.l.b16 %v442
    %v1553 = vunpack.c.l.b16 %v443
    %v1554 = vunpack.c.h.b16 %v443
    %v1555 = vunpack.c.l.b16 %v444
    %v1556 = vunpack.c.h.b16 %v444
    %v1557 = vunpack.c.l.b16 %v445
    %v1558 = vunpack.c.h.b16 %v445
    %v1559 = vunpack.c.l.b16 %v446
    %v1560 = vunpack.c.l.b16 %v447
    %v1561 = vunpack.c.h.b16 %v447
    %v1562 = vunpack.c.l.b16 %v448
    %v1563 = vunpack.c.h.b16 %v448
    %v1564 = vunpack.c.l.b16 %v449
    %v1565 = vunpack.c.h.b16 %v449
    %v1566 = vunpack.c.l.b16 %v450
    %v1567 = vunpack.c.l.b16 %v451
    %v1568 = vunpack.c.h.b16 %v451
    %v1569 = vunpack.c.l.b16 %v452
    %v1570 = vunpack.c.h.b16 %v452
    %v1571 = vunpack.c.l.b16 %v453
    %v1572 = vunpack.c.h.b16 %v453
    %v1573 = vunpack.c.l.b16 %v454
    %v1574 = vunpack.c.l.b16 %v455
    %v1575 = vunpack.c.h.b16 %v455
    %v1576 = vunpack.c.l.b16 %v456
    %v1577 = vunpack.c.h.b16 %v456
    %v1578 = vunpack.c.l.b16 %v457
    %v1579 = vunpack.c.h.b16 %v457
    %v1580 = vunpack.c.l.b16 %v458
    %v1581 = vunpack.c.l.b16 %v459
    %v1582 = vunpack.c.h.b16 %v459
    %v1583 = vunpack.c.l.b16 %v460
    %v1584 = vunpack.c.h.b16 %v460
    %v1585 = vunpack.c.l.b16 %v461
    %v1586 = vunpack.c.h.b16 %v461
    %v1587 = vunpack.c.l.b16 %v462
    %v1588 = vunpack.c.l.b16 %v463
    %v1589 = vunpack.c.h.b16 %v463
    %v1590 = vunpack.c.l.b16 %v464
    %v1591 = vunpack.c.h.b16 %v464
    %v1592 = vunpack.c.l.b16 %v465
    %v1593 = vunpack.c.h.b16 %v465
    %v1594 = vunpack.c.l.b16 %v466
    %v1595 = vunpack.c.l.b16 %v467
    %v1596 = vunpack.c.h.b16 %v467
    %v1597 = vunpack.c.l.b16 %v468
    %v1598 = vunpack.c.h.b16 %v468
    %v1599 = vunpack.c.l.b16 %v469
    %v1600 = vunpack.c.h.b16 %v469
    %v1601 = vunpack.c.l.b16 %v470
    %v1602 = vunpack.c.l.b16 %v471
    %v1603 = vunpack.c.h.b16 %v471
    %v1604 = vunpack.c.l.b16 %v472
    %v1605 = vunpack.c.h.b16 %v472
    %v1606 = vunpack.c.l.b16 %v473
    %v1607 = vunpack.c.h.b16 %v473
    %v1608 = vunpack.c.l.b16 %v474
    %v1609 = vunpack.c.l.b16 %v475
    %v1610 = vunpack.c.h.b16 %v475
    %v1611 = vunpack.c.l.b16 %v476
    %v1612 = vunpack.c.h.b16 %v476
    %v1613 = vunpack.c.l.b16 %v477
    %v1614 = vunpack.c.h.b16 %v477
    %v1615 = vunpack.c.l.b16 %v478
    %v1616 = vpack.c.b16 %v923, %v916
    %v1617 = vpack.c.b16 %v924, %v917
    %v1618 = vpack.c.b16 %v925, %v918
    %v1619 = vpack.c.b16 %v926, %v919
    %v1620 = vpack.c.b16 %v927, %v920
    %v1621 = vpack.c.b16 %v928, %v921
    %v1622 = vpack.c.b16 %v929, %v922
    %v1623 = vpack.c.b16 %v937, %v930
    %v1624 = vpack.c.b16 %v938, %v931
    %v1625 = vpack.c.b16 %v939, %v932
    %v1626 = vpack.c.b16 %v940, %v933
    %v1627 = vpack.c.b16 %v941, %v934
    %v1628 = vpack.c.b16 %v942, %v935
    %v1629 = vpack.c.b16 %v943, %v936
    %v1630 = vpack.c.b16 %v951, %v944
    %v1631 = vpack.c.b16 %v952, %v945
    %v1632 = vpack.c.b16 %v953, %v946
    %v1633 = vpack.c.b16 %v954, %v947
    %v1634 = vpack.c.b16 %v955, %v948
    %v1635 = vpack.c.b16 %v956, %v949
    %v1636 = vpack.c.b16 %v957, %v950
    %v1637 = vpack.c.b16 %v965, %v958
    %v1638 = vpack.c.b16 %v966, %v959
    %v1639 = vpack.c.b16 %v967, %v960
    %v1640 = vpack.c.b16 %v968, %v961
    %v1641 = vpack.c.b16 %v969, %v962
    %v1642 = vpack.c.b16 %v970, %v963
    %v1643 = vpack.c.b16 %v971, %v964
    %v1644 = vpack.c.b16 %v979, %v972
    %v1645 = vpack.c.b16 %v980, %v973
    %v1646 = vpack.c.b16 %v981, %v974
    %v1647 = vpack.c.b16 %v982, %v975
    %v1648 = vpack.c.b16 %v983, %v976
    %v1649 = vpack.c.b16 %v984, %v977
    %v1650 = vpack.c.b16 %v985, %v978
    %v1651 = vpack.c.b16 %v993, %v986
    %v1652 = vpack.c.b16 %v994, %v987
    %v1653 = vpack.c.b16 %v995, %v988
    %v1654 = vpack.c.b16 %v996, %v989
    %v1655 = vpack.c.b16 %v997, %v990
    %v1656 = vpack.c.b16 %v998, %v991
    %v1657 = vpack.c.b16 %v999, %v992
    %v1658 = vpack.c.b16 %v1007, %v1000
    %v1659 = vpack.c.b16 %v1008, %v1001
    %v1660 = vpack.c.b16 %v1009, %v1002
    %v1661 = vpack.c.b16 %v1010, %v1003
    %v1662 = vpack.c.b16 %v1011, %v1004
    %v1663 = vpack.c.b16 %v1012, %v1005
    %v1664 = vpack.c.b16 %v1013, %v1006
    %v1665 = vpack.c.b16 %v1021, %v1014
    %v1666 = vpack.c.b16 %v1022, %v1015
    %v1667 = vpack.c.b16 %v1023, %v1016
    %v1668 = vpack.c.b16 %v1024, %v1017
    %v1669 = vpack.c.b16 %v1025, %v1018
    %v1670 = vpack.c.b16 %v1026, %v1019
    %v1671 = vpack.c.b16 %v1027, %v1020
    %v1672 = vpack.c.b16 %v1035, %v1028
    %v1673 = vpack.c.b16 %v1036, %v1029
    %v1674 = vpack.c.b16 %v1037, %v1030
    %v1675 = vpack.c.b16 %v1038, %v1031
    %v1676 = vpack.c.b16 %v1039, %v1032
    %v1677 = vpack.c.b16 %v1040, %v1033
    %v1678 = vpack.c.b16 %v1041, %v1034
    %v1679 = vpack.c.b16 %v1049, %v1042
    %v1680 = vpack.c.b16 %v1050, %v1043
    %v1681 = vpack.c.b16 %v1051, %v1044
    %v1682 = vpack.c.b16 %v1052, %v1045
    %v1683 = vpack.c.b16 %v1053, %v1046
    %v1684 = vpack.c.b16 %v1054, %v1047
    %v1685 = vpack.c.b16 %v1055, %v1048
    %v1686 = vpack.c.b16 %v1063, %v1056
    %v1687 = vpack.c.b16 %v1064, %v1057
    %v1688 = vpack.c.b16 %v1065, %v1058
    %v1689 = vpack.c.b16 %v1066, %v1059
    %v1690 = vpack.c.b16 %v1067, %v1060
    %v1691 = vpack.c.b16 %v1068, %v1061
    %v1692 = vpack.c.b16 %v1069, %v1062
    %v1693 = vpack.c.b16 %v1077, %v1070
    %v1694 = vpack.c.b16 %v1078, %v1071
    %v1695 = vpack.c.b16 %v1079, %v1072
    %v1696 = vpack.c.b16 %v1080, %v1073
    %v1697 = vpack.c.b16 %v1081, %v1074
    %v1698 = vpack.c.b16 %v1082, %v1075
    %v1699 = vpack.c.b16 %v1083, %v1076
    %v1700 = vpack.c.b16 %v1091, %v1084
    %v1701 = vpack.c.b16 %v1092, %v1085
    %v1702 = vpack.c.b16 %v1093, %v1086
    %v1703 = vpack.c.b16 %v1094, %v1087
    %v1704 = vpack.c.b16 %v1095, %v1088
    %v1705 = vpack.c.b16 %v1096, %v1089
    %v1706 = vpack.c.b16 %v1097, %v1090
    %v1707 = vpack.c.b16 %v1105, %v1098
    %v1708 = vpack.c.b16 %v1106, %v1099
    %v1709 = vpack.c.b16 %v1107, %v1100
    %v1710 = vpack.c.b16 %v1108, %v1101
    %v1711 = vpack.c.b16 %v1109, %v1102
    %v1712 = vpack.c.b16 %v1110, %v1103
    %v1713 = vpack.c.b16 %v1111, %v1104
    %v1714 = vpack.c.b16 %v1119, %v1112
    %v1715 = vpack.c.b16 %v1120, %v1113
    %v1716 = vpack.c.b16 %v1121, %v1114
    %v1717 = vpack.c.b16 %v1122, %v1115
    %v1718 = vpack.c.b16 %v1123, %v1116
    %v1719 = vpack.c.b16 %v1124, %v1117
    %v1720 = vpack.c.b16 %v1125, %v1118
    %v1721 = vpack.c.b16 %v1133, %v1126
    %v1722 = vpack.c.b16 %v1134, %v1127
    %v1723 = vpack.c.b16 %v1135, %v1128
    %v1724 = vpack.c.b16 %v1136, %v1129
    %v1725 = vpack.c.b16 %v1137, %v1130
    %v1726 = vpack.c.b16 %v1138, %v1131
    %v1727 = vpack.c.b16 %v1139, %v1132
    %v1728 = vpack.c.b16 %v1147, %v1140
    %v1729 = vpack.c.b16 %v1148, %v1141
    %v1730 = vpack.c.b16 %v1149, %v1142
    %v1731 = vpack.c.b16 %v1150, %v1143
    %v1732 = vpack.c.b16 %v1151, %v1144
    %v1733 = vpack.c.b16 %v1152, %v1145
    %v1734 = vpack.c.b16 %v1153, %v1146
    %v1735 = vpack.c.b16 %v1161, %v1154
    %v1736 = vpack.c.b16 %v1162, %v1155
    %v1737 = vpack.c.b16 %v1163, %v1156
    %v1738 = vpack.c.b16 %v1164, %v1157
    %v1739 = vpack.c.b16 %v1165, %v1158
    %v1740 = vpack.c.b16 %v1166, %v1159
    %v1741 = vpack.c.b16 %v1167, %v1160
    %v1742 = vpack.c.b16 %v1175, %v1168
    %v1743 = vpack.c.b16 %v1176, %v1169
    %v1744 = vpack.c.b16 %v1177, %v1170
    %v1745 = vpack.c.b16 %v1178, %v1171
    %v1746 = vpack.c.b16 %v1179, %v1172
    %v1747 = vpack.c.b16 %v1180, %v1173
    %v1748 = vpack.c.b16 %v1181, %v1174
    %v1749 = vpack.c.b16 %v1189, %v1182
    %v1750 = vpack.c.b16 %v1190, %v1183
    %v1751 = vpack.c.b16 %v1191, %v1184
    %v1752 = vpack.c.b16 %v1192, %v1185
    %v1753 = vpack.c.b16 %v1193, %v1186
    %v1754 = vpack.c.b16 %v1194, %v1187
    %v1755 = vpack.c.b16 %v1195, %v1188
    %v1756 = vpack.c.b16 %v1203, %v1196
    %v1757 = vpack.c.b16 %v1204, %v1197
    %v1758 = vpack.c.b16 %v1205, %v1198
    %v1759 = vpack.c.b16 %v1206, %v1199
    %v1760 = vpack.c.b16 %v1207, %v1200
    %v1761 = vpack.c.b16 %v1208, %v1201
    %v1762 = vpack.c.b16 %v1209, %v1202
    %v1763 = vpack.c.b16 %v1217, %v1210
    %v1764 = vpack.c.b16 %v1218, %v1211
    %v1765 = vpack.c.b16 %v1219, %v1212
    %v1766 = vpack.c.b16 %v1220, %v1213
    %v1767 = vpack.c.b16 %v1221, %v1214
    %v1768 = vpack.c.b16 %v1222, %v1215
    %v1769 = vpack.c.b16 %v1223, %v1216
    %v1770 = vpack.c.b16 %v1231, %v1224
    %v1771 = vpack.c.b16 %v1232, %v1225
    %v1772 = vpack.c.b16 %v1233, %v1226
    %v1773 = vpack.c.b16 %v1234, %v1227
    %v1774 = vpack.c.b16 %v1235, %v1228
    %v1775 = vpack.c.b16 %v1236, %v1229
    %v1776 = vpack.c.b16 %v1237, %v1230
    %v1777 = vpack.c.b16 %v1245, %v1238
    %v1778 = vpack.c.b16 %v1246, %v1239
    %v1779 = vpack.c.b16 %v1247, %v1240
    %v1780 = vpack.c.b16 %v1248, %v1241
    %v1781 = vpack.c.b16 %v1249, %v1242
    %v1782 = vpack.c.b16 %v1250, %v1243
    %v1783 = vpack.c.b16 %v1251, %v1244
    %v1784 = vpack.c.b16 %v1259, %v1252
    %v1785 = vpack.c.b16 %v1260, %v1253
    %v1786 = vpack.c.b16 %v1261, %v1254
    %v1787 = vpack.c.b16 %v1262, %v1255
    %v1788 = vpack.c.b16 %v1263, %v1256
    %v1789 = vpack.c.b16 %v1264, %v1257
    %v1790 = vpack.c.b16 %v1265, %v1258
    %v1791 = vpack.c.b16 %v1273, %v1266
    %v1792 = vpack.c.b16 %v1274, %v1267
    %v1793 = vpack.c.b16 %v1275, %v1268
    %v1794 = vpack.c.b16 %v1276, %v1269
    %v1795 = vpack.c.b16 %v1277, %v1270
    %v1796 = vpack.c.b16 %v1278, %v1271
    %v1797 = vpack.c.b16 %v1279, %v1272
    %v1798 = vpack.c.b16 %v1287, %v1280
    %v1799 = vpack.c.b16 %v1288, %v1281
    %v1800 = vpack.c.b16 %v1289, %v1282
    %v1801 = vpack.c.b16 %v1290, %v1283
    %v1802 = vpack.c.b16 %v1291, %v1284
    %v1803 = vpack.c.b16 %v1292, %v1285
    %v1804 = vpack.c.b16 %v1293, %v1286
    %v1805 = vpack.c.b16 %v1301, %v1294
    %v1806 = vpack.c.b16 %v1302, %v1295
    %v1807 = vpack.c.b16 %v1303, %v1296
    %v1808 = vpack.c.b16 %v1304, %v1297
    %v1809 = vpack.c.b16 %v1305, %v1298
    %v1810 = vpack.c.b16 %v1306, %v1299
    %v1811 = vpack.c.b16 %v1307, %v1300
    %v1812 = vpack.c.b16 %v1315, %v1308
    %v1813 = vpack.c.b16 %v1316, %v1309
    %v1814 = vpack.c.b16 %v1317, %v1310
    %v1815 = vpack.c.b16 %v1318, %v1311
    %v1816 = vpack.c.b16 %v1319, %v1312
    %v1817 = vpack.c.b16 %v1320, %v1313
    %v1818 = vpack.c.b16 %v1321, %v1314
    %v1819 = vpack.c.b16 %v1329, %v1322
    %v1820 = vpack.c.b16 %v1330, %v1323
    %v1821 = vpack.c.b16 %v1331, %v1324
    %v1822 = vpack.c.b16 %v1332, %v1325
    %v1823 = vpack.c.b16 %v1333, %v1326
    %v1824 = vpack.c.b16 %v1334, %v1327
    %v1825 = vpack.c.b16 %v1335, %v1328
    %v1826 = vpack.c.b16 %v1343, %v1336
    %v1827 = vpack.c.b16 %v1344, %v1337
    %v1828 = vpack.c.b16 %v1345, %v1338
    %v1829 = vpack.c.b16 %v1346, %v1339
    %v1830 = vpack.c.b16 %v1347, %v1340
    %v1831 = vpack.c.b16 %v1348, %v1341
    %v1832 = vpack.c.b16 %v1349, %v1342
    %v1833 = vpack.c.b16 %v1357, %v1350
    %v1834 = vpack.c.b16 %v1358, %v1351
    %v1835 = vpack.c.b16 %v1359, %v1352
    %v1836 = vpack.c.b16 %v1360, %v1353
    %v1837 = vpack.c.b16 %v1361, %v1354
    %v1838 = vpack.c.b16 %v1362, %v1355
    %v1839 = vpack.c.b16 %v1363, %v1356
    %v1840 = vpack.c.b16 %v1371, %v1364
    %v1841 = vpack.c.b16 %v1372, %v1365
    %v1842 = vpack.c.b16 %v1373, %v1366
    %v1843 = vpack.c.b16 %v1374, %v1367
    %v1844 = vpack.c.b16 %v1375, %v1368
    %v1845 = vpack.c.b16 %v1376, %v1369
    %v1846 = vpack.c.b16 %v1377, %v1370
    %v1847 = vpack.c.b16 %v1385, %v1378
    %v1848 = vpack.c.b16 %v1386, %v1379
    %v1849 = vpack.c.b16 %v1387, %v1380
    %v1850 = vpack.c.b16 %v1388, %v1381
    %v1851 = vpack.c.b16 %v1389, %v1382
    %v1852 = vpack.c.b16 %v1390, %v1383
    %v1853 = vpack.c.b16 %v1391, %v1384
    %v1854 = vpack.c.b16 %v1399, %v1392
    %v1855 = vpack.c.b16 %v1400, %v1393
    %v1856 = vpack.c.b16 %v1401, %v1394
    %v1857 = vpack.c.b16 %v1402, %v1395
    %v1858 = vpack.c.b16 %v1403, %v1396
    %v1859 = vpack.c.b16 %v1404, %v1397
    %v1860 = vpack.c.b16 %v1405, %v1398
    %v1861 = vpack.c.b16 %v1413, %v1406
    %v1862 = vpack.c.b16 %v1414, %v1407
    %v1863 = vpack.c.b16 %v1415, %v1408
    %v1864 = vpack.c.b16 %v1416, %v1409
    %v1865 = vpack.c.b16 %v1417, %v1410
    %v1866 = vpack.c.b16 %v1418, %v1411
    %v1867 = vpack.c.b16 %v1419, %v1412
    %v1868 = vpack.c.b16 %v1427, %v1420
    %v1869 = vpack.c.b16 %v1428, %v1421
    %v1870 = vpack.c.b16 %v1429, %v1422
    %v1871 = vpack.c.b16 %v1430, %v1423
    %v1872 = vpack.c.b16 %v1431, %v1424
    %v1873 = vpack.c.b16 %v1432, %v1425
    %v1874 = vpack.c.b16 %v1433, %v1426
    %v1875 = vpack.c.b16 %v1441, %v1434
    %v1876 = vpack.c.b16 %v1442, %v1435
    %v1877 = vpack.c.b16 %v1443, %v1436
    %v1878 = vpack.c.b16 %v1444, %v1437
    %v1879 = vpack.c.b16 %v1445, %v1438
    %v1880 = vpack.c.b16 %v1446, %v1439
    %v1881 = vpack.c.b16 %v1447, %v1440
    %v1882 = vpack.c.b16 %v1455, %v1448
    %v1883 = vpack.c.b16 %v1456, %v1449
    %v1884 = vpack.c.b16 %v1457, %v1450
    %v1885 = vpack.c.b16 %v1458, %v1451
    %v1886 = vpack.c.b16 %v1459, %v1452
    %v1887 = vpack.c.b16 %v1460, %v1453
    %v1888 = vpack.c.b16 %v1461, %v1454
    %v1889 = vpack.c.b16 %v1469, %v1462
    %v1890 = vpack.c.b16 %v1470, %v1463
    %v1891 = vpack.c.b16 %v1471, %v1464
    %v1892 = vpack.c.b16 %v1472, %v1465
    %v1893 = vpack.c.b16 %v1473, %v1466
    %v1894 = vpack.c.b16 %v1474, %v1467
    %v1895 = vpack.c.b16 %v1475, %v1468
    %v1896 = vpack.c.b16 %v1483, %v1476
    %v1897 = vpack.c.b16 %v1484, %v1477
    %v1898 = vpack.c.b16 %v1485, %v1478
    %v1899 = vpack.c.b16 %v1486, %v1479
    %v1900 = vpack.c.b16 %v1487, %v1480
    %v1901 = vpack.c.b16 %v1488, %v1481
    %v1902 = vpack.c.b16 %v1489, %v1482
    %v1903 = vpack.c.b16 %v1497, %v1490
    %v1904 = vpack.c.b16 %v1498, %v1491
    %v1905 = vpack.c.b16 %v1499, %v1492
    %v1906 = vpack.c.b16 %v1500, %v1493
    %v1907 = vpack.c.b16 %v1501, %v1494
    %v1908 = vpack.c.b16 %v1502, %v1495
    %v1909 = vpack.c.b16 %v1503, %v1496
    %v1910 = vpack.c.b16 %v1511, %v1504
    %v1911 = vpack.c.b16 %v1512, %v1505
    %v1912 = vpack.c.b16 %v1513, %v1506
    %v1913 = vpack.c.b16 %v1514, %v1507
    %v1914 = vpack.c.b16 %v1515, %v1508
    %v1915 = vpack.c.b16 %v1516, %v1509
    %v1916 = vpack.c.b16 %v1517, %v1510
    %v1917 = vpack.c.b16 %v1525, %v1518
    %v1918 = vpack.c.b16 %v1526, %v1519
    %v1919 = vpack.c.b16 %v1527, %v1520
    %v1920 = vpack.c.b16 %v1528, %v1521
    %v1921 = vpack.c.b16 %v1529, %v1522
    %v1922 = vpack.c.b16 %v1530, %v1523
    %v1923 = vpack.c.b16 %v1531, %v1524
    %v1924 = vpack.c.b16 %v1539, %v1532
    %v1925 = vpack.c.b16 %v1540, %v1533
    %v1926 = vpack.c.b16 %v1541, %v1534
    %v1927 = vpack.c.b16 %v1542, %v1535
    %v1928 = vpack.c.b16 %v1543, %v1536
    %v1929 = vpack.c.b16 %v1544, %v1537
    %v1930 = vpack.c.b16 %v1545, %v1538
    %v1931 = vpack.c.b16 %v1553, %v1546
    %v1932 = vpack.c.b16 %v1554, %v1547
    %v1933 = vpack.c.b16 %v1555, %v1548
    %v1934 = vpack.c.b16 %v1556, %v1549
    %v1935 = vpack.c.b16 %v1557, %v1550
    %v1936 = vpack.c.b16 %v1558, %v1551
    %v1937 = vpack.c.b16 %v1559, %v1552
    %v1938 = vpack.c.b16 %v1567, %v1560
    %v1939 = vpack.c.b16 %v1568, %v1561
    %v1940 = vpack.c.b16 %v1569, %v1562
    %v1941 = vpack.c.b16 %v1570, %v1563
    %v1942 = vpack.c.b16 %v1571, %v1564
    %v1943 = vpack.c.b16 %v1572, %v1565
    %v1944 = vpack.c.b16 %v1573, %v1566
    %v1945 = vpack.c.b16 %v1581, %v1574
    %v1946 = vpack.c.b16 %v1582, %v1575
    %v1947 = vpack.c.b16 %v1583, %v1576
    %v1948 = vpack.c.b16 %v1584, %v1577
    %v1949 = vpack.c.b16 %v1585, %v1578
    %v1950 = vpack.c.b16 %v1586, %v1579
    %v1951 = vpack.c.b16 %v1587, %v1580
    %v1952 = vpack.c.b16 %v1595, %v1588
    %v1953 = vpack.c.b16 %v1596, %v1589
    %v1954 = vpack.c.b16 %v1597, %v1590
    %v1955 = vpack.c.b16 %v1598, %v1591
    %v1956 = vpack.c.b16 %v1599, %v1592
    %v1957 = vpack.c.b16 %v1600, %v1593
    %v1958 = vpack.c.b16 %v1601, %v1594
    %v1959 = vpack.c.b16 %v1609, %v1602
    %v1960 = vpack.c.b16 %v1610, %v1603
    %v1961 = vpack.c.b16 %v1611, %v1604
    %v1962 = vpack.c.b16 %v1612, %v1605
    %v1963 = vpack.c.b16 %v1613, %v1606
    %v1964 = vpack.c.b16 %v1614, %v1607
    %v1965 = vpack.c.b16 %v1615, %v1608
    %vm2316 = vcmask 261120
    %v2318 = vsel %vm2316, %v78, 0
    %2320 = vmatprep.subr.bf16.mxu0 %v1617
    %2321 = vmatpush1.bf16.msra.mxu0 %v1616
    %2322 = vmatprep.subr.bf16.mxu0 %v1624
    %2323 = vmatpush1.bf16.msra.mxu0 %v1623
    %2324 = vmatprep.subr.bf16.mxu0 %v1631
    %2325 = vmatpush1.bf16.msra.mxu0 %v1630
    %2326 = vmatprep.subr.bf16.mxu0 %v1638
    %2327 = vmatpush1.bf16.msra.mxu0 %v1637
    %2328 = vmatprep.subr.bf16.mxu0 %v1645
    %2329 = vmatpush1.bf16.msra.mxu0 %v1644
    %2330 = vmatprep.subr.bf16.mxu0 %v1652
    %2331 = vmatpush1.bf16.msra.mxu0 %v1651
    %2332 = vmatprep.subr.bf16.mxu0 %v1659
    %2333 = vmatpush1.bf16.msra.mxu0 %v1658
    %2334 = vmatprep.subr.bf16.mxu0 %v1666
    %2335 = vmatpush1.bf16.msra.mxu0 %v1665
    %2336 = vmatprep.subr.bf16.mxu0 %v1673
    %2337 = vmatpush1.bf16.msra.mxu0 %v1672
    %2338 = vmatprep.subr.bf16.mxu0 %v1680
    %2339 = vmatpush1.bf16.msra.mxu0 %v1679
    %2340 = vmatprep.subr.bf16.mxu0 %v1687
    %2341 = vmatpush1.bf16.msra.mxu0 %v1686
    %2342 = vmatprep.subr.bf16.mxu0 %v1694
    %2343 = vmatpush1.bf16.msra.mxu0 %v1693
    %2344 = vmatprep.subr.bf16.mxu0 %v1701
    %2345 = vmatpush1.bf16.msra.mxu0 %v1700
    %2346 = vmatprep.subr.bf16.mxu0 %v1708
    %2347 = vmatpush1.bf16.msra.mxu0 %v1707
    %2348 = vmatprep.subr.bf16.mxu0 %v1715
    %2349 = vmatpush1.bf16.msra.mxu0 %v1714
    %2350 = vmatprep.subr.bf16.mxu0 %v1722
    %2351 = vmatpush1.bf16.msra.mxu0 %v1721
    %2352 = vmatprep.mubr.bf16.mxu0 %v73
    %2353 = vmatmul.mubr.bf16.gmra.mrb[0].mxu0 %v72
    %v2354 = vpop.f32.mrb[0].mxu0
    %v2355 = vadd.f32 %v484, %v2354
    %v2356 = vpop.f32.mrb[0].mxu0
    %v2357 = vadd.f32 %v488, %v2356
    %v2358 = vpop.f32.mrb[0].mxu0
    %v2359 = vpop.f32.mrb[0].mxu0
    %2360 = vdwg.mxu0
    %2361 = vmatprep.subr.bf16.mxu0 %v1729
    %2362 = vmatpush1.bf16.msra.mxu0 %v1728
    %2363 = vmatprep.subr.bf16.mxu0 %v1736
    %2364 = vmatpush1.bf16.msra.mxu0 %v1735
    %2365 = vmatprep.subr.bf16.mxu0 %v1743
    %2366 = vmatpush1.bf16.msra.mxu0 %v1742
    %2367 = vmatprep.subr.bf16.mxu0 %v1750
    %2368 = vmatpush1.bf16.msra.mxu0 %v1749
    %2369 = vmatprep.subr.bf16.mxu0 %v1757
    %2370 = vmatpush1.bf16.msra.mxu0 %v1756
    %2371 = vmatprep.subr.bf16.mxu0 %v1764
    %2372 = vmatpush1.bf16.msra.mxu0 %v1763
    %2373 = vmatprep.subr.bf16.mxu0 %v1771
    %2374 = vmatpush1.bf16.msra.mxu0 %v1770
    %2375 = vmatprep.subr.bf16.mxu0 %v1778
    %2376 = vmatpush1.bf16.msra.mxu0 %v1777
    %2377 = vmatprep.subr.bf16.mxu0 %v1785
    %2378 = vmatpush1.bf16.msra.mxu0 %v1784
    %2379 = vmatprep.subr.bf16.mxu0 %v1792
    %2380 = vmatpush1.bf16.msra.mxu0 %v1791
    %2381 = vmatprep.subr.bf16.mxu0 %v1799
    %2382 = vmatpush1.bf16.msra.mxu0 %v1798
    %2383 = vmatprep.subr.bf16.mxu0 %v1806
    %2384 = vmatpush1.bf16.msra.mxu0 %v1805
    %2385 = vmatprep.subr.bf16.mxu0 %v1813
    %2386 = vmatpush1.bf16.msra.mxu0 %v1812
    %2387 = vmatprep.subr.bf16.mxu0 %v1820
    %2388 = vmatpush1.bf16.msra.mxu0 %v1819
    %2389 = vmatprep.subr.bf16.mxu0 %v1827
    %2390 = vmatpush1.bf16.msra.mxu0 %v1826
    %2391 = vmatprep.subr.bf16.mxu0 %v1834
    %2392 = vmatpush1.bf16.msra.mxu0 %v1833
    %2393 = vmatprep.mubr.bf16.mxu0 %v75
    %2394 = vmatmul.mubr.bf16.gmra.mrb[0].mxu0 %v74
    %v2395 = vpop.f32.mrb[0].mxu0
    %v2396 = vadd.f32 %v2355, %v2395
    %v2397 = vpop.f32.mrb[0].mxu0
    %v2398 = vadd.f32 %v2357, %v2397
    %v2399 = vpop.f32.mrb[0].mxu0
    %v2400 = vpop.f32.mrb[0].mxu0
    %2401 = vdwg.mxu0
    %2402 = vmatprep.subr.bf16.mxu0 %v1841
    %2403 = vmatpush1.bf16.msra.mxu0 %v1840
    %2404 = vmatprep.subr.bf16.mxu0 %v1848
    %2405 = vmatpush1.bf16.msra.mxu0 %v1847
    %2406 = vmatprep.subr.bf16.mxu0 %v1855
    %2407 = vmatpush1.bf16.msra.mxu0 %v1854
    %2408 = vmatprep.subr.bf16.mxu0 %v1862
    %2409 = vmatpush1.bf16.msra.mxu0 %v1861
    %2410 = vmatprep.subr.bf16.mxu0 %v1869
    %2411 = vmatpush1.bf16.msra.mxu0 %v1868
    %2412 = vmatprep.subr.bf16.mxu0 %v1876
    %2413 = vmatpush1.bf16.msra.mxu0 %v1875
    %2414 = vmatprep.subr.bf16.mxu0 %v1883
    %2415 = vmatpush1.bf16.msra.mxu0 %v1882
    %2416 = vmatprep.subr.bf16.mxu0 %v1890
    %2417 = vmatpush1.bf16.msra.mxu0 %v1889
    %2418 = vmatprep.subr.bf16.mxu0 %v1897
    %2419 = vmatpush1.bf16.msra.mxu0 %v1896
    %2420 = vmatprep.subr.bf16.mxu0 %v1904
    %2421 = vmatpush1.bf16.msra.mxu0 %v1903
    %2422 = vmatprep.subr.bf16.mxu0 %v1911
    %2423 = vmatpush1.bf16.msra.mxu0 %v1910
    %2424 = vmatprep.subr.bf16.mxu0 %v1918
    %2425 = vmatpush1.bf16.msra.mxu0 %v1917
    %2426 = vmatprep.subr.bf16.mxu0 %v1925
    %2427 = vmatpush1.bf16.msra.mxu0 %v1924
    %2428 = vmatprep.subr.bf16.mxu0 %v1932
    %2429 = vmatpush1.bf16.msra.mxu0 %v1931
    %2430 = vmatprep.subr.bf16.mxu0 %v1939
    %2431 = vmatpush1.bf16.msra.mxu0 %v1938
    %2432 = vmatprep.subr.bf16.mxu0 %v1946
    %2433 = vmatpush1.bf16.msra.mxu0 %v1945
    %2434 = vmatprep.mubr.bf16.mxu0 %v77
    %2435 = vmatmul.mubr.bf16.gmra.mrb[0].mxu0 %v76
    %v2436 = vpop.f32.mrb[0].mxu0
    %v2437 = vadd.f32 %v2396, %v2436
    %v2438 = vpop.f32.mrb[0].mxu0
    %v2439 = vadd.f32 %v2398, %v2438
    %v2440 = vpop.f32.mrb[0].mxu0
    %v2441 = vpop.f32.mrb[0].mxu0
    %2442 = vdwg.mxu0
    %2443 = vmatprep.subr.bf16.mxu0 %v1953
    %2444 = vmatpush1.bf16.msra.mxu0 %v1952
    %2445 = vmatprep.subr.bf16.mxu0 %v1960
    %2446 = vmatpush1.bf16.msra.mxu0 %v1959
    %2447 = vmatprep.subr.bf16.mxu0 0
    %2448 = vmatpush1.bf16.msra.mxu0 0
    %2449 = vmatprep.subr.bf16.mxu0 0
    %2450 = vmatpush1.bf16.msra.mxu0 0
    %2451 = vmatprep.subr.bf16.mxu0 0
    %2452 = vmatpush1.bf16.msra.mxu0 0
    %2453 = vmatprep.subr.bf16.mxu0 0
    %2454 = vmatpush1.bf16.msra.mxu0 0
    %2455 = vmatprep.subr.bf16.mxu0 0
    %2456 = vmatpush1.bf16.msra.mxu0 0
    %2457 = vmatprep.subr.bf16.mxu0 0
    %2458 = vmatpush1.bf16.msra.mxu0 0
    %2459 = vmatprep.subr.bf16.mxu0 0
    %2460 = vmatpush1.bf16.msra.mxu0 0
    %2461 = vmatprep.subr.bf16.mxu0 0
    %2462 = vmatpush1.bf16.msra.mxu0 0
    %2463 = vmatprep.subr.bf16.mxu0 0
    %2464 = vmatpush1.bf16.msra.mxu0 0
    %2465 = vmatprep.subr.bf16.mxu0 0
    %2466 = vmatpush1.bf16.msra.mxu0 0
    %2467 = vmatprep.subr.bf16.mxu0 0
    %2468 = vmatpush1.bf16.msra.mxu0 0
    %2469 = vmatprep.subr.bf16.mxu0 0
    %2470 = vmatpush1.bf16.msra.mxu0 0
    %2471 = vmatprep.subr.bf16.mxu0 0
    %2472 = vmatpush1.bf16.msra.mxu0 0
    %2473 = vmatprep.subr.bf16.mxu0 0
    %2474 = vmatpush1.bf16.msra.mxu0 0
    %2475 = vmatprep.mubr.bf16.mxu0 0
    %2476 = vmatmul.mubr.bf16.gmra.mrb[0].mxu0 %v2318
    %v2477 = vpop.f32.mrb[0].mxu0
    %v2478 = vadd.f32 %v2437, %v2477
    %v2479 = vpop.f32.mrb[0].mxu0
    %v2480 = vadd.f32 %v2439, %v2479
    %v2481 = vpop.f32.mrb[0].mxu0
    %v2482 = vpop.f32.mrb[0].mxu0
    %2483 = vdwg.mxu0
    %2484 = vmatprep.subr.bf16.mxu0 %v1619
    %2485 = vmatpush1.bf16.msra.mxu0 %v1618
    %2486 = vmatprep.subr.bf16.mxu0 %v1626
    %2487 = vmatpush1.bf16.msra.mxu0 %v1625
    %2488 = vmatprep.subr.bf16.mxu0 %v1633
    %2489 = vmatpush1.bf16.msra.mxu0 %v1632
    %2490 = vmatprep.subr.bf16.mxu0 %v1640
    %2491 = vmatpush1.bf16.msra.mxu0 %v1639
    %2492 = vmatprep.subr.bf16.mxu0 %v1647
    %2493 = vmatpush1.bf16.msra.mxu0 %v1646
    %2494 = vmatprep.subr.bf16.mxu0 %v1654
    %2495 = vmatpush1.bf16.msra.mxu0 %v1653
    %2496 = vmatprep.subr.bf16.mxu0 %v1661
    %2497 = vmatpush1.bf16.msra.mxu0 %v1660
    %2498 = vmatprep.subr.bf16.mxu0 %v1668
    %2499 = vmatpush1.bf16.msra.mxu0 %v1667
    %2500 = vmatprep.subr.bf16.mxu0 %v1675
    %2501 = vmatpush1.bf16.msra.mxu0 %v1674
    %2502 = vmatprep.subr.bf16.mxu0 %v1682
    %2503 = vmatpush1.bf16.msra.mxu0 %v1681
    %2504 = vmatprep.subr.bf16.mxu0 %v1689
    %2505 = vmatpush1.bf16.msra.mxu0 %v1688
    %2506 = vmatprep.subr.bf16.mxu0 %v1696
    %2507 = vmatpush1.bf16.msra.mxu0 %v1695
    %2508 = vmatprep.subr.bf16.mxu0 %v1703
    %2509 = vmatpush1.bf16.msra.mxu0 %v1702
    %2510 = vmatprep.subr.bf16.mxu0 %v1710
    %2511 = vmatpush1.bf16.msra.mxu0 %v1709
    %2512 = vmatprep.subr.bf16.mxu0 %v1717
    %2513 = vmatpush1.bf16.msra.mxu0 %v1716
    %2514 = vmatprep.subr.bf16.mxu0 %v1724
    %2515 = vmatpush1.bf16.msra.mxu0 %v1723
    %2516 = vmatprep.mubr.bf16.mxu0 %v73
    %2517 = vmatmul.mubr.bf16.gmra.mrb[0].mxu0 %v72
    %v2518 = vpop.f32.mrb[0].mxu0
    %v2519 = vadd.f32 %v492, %v2518
    %v2520 = vpop.f32.mrb[0].mxu0
    %v2521 = vadd.f32 %v496, %v2520
    %v2522 = vpop.f32.mrb[0].mxu0
    %v2523 = vpop.f32.mrb[0].mxu0
    %2524 = vdwg.mxu0
    %2525 = vmatprep.subr.bf16.mxu0 %v1731
    %2526 = vmatpush1.bf16.msra.mxu0 %v1730
    %2527 = vmatprep.subr.bf16.mxu0 %v1738
    %2528 = vmatpush1.bf16.msra.mxu0 %v1737
    %2529 = vmatprep.subr.bf16.mxu0 %v1745
    %2530 = vmatpush1.bf16.msra.mxu0 %v1744
    %2531 = vmatprep.subr.bf16.mxu0 %v1752
    %2532 = vmatpush1.bf16.msra.mxu0 %v1751
    %2533 = vmatprep.subr.bf16.mxu0 %v1759
    %2534 = vmatpush1.bf16.msra.mxu0 %v1758
    %2535 = vmatprep.subr.bf16.mxu0 %v1766
    %2536 = vmatpush1.bf16.msra.mxu0 %v1765
    %2537 = vmatprep.subr.bf16.mxu0 %v1773
    %2538 = vmatpush1.bf16.msra.mxu0 %v1772
    %2539 = vmatprep.subr.bf16.mxu0 %v1780
    %2540 = vmatpush1.bf16.msra.mxu0 %v1779
    %2541 = vmatprep.subr.bf16.mxu0 %v1787
    %2542 = vmatpush1.bf16.msra.mxu0 %v1786
    %2543 = vmatprep.subr.bf16.mxu0 %v1794
    %2544 = vmatpush1.bf16.msra.mxu0 %v1793
    %2545 = vmatprep.subr.bf16.mxu0 %v1801
    %2546 = vmatpush1.bf16.msra.mxu0 %v1800
    %2547 = vmatprep.subr.bf16.mxu0 %v1808
    %2548 = vmatpush1.bf16.msra.mxu0 %v1807
    %2549 = vmatprep.subr.bf16.mxu0 %v1815
    %2550 = vmatpush1.bf16.msra.mxu0 %v1814
    %2551 = vmatprep.subr.bf16.mxu0 %v1822
    %2552 = vmatpush1.bf16.msra.mxu0 %v1821
    %2553 = vmatprep.subr.bf16.mxu0 %v1829
    %2554 = vmatpush1.bf16.msra.mxu0 %v1828
    %2555 = vmatprep.subr.bf16.mxu0 %v1836
    %2556 = vmatpush1.bf16.msra.mxu0 %v1835
    %2557 = vmatprep.mubr.bf16.mxu0 %v75
    %2558 = vmatmul.mubr.bf16.gmra.mrb[0].mxu0 %v74
    %v2559 = vpop.f32.mrb[0].mxu0
    %v2560 = vadd.f32 %v2519, %v2559
    %v2561 = vpop.f32.mrb[0].mxu0
    %v2562 = vadd.f32 %v2521, %v2561
    %v2563 = vpop.f32.mrb[0].mxu0
    %v2564 = vpop.f32.mrb[0].mxu0
    %2565 = vdwg.mxu0
    %2566 = vmatprep.subr.bf16.mxu0 %v1843
    %2567 = vmatpush1.bf16.msra.mxu0 %v1842
    %2568 = vmatprep.subr.bf16.mxu0 %v1850
    %2569 = vmatpush1.bf16.msra.mxu0 %v1849
    %2570 = vmatprep.subr.bf16.mxu0 %v1857
    %2571 = vmatpush1.bf16.msra.mxu0 %v1856
    %2572 = vmatprep.subr.bf16.mxu0 %v1864
    %2573 = vmatpush1.bf16.msra.mxu0 %v1863
    %2574 = vmatprep.subr.bf16.mxu0 %v1871
    %2575 = vmatpush1.bf16.msra.mxu0 %v1870
    %2576 = vmatprep.subr.bf16.mxu0 %v1878
    %2577 = vmatpush1.bf16.msra.mxu0 %v1877
    %2578 = vmatprep.subr.bf16.mxu0 %v1885
    %2579 = vmatpush1.bf16.msra.mxu0 %v1884
    %2580 = vmatprep.subr.bf16.mxu0 %v1892
    %2581 = vmatpush1.bf16.msra.mxu0 %v1891
    %2582 = vmatprep.subr.bf16.mxu0 %v1899
    %2583 = vmatpush1.bf16.msra.mxu0 %v1898
    %2584 = vmatprep.subr.bf16.mxu0 %v1906
    %2585 = vmatpush1.bf16.msra.mxu0 %v1905
    %2586 = vmatprep.subr.bf16.mxu0 %v1913
    %2587 = vmatpush1.bf16.msra.mxu0 %v1912
    %2588 = vmatprep.subr.bf16.mxu0 %v1920
    %2589 = vmatpush1.bf16.msra.mxu0 %v1919
    %2590 = vmatprep.subr.bf16.mxu0 %v1927
    %2591 = vmatpush1.bf16.msra.mxu0 %v1926
    %2592 = vmatprep.subr.bf16.mxu0 %v1934
    %2593 = vmatpush1.bf16.msra.mxu0 %v1933
    %2594 = vmatprep.subr.bf16.mxu0 %v1941
    %2595 = vmatpush1.bf16.msra.mxu0 %v1940
    %2596 = vmatprep.subr.bf16.mxu0 %v1948
    %2597 = vmatpush1.bf16.msra.mxu0 %v1947
    %2598 = vmatprep.mubr.bf16.mxu0 %v77
    %2599 = vmatmul.mubr.bf16.gmra.mrb[0].mxu0 %v76
    %v2600 = vpop.f32.mrb[0].mxu0
    %v2601 = vadd.f32 %v2560, %v2600
    %v2602 = vpop.f32.mrb[0].mxu0
    %v2603 = vadd.f32 %v2562, %v2602
    %v2604 = vpop.f32.mrb[0].mxu0
    %v2605 = vpop.f32.mrb[0].mxu0
    %2606 = vdwg.mxu0
    %2607 = vmatprep.subr.bf16.mxu0 %v1955
    %2608 = vmatpush1.bf16.msra.mxu0 %v1954
    %2609 = vmatprep.subr.bf16.mxu0 %v1962
    %2610 = vmatpush1.bf16.msra.mxu0 %v1961
    %2611 = vmatprep.subr.bf16.mxu0 0
    %2612 = vmatpush1.bf16.msra.mxu0 0
    %2613 = vmatprep.subr.bf16.mxu0 0
    %2614 = vmatpush1.bf16.msra.mxu0 0
    %2615 = vmatprep.subr.bf16.mxu0 0
    %2616 = vmatpush1.bf16.msra.mxu0 0
    %2617 = vmatprep.subr.bf16.mxu0 0
    %2618 = vmatpush1.bf16.msra.mxu0 0
    %2619 = vmatprep.subr.bf16.mxu0 0
    %2620 = vmatpush1.bf16.msra.mxu0 0
    %2621 = vmatprep.subr.bf16.mxu0 0
    %2622 = vmatpush1.bf16.msra.mxu0 0
    %2623 = vmatprep.subr.bf16.mxu0 0
    %2624 = vmatpush1.bf16.msra.mxu0 0
    %2625 = vmatprep.subr.bf16.mxu0 0
    %2626 = vmatpush1.bf16.msra.mxu0 0
    %2627 = vmatprep.subr.bf16.mxu0 0
    %2628 = vmatpush1.bf16.msra.mxu0 0
    %2629 = vmatprep.subr.bf16.mxu0 0
    %2630 = vmatpush1.bf16.msra.mxu0 0
    %2631 = vmatprep.subr.bf16.mxu0 0
    %2632 = vmatpush1.bf16.msra.mxu0 0
    %2633 = vmatprep.subr.bf16.mxu0 0
    %2634 = vmatpush1.bf16.msra.mxu0 0
    %2635 = vmatprep.subr.bf16.mxu0 0
    %2636 = vmatpush1.bf16.msra.mxu0 0
    %2637 = vmatprep.subr.bf16.mxu0 0
    %2638 = vmatpush1.bf16.msra.mxu0 0
    %2639 = vmatprep.mubr.bf16.mxu0 0
    %2640 = vmatmul.mubr.bf16.gmra.mrb[0].mxu0 %v2318
    %v2641 = vpop.f32.mrb[0].mxu0
    %v2642 = vadd.f32 %v2601, %v2641
    %v2643 = vpop.f32.mrb[0].mxu0
    %v2644 = vadd.f32 %v2603, %v2643
    %v2645 = vpop.f32.mrb[0].mxu0
    %v2646 = vpop.f32.mrb[0].mxu0
    %2647 = vdwg.mxu0
    %2648 = vmatprep.subr.bf16.mxu0 %v1621
    %2649 = vmatpush1.bf16.msra.mxu0 %v1620
    %2650 = vmatprep.subr.bf16.mxu0 %v1628
    %2651 = vmatpush1.bf16.msra.mxu0 %v1627
    %2652 = vmatprep.subr.bf16.mxu0 %v1635
    %2653 = vmatpush1.bf16.msra.mxu0 %v1634
    %2654 = vmatprep.subr.bf16.mxu0 %v1642
    %2655 = vmatpush1.bf16.msra.mxu0 %v1641
    %2656 = vmatprep.subr.bf16.mxu0 %v1649
    %2657 = vmatpush1.bf16.msra.mxu0 %v1648
    %2658 = vmatprep.subr.bf16.mxu0 %v1656
    %2659 = vmatpush1.bf16.msra.mxu0 %v1655
    %2660 = vmatprep.subr.bf16.mxu0 %v1663
    %2661 = vmatpush1.bf16.msra.mxu0 %v1662
    %2662 = vmatprep.subr.bf16.mxu0 %v1670
    %2663 = vmatpush1.bf16.msra.mxu0 %v1669
    %2664 = vmatprep.subr.bf16.mxu0 %v1677
    %2665 = vmatpush1.bf16.msra.mxu0 %v1676
    %2666 = vmatprep.subr.bf16.mxu0 %v1684
    %2667 = vmatpush1.bf16.msra.mxu0 %v1683
    %2668 = vmatprep.subr.bf16.mxu0 %v1691
    %2669 = vmatpush1.bf16.msra.mxu0 %v1690
    %2670 = vmatprep.subr.bf16.mxu0 %v1698
    %2671 = vmatpush1.bf16.msra.mxu0 %v1697
    %2672 = vmatprep.subr.bf16.mxu0 %v1705
    %2673 = vmatpush1.bf16.msra.mxu0 %v1704
    %2674 = vmatprep.subr.bf16.mxu0 %v1712
    %2675 = vmatpush1.bf16.msra.mxu0 %v1711
    %2676 = vmatprep.subr.bf16.mxu0 %v1719
    %2677 = vmatpush1.bf16.msra.mxu0 %v1718
    %2678 = vmatprep.subr.bf16.mxu0 %v1726
    %2679 = vmatpush1.bf16.msra.mxu0 %v1725
    %2680 = vmatprep.mubr.bf16.mxu0 %v73
    %2681 = vmatmul.mubr.bf16.gmra.mrb[0].mxu0 %v72
    %v2682 = vpop.f32.mrb[0].mxu0
    %v2683 = vadd.f32 %v500, %v2682
    %v2684 = vpop.f32.mrb[0].mxu0
    %v2685 = vadd.f32 %v504, %v2684
    %v2686 = vpop.f32.mrb[0].mxu0
    %v2687 = vpop.f32.mrb[0].mxu0
    %2688 = vdwg.mxu0
    %2689 = vmatprep.subr.bf16.mxu0 %v1733
    %2690 = vmatpush1.bf16.msra.mxu0 %v1732
    %2691 = vmatprep.subr.bf16.mxu0 %v1740
    %2692 = vmatpush1.bf16.msra.mxu0 %v1739
    %2693 = vmatprep.subr.bf16.mxu0 %v1747
    %2694 = vmatpush1.bf16.msra.mxu0 %v1746
    %2695 = vmatprep.subr.bf16.mxu0 %v1754
    %2696 = vmatpush1.bf16.msra.mxu0 %v1753
    %2697 = vmatprep.subr.bf16.mxu0 %v1761
    %2698 = vmatpush1.bf16.msra.mxu0 %v1760
    %2699 = vmatprep.subr.bf16.mxu0 %v1768
    %2700 = vmatpush1.bf16.msra.mxu0 %v1767
    %2701 = vmatprep.subr.bf16.mxu0 %v1775
    %2702 = vmatpush1.bf16.msra.mxu0 %v1774
    %2703 = vmatprep.subr.bf16.mxu0 %v1782
    %2704 = vmatpush1.bf16.msra.mxu0 %v1781
    %2705 = vmatprep.subr.bf16.mxu0 %v1789
    %2706 = vmatpush1.bf16.msra.mxu0 %v1788
    %2707 = vmatprep.subr.bf16.mxu0 %v1796
    %2708 = vmatpush1.bf16.msra.mxu0 %v1795
    %2709 = vmatprep.subr.bf16.mxu0 %v1803
    %2710 = vmatpush1.bf16.msra.mxu0 %v1802
    %2711 = vmatprep.subr.bf16.mxu0 %v1810
    %2712 = vmatpush1.bf16.msra.mxu0 %v1809
    %2713 = vmatprep.subr.bf16.mxu0 %v1817
    %2714 = vmatpush1.bf16.msra.mxu0 %v1816
    %2715 = vmatprep.subr.bf16.mxu0 %v1824
    %2716 = vmatpush1.bf16.msra.mxu0 %v1823
    %2717 = vmatprep.subr.bf16.mxu0 %v1831
    %2718 = vmatpush1.bf16.msra.mxu0 %v1830
    %2719 = vmatprep.subr.bf16.mxu0 %v1838
    %2720 = vmatpush1.bf16.msra.mxu0 %v1837
    %2721 = vmatprep.mubr.bf16.mxu0 %v75
    %2722 = vmatmul.mubr.bf16.gmra.mrb[0].mxu0 %v74
    %v2723 = vpop.f32.mrb[0].mxu0
    %v2724 = vadd.f32 %v2683, %v2723
    %v2725 = vpop.f32.mrb[0].mxu0
    %v2726 = vadd.f32 %v2685, %v2725
    %v2727 = vpop.f32.mrb[0].mxu0
    %v2728 = vpop.f32.mrb[0].mxu0
    %2729 = vdwg.mxu0
    %2730 = vmatprep.subr.bf16.mxu0 %v1845
    %2731 = vmatpush1.bf16.msra.mxu0 %v1844
    %2732 = vmatprep.subr.bf16.mxu0 %v1852
    %2733 = vmatpush1.bf16.msra.mxu0 %v1851
    %2734 = vmatprep.subr.bf16.mxu0 %v1859
    %2735 = vmatpush1.bf16.msra.mxu0 %v1858
    %2736 = vmatprep.subr.bf16.mxu0 %v1866
    %2737 = vmatpush1.bf16.msra.mxu0 %v1865
    %2738 = vmatprep.subr.bf16.mxu0 %v1873
    %2739 = vmatpush1.bf16.msra.mxu0 %v1872
    %2740 = vmatprep.subr.bf16.mxu0 %v1880
    %2741 = vmatpush1.bf16.msra.mxu0 %v1879
    %2742 = vmatprep.subr.bf16.mxu0 %v1887
    %2743 = vmatpush1.bf16.msra.mxu0 %v1886
    %2744 = vmatprep.subr.bf16.mxu0 %v1894
    %2745 = vmatpush1.bf16.msra.mxu0 %v1893
    %2746 = vmatprep.subr.bf16.mxu0 %v1901
    %2747 = vmatpush1.bf16.msra.mxu0 %v1900
    %2748 = vmatprep.subr.bf16.mxu0 %v1908
    %2749 = vmatpush1.bf16.msra.mxu0 %v1907
    %2750 = vmatprep.subr.bf16.mxu0 %v1915
    %2751 = vmatpush1.bf16.msra.mxu0 %v1914
    %2752 = vmatprep.subr.bf16.mxu0 %v1922
    %2753 = vmatpush1.bf16.msra.mxu0 %v1921
    %2754 = vmatprep.subr.bf16.mxu0 %v1929
    %2755 = vmatpush1.bf16.msra.mxu0 %v1928
    %2756 = vmatprep.subr.bf16.mxu0 %v1936
    %2757 = vmatpush1.bf16.msra.mxu0 %v1935
    %2758 = vmatprep.subr.bf16.mxu0 %v1943
    %2759 = vmatpush1.bf16.msra.mxu0 %v1942
    %2760 = vmatprep.subr.bf16.mxu0 %v1950
    %2761 = vmatpush1.bf16.msra.mxu0 %v1949
    %2762 = vmatprep.mubr.bf16.mxu0 %v77
    %2763 = vmatmul.mubr.bf16.gmra.mrb[0].mxu0 %v76
    %v2764 = vpop.f32.mrb[0].mxu0
    %v2765 = vadd.f32 %v2724, %v2764
    %v2766 = vpop.f32.mrb[0].mxu0
    %v2767 = vadd.f32 %v2726, %v2766
    %v2768 = vpop.f32.mrb[0].mxu0
    %v2769 = vpop.f32.mrb[0].mxu0
    %2770 = vdwg.mxu0
    %2771 = vmatprep.subr.bf16.mxu0 %v1957
    %2772 = vmatpush1.bf16.msra.mxu0 %v1956
    %2773 = vmatprep.subr.bf16.mxu0 %v1964
    %2774 = vmatpush1.bf16.msra.mxu0 %v1963
    %2775 = vmatprep.subr.bf16.mxu0 0
    %2776 = vmatpush1.bf16.msra.mxu0 0
    %2777 = vmatprep.subr.bf16.mxu0 0
    %2778 = vmatpush1.bf16.msra.mxu0 0
    %2779 = vmatprep.subr.bf16.mxu0 0
    %2780 = vmatpush1.bf16.msra.mxu0 0
    %2781 = vmatprep.subr.bf16.mxu0 0
    %2782 = vmatpush1.bf16.msra.mxu0 0
    %2783 = vmatprep.subr.bf16.mxu0 0
    %2784 = vmatpush1.bf16.msra.mxu0 0
    %2785 = vmatprep.subr.bf16.mxu0 0
    %2786 = vmatpush1.bf16.msra.mxu0 0
    %2787 = vmatprep.subr.bf16.mxu0 0
    %2788 = vmatpush1.bf16.msra.mxu0 0
    %2789 = vmatprep.subr.bf16.mxu0 0
    %2790 = vmatpush1.bf16.msra.mxu0 0
    %2791 = vmatprep.subr.bf16.mxu0 0
    %2792 = vmatpush1.bf16.msra.mxu0 0
    %2793 = vmatprep.subr.bf16.mxu0 0
    %2794 = vmatpush1.bf16.msra.mxu0 0
    %2795 = vmatprep.subr.bf16.mxu0 0
    %2796 = vmatpush1.bf16.msra.mxu0 0
    %2797 = vmatprep.subr.bf16.mxu0 0
    %2798 = vmatpush1.bf16.msra.mxu0 0
    %2799 = vmatprep.subr.bf16.mxu0 0
    %2800 = vmatpush1.bf16.msra.mxu0 0
    %2801 = vmatprep.subr.bf16.mxu0 0
    %2802 = vmatpush1.bf16.msra.mxu0 0
    %2803 = vmatprep.mubr.bf16.mxu0 0
    %2804 = vmatmul.mubr.bf16.gmra.mrb[0].mxu0 %v2318
    %v2805 = vpop.f32.mrb[0].mxu0
    %v2806 = vadd.f32 %v2765, %v2805
    %v2807 = vpop.f32.mrb[0].mxu0
    %v2808 = vadd.f32 %v2767, %v2807
    %v2809 = vpop.f32.mrb[0].mxu0
    %v2810 = vpop.f32.mrb[0].mxu0
    %2811 = vdwg.mxu0
    %2812 = vmatprep.subr.bf16.mxu0 0
    %2813 = vmatpush1.bf16.msra.mxu0 %v1622
    %2814 = vmatprep.subr.bf16.mxu0 0
    %2815 = vmatpush1.bf16.msra.mxu0 %v1629
    %2816 = vmatprep.subr.bf16.mxu0 0
    %2817 = vmatpush1.bf16.msra.mxu0 %v1636
    %2818 = vmatprep.subr.bf16.mxu0 0
    %2819 = vmatpush1.bf16.msra.mxu0 %v1643
    %2820 = vmatprep.subr.bf16.mxu0 0
    %2821 = vmatpush1.bf16.msra.mxu0 %v1650
    %2822 = vmatprep.subr.bf16.mxu0 0
    %2823 = vmatpush1.bf16.msra.mxu0 %v1657
    %2824 = vmatprep.subr.bf16.mxu0 0
    %2825 = vmatpush1.bf16.msra.mxu0 %v1664
    %2826 = vmatprep.subr.bf16.mxu0 0
    %2827 = vmatpush1.bf16.msra.mxu0 %v1671
    %2828 = vmatprep.subr.bf16.mxu0 0
    %2829 = vmatpush1.bf16.msra.mxu0 %v1678
    %2830 = vmatprep.subr.bf16.mxu0 0
    %2831 = vmatpush1.bf16.msra.mxu0 %v1685
    %2832 = vmatprep.subr.bf16.mxu0 0
    %2833 = vmatpush1.bf16.msra.mxu0 %v1692
    %2834 = vmatprep.subr.bf16.mxu0 0
    %2835 = vmatpush1.bf16.msra.mxu0 %v1699
    %2836 = vmatprep.subr.bf16.mxu0 0
    %2837 = vmatpush1.bf16.msra.mxu0 %v1706
    %2838 = vmatprep.subr.bf16.mxu0 0
    %2839 = vmatpush1.bf16.msra.mxu0 %v1713
    %2840 = vmatprep.subr.bf16.mxu0 0
    %2841 = vmatpush1.bf16.msra.mxu0 %v1720
    %2842 = vmatprep.subr.bf16.mxu0 0
    %2843 = vmatpush1.bf16.msra.mxu0 %v1727
    %2844 = vmatprep.mubr.bf16.mxu0 %v73
    %2845 = vmatmul.mubr.bf16.gmra.mrb[0].mxu0 %v72
    %v2846 = vpop.f32.mrb[0].mxu0
    %v2847 = vadd.f32 %v508, %v2846
    %v2848 = vpop.f32.mrb[0].mxu0
    %v2849 = vpop.f32.mrb[0].mxu0
    %v2850 = vpop.f32.mrb[0].mxu0
    %2851 = vdwg.mxu0
    %2852 = vmatprep.subr.bf16.mxu0 0
    %2853 = vmatpush1.bf16.msra.mxu0 %v1734
    %2854 = vmatprep.subr.bf16.mxu0 0
    %2855 = vmatpush1.bf16.msra.mxu0 %v1741
    %2856 = vmatprep.subr.bf16.mxu0 0
    %2857 = vmatpush1.bf16.msra.mxu0 %v1748
    %2858 = vmatprep.subr.bf16.mxu0 0
    %2859 = vmatpush1.bf16.msra.mxu0 %v1755
    %2860 = vmatprep.subr.bf16.mxu0 0
    %2861 = vmatpush1.bf16.msra.mxu0 %v1762
    %2862 = vmatprep.subr.bf16.mxu0 0
    %2863 = vmatpush1.bf16.msra.mxu0 %v1769
    %2864 = vmatprep.subr.bf16.mxu0 0
    %2865 = vmatpush1.bf16.msra.mxu0 %v1776
    %2866 = vmatprep.subr.bf16.mxu0 0
    %2867 = vmatpush1.bf16.msra.mxu0 %v1783
    %2868 = vmatprep.subr.bf16.mxu0 0
    %2869 = vmatpush1.bf16.msra.mxu0 %v1790
    %2870 = vmatprep.subr.bf16.mxu0 0
    %2871 = vmatpush1.bf16.msra.mxu0 %v1797
    %2872 = vmatprep.subr.bf16.mxu0 0
    %2873 = vmatpush1.bf16.msra.mxu0 %v1804
    %2874 = vmatprep.subr.bf16.mxu0 0
    %2875 = vmatpush1.bf16.msra.mxu0 %v1811
    %2876 = vmatprep.subr.bf16.mxu0 0
    %2877 = vmatpush1.bf16.msra.mxu0 %v1818
    %2878 = vmatprep.subr.bf16.mxu0 0
    %2879 = vmatpush1.bf16.msra.mxu0 %v1825
    %2880 = vmatprep.subr.bf16.mxu0 0
    %2881 = vmatpush1.bf16.msra.mxu0 %v1832
    %2882 = vmatprep.subr.bf16.mxu0 0
    %2883 = vmatpush1.bf16.msra.mxu0 %v1839
    %2884 = vmatprep.mubr.bf16.mxu0 %v75
    %2885 = vmatmul.mubr.bf16.gmra.mrb[0].mxu0 %v74
    %v2886 = vpop.f32.mrb[0].mxu0
    %v2887 = vadd.f32 %v2847, %v2886
    %v2888 = vpop.f32.mrb[0].mxu0
    %v2889 = vpop.f32.mrb[0].mxu0
    %v2890 = vpop.f32.mrb[0].mxu0
    %2891 = vdwg.mxu0
    %2892 = vmatprep.subr.bf16.mxu0 0
    %2893 = vmatpush1.bf16.msra.mxu0 %v1846
    %2894 = vmatprep.subr.bf16.mxu0 0
    %2895 = vmatpush1.bf16.msra.mxu0 %v1853
    %2896 = vmatprep.subr.bf16.mxu0 0
    %2897 = vmatpush1.bf16.msra.mxu0 %v1860
    %2898 = vmatprep.subr.bf16.mxu0 0
    %2899 = vmatpush1.bf16.msra.mxu0 %v1867
    %2900 = vmatprep.subr.bf16.mxu0 0
    %2901 = vmatpush1.bf16.msra.mxu0 %v1874
    %2902 = vmatprep.subr.bf16.mxu0 0
    %2903 = vmatpush1.bf16.msra.mxu0 %v1881
    %2904 = vmatprep.subr.bf16.mxu0 0
    %2905 = vmatpush1.bf16.msra.mxu0 %v1888
    %2906 = vmatprep.subr.bf16.mxu0 0
    %2907 = vmatpush1.bf16.msra.mxu0 %v1895
    %2908 = vmatprep.subr.bf16.mxu0 0
    %2909 = vmatpush1.bf16.msra.mxu0 %v1902
    %2910 = vmatprep.subr.bf16.mxu0 0
    %2911 = vmatpush1.bf16.msra.mxu0 %v1909
    %2912 = vmatprep.subr.bf16.mxu0 0
    %2913 = vmatpush1.bf16.msra.mxu0 %v1916
    %2914 = vmatprep.subr.bf16.mxu0 0
    %2915 = vmatpush1.bf16.msra.mxu0 %v1923
    %2916 = vmatprep.subr.bf16.mxu0 0
    %2917 = vmatpush1.bf16.msra.mxu0 %v1930
    %2918 = vmatprep.subr.bf16.mxu0 0
    %2919 = vmatpush1.bf16.msra.mxu0 %v1937
    %2920 = vmatprep.subr.bf16.mxu0 0
    %2921 = vmatpush1.bf16.msra.mxu0 %v1944
    %2922 = vmatprep.subr.bf16.mxu0 0
    %2923 = vmatpush1.bf16.msra.mxu0 %v1951
    %2924 = vmatprep.mubr.bf16.mxu0 %v77
    %2925 = vmatmul.mubr.bf16.gmra.mrb[0].mxu0 %v76
    %v2926 = vpop.f32.mrb[0].mxu0
    %v2927 = vadd.f32 %v2887, %v2926
    %v2928 = vpop.f32.mrb[0].mxu0
    %v2929 = vpop.f32.mrb[0].mxu0
    %v2930 = vpop.f32.mrb[0].mxu0
    %2931 = vdwg.mxu0
    %2932 = vmatprep.subr.bf16.mxu0 0
    %2933 = vmatpush1.bf16.msra.mxu0 %v1958
    %2934 = vmatprep.subr.bf16.mxu0 0
    %2935 = vmatpush1.bf16.msra.mxu0 %v1965
    %2936 = vmatprep.subr.bf16.mxu0 0
    %2937 = vmatpush1.bf16.msra.mxu0 0
    %2938 = vmatprep.subr.bf16.mxu0 0
    %2939 = vmatpush1.bf16.msra.mxu0 0
    %2940 = vmatprep.subr.bf16.mxu0 0
    %2941 = vmatpush1.bf16.msra.mxu0 0
    %2942 = vmatprep.subr.bf16.mxu0 0
    %2943 = vmatpush1.bf16.msra.mxu0 0
    %2944 = vmatprep.subr.bf16.mxu0 0
    %2945 = vmatpush1.bf16.msra.mxu0 0
    %2946 = vmatprep.subr.bf16.mxu0 0
    %2947 = vmatpush1.bf16.msra.mxu0 0
    %2948 = vmatprep.subr.bf16.mxu0 0
    %2949 = vmatpush1.bf16.msra.mxu0 0
    %2950 = vmatprep.subr.bf16.mxu0 0
    %2951 = vmatpush1.bf16.msra.mxu0 0
    %2952 = vmatprep.subr.bf16.mxu0 0
    %2953 = vmatpush1.bf16.msra.mxu0 0
    %2954 = vmatprep.subr.bf16.mxu0 0
    %2955 = vmatpush1.bf16.msra.mxu0 0
    %2956 = vmatprep.subr.bf16.mxu0 0
    %2957 = vmatpush1.bf16.msra.mxu0 0
    %2958 = vmatprep.subr.bf16.mxu0 0
    %2959 = vmatpush1.bf16.msra.mxu0 0
    %2960 = vmatprep.subr.bf16.mxu0 0
    %2961 = vmatpush1.bf16.msra.mxu0 0
    %2962 = vmatprep.subr.bf16.mxu0 0
    %2963 = vmatpush1.bf16.msra.mxu0 0
    %2964 = vmatprep.mubr.bf16.mxu0 0
    %2965 = vmatmul.mubr.bf16.gmra.mrb[0].mxu0 %v2318
    %v2966 = vpop.f32.mrb[0].mxu0
    %v2967 = vadd.f32 %v2927, %v2966
    %v2968 = vpop.f32.mrb[0].mxu0
    %v2969 = vpop.f32.mrb[0].mxu0
    %v2970 = vpop.f32.mrb[0].mxu0
    %2971 = vdwg.mxu0
    %v2972 = vmax.f32 %v2478, 0.0
    %v2973 = vmax.f32 %v2480, 0.0
    %v2974 = vmax.f32 %v2642, 0.0
    %v2975 = vmax.f32 %v2644, 0.0
    %v2976 = vmax.f32 %v2806, 0.0
    %v2977 = vmax.f32 %v2808, 0.0
    %v2978 = vmax.f32 %v2967, 0.0
    %v2979 = vpack.c.bf16 %v2972, %v2972
    %v2980 = vpack.c.bf16 %v2973, %v2973
    %v2981 = vpack.c.bf16 %v2974, %v2974
    %v2982 = vpack.c.bf16 %v2975, %v2975
    %v2983 = vpack.c.bf16 %v2976, %v2976
    %v2984 = vpack.c.bf16 %v2977, %v2977
    %v2985 = vpack.c.bf16 %v2978, %v2978
    %v2986 = vld [vmem:[%s3] sm:$0xff]
    %v2987 = vld [vmem:[%s3 + $0x8] sm:$0xff]
    %v2988 = vld [vmem:[%s3 + $0x10] sm:$0xff]
    %v2989 = vld [vmem:[%s3 + $0x18] sm:$0xff]
    %v2990 = vld [vmem:[%s3 + $0x20] sm:$0xff]
    %v2991 = vld [vmem:[%s3 + $0x28] sm:$0xff]
    %v2992 = vld [vmem:[%s3 + $0x30] sm:$0xff]
    %v2993 = vld [vmem:[%s3 + $0x38] sm:$0xff]
    %v2994 = vld [vmem:[%s3 + $0x40] sm:$0xff]
    %v2995 = vld [vmem:[%s3 + $0x48] sm:$0xff]
    %v2996 = vld [vmem:[%s3 + $0x50] sm:$0xff]
    %v2997 = vld [vmem:[%s3 + $0x58] sm:$0xff]
    %v2998 = vld [vmem:[%s3 + $0x60] sm:$0xff]
    %v2999 = vld [vmem:[%s3 + $0x68] sm:$0xff]
    %v3000 = vld [vmem:[%s3 + $0x70] sm:$0xff]
    %v3001 = vld [vmem:[%s3 + $0x78] sm:$0xff]
    %v3002 = vld [vmem:[%s3 + $0x80] sm:$0xff]
    %v3003 = vld [vmem:[%s3 + $0x88] sm:$0xff]
    %v3004 = vld [vmem:[%s3 + $0x90] sm:$0xff]
    %v3005 = vld [vmem:[%s3 + $0x98] sm:$0xff]
    %v3006 = vld [vmem:[%s3 + $0xa0] sm:$0xff]
    %v3007 = vld [vmem:[%s3 + $0xa8] sm:$0xff]
    %v3008 = vld [vmem:[%s3 + $0xb0] sm:$0xff]
    %v3009 = vld [vmem:[%s3 + $0xb8] sm:$0xff]
    %v3010 = vld [vmem:[%s3 + $0xc0] sm:$0xff]
    %v3011 = vld [vmem:[%s3 + $0xc8] sm:$0xff]
    %v3012 = vld [vmem:[%s3 + $0xd0] sm:$0xff]
    %v3013 = vld [vmem:[%s3 + $0xd8] sm:$0xff]
    %v3014 = vld [vmem:[%s3 + $0xe0] sm:$0xff]
    %v3015 = vld [vmem:[%s3 + $0xe8] sm:$0xff]
    %v3016 = vld [vmem:[%s3 + $0xf0] sm:$0xff]
    %v3017 = vld [vmem:[%s3 + $0xf8] sm:$0xff]
    %v3018 = vld [vmem:[%s3 + $0x100] sm:$0xff]
    %v3019 = vld [vmem:[%s3 + $0x108] sm:$0xff]
    %v3020 = vld [vmem:[%s3 + $0x110] sm:$0xff]
    %v3021 = vld [vmem:[%s3 + $0x118] sm:$0xff]
    %v3022 = vld [vmem:[%s3 + $0x120] sm:$0xff]
    %v3023 = vld [vmem:[%s3 + $0x128] sm:$0xff]
    %v3024 = vld [vmem:[%s3 + $0x130] sm:$0xff]
    %v3025 = vld [vmem:[%s3 + $0x138] sm:$0xff]
    %v3026 = vld [vmem:[%s3 + $0x140] sm:$0xff]
    %v3027 = vld [vmem:[%s3 + $0x148] sm:$0xff]
    %v3028 = vld [vmem:[%s3 + $0x150] sm:$0xff]
    %v3029 = vld [vmem:[%s3 + $0x158] sm:$0xff]
    %v3030 = vld [vmem:[%s3 + $0x160] sm:$0xff]
    %v3031 = vld [vmem:[%s3 + $0x168] sm:$0xff]
    %v3032 = vld [vmem:[%s3 + $0x170] sm:$0xff]
    %v3033 = vld [vmem:[%s3 + $0x178] sm:$0xff]
    %v3034 = vld [vmem:[%s3 + $0x180] sm:$0xff]
    %v3035 = vld [vmem:[%s3 + $0x188] sm:$0xff]
    %v3036 = vld [vmem:[%s3 + $0x190] sm:$0xff]
    %v3037 = vld [vmem:[%s3 + $0x198] sm:$0xff]
    %v3038 = vld [vmem:[%s3 + $0x1a0] sm:$0xff]
    %v3039 = vld [vmem:[%s3 + $0x1a8] sm:$0xff]
    %v3040 = vld [vmem:[%s3 + $0x1b0] sm:$0xff]
    %v3041 = vld [vmem:[%s3 + $0x1b8] sm:$0xff]
    %v3042 = vld [vmem:[%s3 + $0x1c0] sm:$0xff]
    %v3043 = vld [vmem:[%s3 + $0x1c8] sm:$0xff]
    %v3044 = vld [vmem:[%s3 + $0x1d0] sm:$0xff]
    %v3045 = vld [vmem:[%s3 + $0x1d8] sm:$0xff]
    %v3046 = vld [vmem:[%s3 + $0x1e0] sm:$0xff]
    %v3047 = vld [vmem:[%s3 + $0x1e8] sm:$0xff]
    %v3048 = vld [vmem:[%s3 + $0x1f0] sm:$0xff]
    %v3049 = vld [vmem:[%s3 + $0x1f8] sm:$0xff]
    %v3050 = vld [vmem:[%s3 + $0x200] sm:$0xff]
    %v3051 = vld [vmem:[%s3 + $0x208] sm:$0xff]
    %v3052 = vld [vmem:[%s3 + $0x210] sm:$0xff]
    %v3053 = vld [vmem:[%s3 + $0x218] sm:$0xff]
    %v3054 = vld [vmem:[%s3 + $0x220] sm:$0xff]
    %v3055 = vld [vmem:[%s3 + $0x228] sm:$0xff]
    %v3056 = vld [vmem:[%s3 + $0x230] sm:$0xff]
    %v3057 = vld [vmem:[%s3 + $0x238] sm:$0xff]
    %v3058 = vld [vmem:[%s3 + $0x240] sm:$0xff]
    %v3059 = vld [vmem:[%s3 + $0x248] sm:$0xff]
    %v3060 = vld [vmem:[%s3 + $0x250] sm:$0xff]
    %v3061 = vld [vmem:[%s3 + $0x258] sm:$0xff]
    %v3062 = vld [vmem:[%s3 + $0x260] sm:$0xff]
    %v3063 = vld [vmem:[%s3 + $0x268] sm:$0xff]
    %v3064 = vld [vmem:[%s3 + $0x270] sm:$0xff]
    %v3065 = vld [vmem:[%s3 + $0x278] sm:$0xff]
    %v3066 = vld [vmem:[%s3 + $0x280] sm:$0xff]
    %v3067 = vld [vmem:[%s3 + $0x288] sm:$0xff]
    %v3068 = vld [vmem:[%s3 + $0x290] sm:$0xff]
    %v3069 = vld [vmem:[%s3 + $0x298] sm:$0xff]
    %v3070 = vld [vmem:[%s3 + $0x2a0] sm:$0xff]
    %v3071 = vld [vmem:[%s3 + $0x2a8] sm:$0xff]
    %v3072 = vld [vmem:[%s3 + $0x2b0] sm:$0xff]
    %v3073 = vld [vmem:[%s3 + $0x2b8] sm:$0xff]
    %v3074 = vld [vmem:[%s3 + $0x2c0] sm:$0xff]
    %v3075 = vld [vmem:[%s3 + $0x2c8] sm:$0xff]
    %v3076 = vld [vmem:[%s3 + $0x2d0] sm:$0xff]
    %v3077 = vld [vmem:[%s3 + $0x2d8] sm:$0xff]
    %v3078 = vld [vmem:[%s3 + $0x2e0] sm:$0xff]
    %v3079 = vld [vmem:[%s3 + $0x2e8] sm:$0xff]
    %v3080 = vld [vmem:[%s3 + $0x2f0] sm:$0xff]
    %v3081 = vld [vmem:[%s3 + $0x2f8] sm:$0xff]
    %v3082 = vld [vmem:[%s3 + $0x300] sm:$0xff]
    %v3083 = vld [vmem:[%s3 + $0x308] sm:$0xff]
    %v3084 = vld [vmem:[%s3 + $0x310] sm:$0xff]
    %v3085 = vld [vmem:[%s3 + $0x318] sm:$0xff]
    %v3086 = vld [vmem:[%s3 + $0x320] sm:$0xff]
    %v3087 = vld [vmem:[%s3 + $0x328] sm:$0xff]
    %v3088 = vld [vmem:[%s3 + $0x330] sm:$0xff]
    %v3089 = vld [vmem:[%s3 + $0x338] sm:$0xff]
    %v3090 = vld [vmem:[%s3 + $0x340] sm:$0xff]
    %v3091 = vld [vmem:[%s3 + $0x348] sm:$0xff]
    %v3092 = vld [vmem:[%s3 + $0x350] sm:$0xff]
    %v3093 = vld [vmem:[%s3 + $0x358] sm:$0xff]
    %v3094 = vld [vmem:[%s3 + $0x360] sm:$0xff]
    %v3095 = vld [vmem:[%s3 + $0x368] sm:$0xff]
    %v3096 = vld [vmem:[%s3 + $0x370] sm:$0xff]
    %v3097 = vld [vmem:[%s3 + $0x378] sm:$0xff]
    %v3098 = vld [vmem:[%s3 + $0x380] sm:$0xff]
    %v3099 = vld [vmem:[%s3 + $0x388] sm:$0xff]
    %v3100 = vld [vmem:[%s3 + $0x390] sm:$0xff]
    %v3101 = vld [vmem:[%s3 + $0x398] sm:$0xff]
    %v3102 = vld [vmem:[%s3 + $0x3a0] sm:$0xff]
    %v3103 = vld [vmem:[%s3 + $0x3a8] sm:$0xff]
    %v3104 = vld [vmem:[%s3 + $0x3b0] sm:$0xff]
    %v3105 = vld [vmem:[%s3 + $0x3b8] sm:$0xff]
    %v3106 = vld [vmem:[%s3 + $0x3c0] sm:$0xff]
    %v3107 = vld [vmem:[%s3 + $0x3c8] sm:$0xff]
    %v3108 = vld [vmem:[%s3 + $0x3d0] sm:$0xff]
    %v3109 = vld [vmem:[%s3 + $0x3d8] sm:$0xff]
    %v3110 = vld [vmem:[%s3 + $0x3e0] sm:$0xff]
    %v3111 = vld [vmem:[%s3 + $0x3e8] sm:$0xff]
    %v3112 = vld [vmem:[%s3 + $0x3f0] sm:$0xff]
    %v3113 = vld [vmem:[%s3 + $0x3f8] sm:$0xff]
    %v3114 = vld [vmem:[%s3 + $0x400] sm:$0xff]
    %v3115 = vld [vmem:[%s3 + $0x408] sm:$0xff]
    %v3116 = vld [vmem:[%s3 + $0x410] sm:$0xff]
    %v3117 = vld [vmem:[%s3 + $0x418] sm:$0xff]
    %v3118 = vld [vmem:[%s3 + $0x420] sm:$0xff]
    %v3119 = vld [vmem:[%s3 + $0x428] sm:$0xff]
    %v3120 = vld [vmem:[%s3 + $0x430] sm:$0xff]
    %v3121 = vld [vmem:[%s3 + $0x438] sm:$0xff]
    %v3122 = vld [vmem:[%s3 + $0x440] sm:$0xff]
    %v3123 = vld [vmem:[%s3 + $0x448] sm:$0xff]
    %v3124 = vld [vmem:[%s3 + $0x450] sm:$0xff]
    %v3125 = vld [vmem:[%s3 + $0x458] sm:$0xff]
    %v3126 = vld [vmem:[%s3 + $0x460] sm:$0xff]
    %v3127 = vld [vmem:[%s3 + $0x468] sm:$0xff]
    %v3128 = vld [vmem:[%s3 + $0x470] sm:$0xff]
    %v3129 = vld [vmem:[%s3 + $0x478] sm:$0xff]
    %v3130 = vld [vmem:[%s3 + $0x480] sm:$0xff]
    %v3131 = vld [vmem:[%s3 + $0x488] sm:$0xff]
    %v3132 = vld [vmem:[%s3 + $0x490] sm:$0xff]
    %v3133 = vld [vmem:[%s3 + $0x498] sm:$0xff]
    %v3134 = vld [vmem:[%s3 + $0x4a0] sm:$0xff]
    %v3135 = vld [vmem:[%s3 + $0x4a8] sm:$0xff]
    %v3136 = vld [vmem:[%s3 + $0x4b0] sm:$0xff]
    %v3137 = vld [vmem:[%s3 + $0x4b8] sm:$0xff]
    %v3138 = vld [vmem:[%s3 + $0x4c0] sm:$0xff]
    %v3139 = vld [vmem:[%s3 + $0x4c8] sm:$0xff]
    %v3140 = vld [vmem:[%s3 + $0x4d0] sm:$0xff]
    %v3141 = vld [vmem:[%s3 + $0x4d8] sm:$0xff]
    %v3142 = vld [vmem:[%s3 + $0x4e0] sm:$0xff]
    %v3143 = vld [vmem:[%s3 + $0x4e8] sm:$0xff]
    %v3144 = vld [vmem:[%s3 + $0x4f0] sm:$0xff]
    %v3145 = vld [vmem:[%s3 + $0x4f8] sm:$0xff]
    %v3146 = vld [vmem:[%s3 + $0x500] sm:$0xff]
    %v3147 = vld [vmem:[%s3 + $0x508] sm:$0xff]
    %v3148 = vld [vmem:[%s3 + $0x510] sm:$0xff]
    %v3149 = vld [vmem:[%s3 + $0x518] sm:$0xff]
    %v3150 = vld [vmem:[%s3 + $0x520] sm:$0xff]
    %v3151 = vld [vmem:[%s3 + $0x528] sm:$0xff]
    %v3152 = vld [vmem:[%s3 + $0x530] sm:$0xff]
    %v3153 = vld [vmem:[%s3 + $0x538] sm:$0xff]
    %v3154 = vld [vmem:[%s3 + $0x540] sm:$0xff]
    %v3155 = vld [vmem:[%s3 + $0x548] sm:$0xff]
    %v3156 = vld [vmem:[%s3 + $0x550] sm:$0xff]
    %v3157 = vld [vmem:[%s3 + $0x558] sm:$0xff]
    %v3158 = vld [vmem:[%s3 + $0x560] sm:$0xff]
    %v3159 = vld [vmem:[%s3 + $0x568] sm:$0xff]
    %v3160 = vld [vmem:[%s3 + $0x570] sm:$0xff]
    %v3161 = vld [vmem:[%s3 + $0x578] sm:$0xff]
    %v3162 = vld [vmem:[%s3 + $0x580] sm:$0xff]
    %v3163 = vld [vmem:[%s3 + $0x588] sm:$0xff]
    %v3164 = vld [vmem:[%s3 + $0x590] sm:$0xff]
    %v3165 = vld [vmem:[%s3 + $0x598] sm:$0xff]
    %v3166 = vld [vmem:[%s3 + $0x5a0] sm:$0xff]
    %v3167 = vld [vmem:[%s3 + $0x5a8] sm:$0xff]
    %v3168 = vld [vmem:[%s3 + $0x5b0] sm:$0xff]
    %v3169 = vld [vmem:[%s3 + $0x5b8] sm:$0xff]
    %v3170 = vld [vmem:[%s3 + $0x5c0] sm:$0xff]
    %v3171 = vld [vmem:[%s3 + $0x5c8] sm:$0xff]
    %v3172 = vld [vmem:[%s3 + $0x5d0] sm:$0xff]
    %v3173 = vld [vmem:[%s3 + $0x5d8] sm:$0xff]
    %v3174 = vld [vmem:[%s3 + $0x5e0] sm:$0xff]
    %v3175 = vld [vmem:[%s3 + $0x5e8] sm:$0xff]
    %v3176 = vld [vmem:[%s3 + $0x5f0] sm:$0xff]
    %v3177 = vld [vmem:[%s3 + $0x5f8] sm:$0xff]
    %v3178 = vld [vmem:[%s3 + $0x600] sm:$0xff]
    %v3179 = vld [vmem:[%s3 + $0x608] sm:$0xff]
    %v3180 = vld [vmem:[%s3 + $0x610] sm:$0xff]
    %v3181 = vld [vmem:[%s3 + $0x618] sm:$0xff]
    %v3182 = vld [vmem:[%s3 + $0x620] sm:$0xff]
    %v3183 = vld [vmem:[%s3 + $0x628] sm:$0xff]
    %v3184 = vld [vmem:[%s3 + $0x630] sm:$0xff]
    %v3185 = vld [vmem:[%s3 + $0x638] sm:$0xff]
    %v3186 = vld [vmem:[%s4] sm:$0xf]
    %v3188 = vlaneseq
    %v3189 = vshrl.u32 %v3188, 7
    %v3190 = vsub.s32 0, %v3189
    %v3191 = vrot.slane %v3186, %v3190
    %v3192 = vlaneseq
    %v3193 = vshrl.u32 %v3192, 7
    %v3194 = vsub.s32 1, %v3193
    %v3195 = vrot.slane %v3186, %v3194
    %v3196 = vlaneseq
    %v3197 = vshrl.u32 %v3196, 7
    %v3198 = vsub.s32 2, %v3197
    %v3199 = vrot.slane %v3186, %v3198
    %v3200 = vlaneseq
    %v3201 = vshrl.u32 %v3200, 7
    %v3202 = vsub.s32 3, %v3201
    %v3203 = vrot.slane %v3186, %v3202
    %v3408 = vunpack.c.l.b16 %v2986
    %v3409 = vunpack.c.h.b16 %v2986
    %v3410 = vunpack.c.l.b16 %v2987
    %v3411 = vunpack.c.h.b16 %v2987
    %v3412 = vunpack.c.l.b16 %v2988
    %v3413 = vunpack.c.h.b16 %v2988
    %v3414 = vunpack.c.l.b16 %v2989
    %v3415 = vunpack.c.h.b16 %v2989
    %v3416 = vunpack.c.l.b16 %v2990
    %v3417 = vunpack.c.h.b16 %v2990
    %v3418 = vunpack.c.l.b16 %v2991
    %v3419 = vunpack.c.h.b16 %v2991
    %v3420 = vunpack.c.l.b16 %v2992
    %v3421 = vunpack.c.h.b16 %v2992
    %v3422 = vunpack.c.l.b16 %v2993
    %v3423 = vunpack.c.h.b16 %v2993
    %v3424 = vunpack.c.l.b16 %v2994
    %v3425 = vunpack.c.h.b16 %v2994
    %v3426 = vunpack.c.l.b16 %v2995
    %v3427 = vunpack.c.h.b16 %v2995
    %v3428 = vunpack.c.l.b16 %v2996
    %v3429 = vunpack.c.h.b16 %v2996
    %v3430 = vunpack.c.l.b16 %v2997
    %v3431 = vunpack.c.h.b16 %v2997
    %v3432 = vunpack.c.l.b16 %v2998
    %v3433 = vunpack.c.h.b16 %v2998
    %v3434 = vunpack.c.l.b16 %v2999
    %v3435 = vunpack.c.h.b16 %v2999
    %v3436 = vunpack.c.l.b16 %v3000
    %v3437 = vunpack.c.h.b16 %v3000
    %v3438 = vunpack.c.l.b16 %v3001
    %v3439 = vunpack.c.h.b16 %v3001
    %v3440 = vunpack.c.l.b16 %v3002
    %v3441 = vunpack.c.h.b16 %v3002
    %v3442 = vunpack.c.l.b16 %v3003
    %v3443 = vunpack.c.h.b16 %v3003
    %v3444 = vunpack.c.l.b16 %v3004
    %v3445 = vunpack.c.h.b16 %v3004
    %v3446 = vunpack.c.l.b16 %v3005
    %v3447 = vunpack.c.h.b16 %v3005
    %v3448 = vunpack.c.l.b16 %v3006
    %v3449 = vunpack.c.h.b16 %v3006
    %v3450 = vunpack.c.l.b16 %v3007
    %v3451 = vunpack.c.h.b16 %v3007
    %v3452 = vunpack.c.l.b16 %v3008
    %v3453 = vunpack.c.h.b16 %v3008
    %v3454 = vunpack.c.l.b16 %v3009
    %v3455 = vunpack.c.h.b16 %v3009
    %v3456 = vunpack.c.l.b16 %v3010
    %v3457 = vunpack.c.h.b16 %v3010
    %v3458 = vunpack.c.l.b16 %v3011
    %v3459 = vunpack.c.h.b16 %v3011
    %v3460 = vunpack.c.l.b16 %v3012
    %v3461 = vunpack.c.h.b16 %v3012
    %v3462 = vunpack.c.l.b16 %v3013
    %v3463 = vunpack.c.h.b16 %v3013
    %v3464 = vunpack.c.l.b16 %v3014
    %v3465 = vunpack.c.h.b16 %v3014
    %v3466 = vunpack.c.l.b16 %v3015
    %v3467 = vunpack.c.h.b16 %v3015
    %v3468 = vunpack.c.l.b16 %v3016
    %v3469 = vunpack.c.h.b16 %v3016
    %v3470 = vunpack.c.l.b16 %v3017
    %v3471 = vunpack.c.h.b16 %v3017
    %v3472 = vunpack.c.l.b16 %v3018
    %v3473 = vunpack.c.h.b16 %v3018
    %v3474 = vunpack.c.l.b16 %v3019
    %v3475 = vunpack.c.h.b16 %v3019
    %v3476 = vunpack.c.l.b16 %v3020
    %v3477 = vunpack.c.h.b16 %v3020
    %v3478 = vunpack.c.l.b16 %v3021
    %v3479 = vunpack.c.h.b16 %v3021
    %v3480 = vunpack.c.l.b16 %v3022
    %v3481 = vunpack.c.h.b16 %v3022
    %v3482 = vunpack.c.l.b16 %v3023
    %v3483 = vunpack.c.h.b16 %v3023
    %v3484 = vunpack.c.l.b16 %v3024
    %v3485 = vunpack.c.h.b16 %v3024
    %v3486 = vunpack.c.l.b16 %v3025
    %v3487 = vunpack.c.h.b16 %v3025
    %v3488 = vunpack.c.l.b16 %v3026
    %v3489 = vunpack.c.h.b16 %v3026
    %v3490 = vunpack.c.l.b16 %v3027
    %v3491 = vunpack.c.h.b16 %v3027
    %v3492 = vunpack.c.l.b16 %v3028
    %v3493 = vunpack.c.h.b16 %v3028
    %v3494 = vunpack.c.l.b16 %v3029
    %v3495 = vunpack.c.h.b16 %v3029
    %v3496 = vunpack.c.l.b16 %v3030
    %v3497 = vunpack.c.h.b16 %v3030
    %v3498 = vunpack.c.l.b16 %v3031
    %v3499 = vunpack.c.h.b16 %v3031
    %v3500 = vunpack.c.l.b16 %v3032
    %v3501 = vunpack.c.h.b16 %v3032
    %v3502 = vunpack.c.l.b16 %v3033
    %v3503 = vunpack.c.h.b16 %v3033
    %v3504 = vunpack.c.l.b16 %v3034
    %v3505 = vunpack.c.h.b16 %v3034
    %v3506 = vunpack.c.l.b16 %v3035
    %v3507 = vunpack.c.h.b16 %v3035
    %v3508 = vunpack.c.l.b16 %v3036
    %v3509 = vunpack.c.h.b16 %v3036
    %v3510 = vunpack.c.l.b16 %v3037
    %v3511 = vunpack.c.h.b16 %v3037
    %v3512 = vunpack.c.l.b16 %v3038
    %v3513 = vunpack.c.h.b16 %v3038
    %v3514 = vunpack.c.l.b16 %v3039
    %v3515 = vunpack.c.h.b16 %v3039
    %v3516 = vunpack.c.l.b16 %v3040
    %v3517 = vunpack.c.h.b16 %v3040
    %v3518 = vunpack.c.l.b16 %v3041
    %v3519 = vunpack.c.h.b16 %v3041
    %v3520 = vunpack.c.l.b16 %v3042
    %v3521 = vunpack.c.h.b16 %v3042
    %v3522 = vunpack.c.l.b16 %v3043
    %v3523 = vunpack.c.h.b16 %v3043
    %v3524 = vunpack.c.l.b16 %v3044
    %v3525 = vunpack.c.h.b16 %v3044
    %v3526 = vunpack.c.l.b16 %v3045
    %v3527 = vunpack.c.h.b16 %v3045
    %v3528 = vunpack.c.l.b16 %v3046
    %v3529 = vunpack.c.h.b16 %v3046
    %v3530 = vunpack.c.l.b16 %v3047
    %v3531 = vunpack.c.h.b16 %v3047
    %v3532 = vunpack.c.l.b16 %v3048
    %v3533 = vunpack.c.h.b16 %v3048
    %v3534 = vunpack.c.l.b16 %v3049
    %v3535 = vunpack.c.h.b16 %v3049
    %v3536 = vunpack.c.l.b16 %v3050
    %v3537 = vunpack.c.h.b16 %v3050
    %v3538 = vunpack.c.l.b16 %v3051
    %v3539 = vunpack.c.h.b16 %v3051
    %v3540 = vunpack.c.l.b16 %v3052
    %v3541 = vunpack.c.h.b16 %v3052
    %v3542 = vunpack.c.l.b16 %v3053
    %v3543 = vunpack.c.h.b16 %v3053
    %v3544 = vunpack.c.l.b16 %v3054
    %v3545 = vunpack.c.h.b16 %v3054
    %v3546 = vunpack.c.l.b16 %v3055
    %v3547 = vunpack.c.h.b16 %v3055
    %v3548 = vunpack.c.l.b16 %v3056
    %v3549 = vunpack.c.h.b16 %v3056
    %v3550 = vunpack.c.l.b16 %v3057
    %v3551 = vunpack.c.h.b16 %v3057
    %v3552 = vunpack.c.l.b16 %v3058
    %v3553 = vunpack.c.h.b16 %v3058
    %v3554 = vunpack.c.l.b16 %v3059
    %v3555 = vunpack.c.h.b16 %v3059
    %v3556 = vunpack.c.l.b16 %v3060
    %v3557 = vunpack.c.h.b16 %v3060
    %v3558 = vunpack.c.l.b16 %v3061
    %v3559 = vunpack.c.h.b16 %v3061
    %v3560 = vunpack.c.l.b16 %v3062
    %v3561 = vunpack.c.h.b16 %v3062
    %v3562 = vunpack.c.l.b16 %v3063
    %v3563 = vunpack.c.h.b16 %v3063
    %v3564 = vunpack.c.l.b16 %v3064
    %v3565 = vunpack.c.h.b16 %v3064
    %v3566 = vunpack.c.l.b16 %v3065
    %v3567 = vunpack.c.h.b16 %v3065
    %v3568 = vunpack.c.l.b16 %v3066
    %v3569 = vunpack.c.h.b16 %v3066
    %v3570 = vunpack.c.l.b16 %v3067
    %v3571 = vunpack.c.h.b16 %v3067
    %v3572 = vunpack.c.l.b16 %v3068
    %v3573 = vunpack.c.h.b16 %v3068
    %v3574 = vunpack.c.l.b16 %v3069
    %v3575 = vunpack.c.h.b16 %v3069
    %v3576 = vunpack.c.l.b16 %v3070
    %v3577 = vunpack.c.h.b16 %v3070
    %v3578 = vunpack.c.l.b16 %v3071
    %v3579 = vunpack.c.h.b16 %v3071
    %v3580 = vunpack.c.l.b16 %v3072
    %v3581 = vunpack.c.h.b16 %v3072
    %v3582 = vunpack.c.l.b16 %v3073
    %v3583 = vunpack.c.h.b16 %v3073
    %v3584 = vunpack.c.l.b16 %v3074
    %v3585 = vunpack.c.h.b16 %v3074
    %v3586 = vunpack.c.l.b16 %v3075
    %v3587 = vunpack.c.h.b16 %v3075
    %v3588 = vunpack.c.l.b16 %v3076
    %v3589 = vunpack.c.h.b16 %v3076
    %v3590 = vunpack.c.l.b16 %v3077
    %v3591 = vunpack.c.h.b16 %v3077
    %v3592 = vunpack.c.l.b16 %v3078
    %v3593 = vunpack.c.h.b16 %v3078
    %v3594 = vunpack.c.l.b16 %v3079
    %v3595 = vunpack.c.h.b16 %v3079
    %v3596 = vunpack.c.l.b16 %v3080
    %v3597 = vunpack.c.h.b16 %v3080
    %v3598 = vunpack.c.l.b16 %v3081
    %v3599 = vunpack.c.h.b16 %v3081
    %v3600 = vunpack.c.l.b16 %v3082
    %v3601 = vunpack.c.h.b16 %v3082
    %v3602 = vunpack.c.l.b16 %v3083
    %v3603 = vunpack.c.h.b16 %v3083
    %v3604 = vunpack.c.l.b16 %v3084
    %v3605 = vunpack.c.h.b16 %v3084
    %v3606 = vunpack.c.l.b16 %v3085
    %v3607 = vunpack.c.h.b16 %v3085
    %v3608 = vunpack.c.l.b16 %v3086
    %v3609 = vunpack.c.h.b16 %v3086
    %v3610 = vunpack.c.l.b16 %v3087
    %v3611 = vunpack.c.h.b16 %v3087
    %v3612 = vunpack.c.l.b16 %v3088
    %v3613 = vunpack.c.h.b16 %v3088
    %v3614 = vunpack.c.l.b16 %v3089
    %v3615 = vunpack.c.h.b16 %v3089
    %v3616 = vunpack.c.l.b16 %v3090
    %v3617 = vunpack.c.h.b16 %v3090
    %v3618 = vunpack.c.l.b16 %v3091
    %v3619 = vunpack.c.h.b16 %v3091
    %v3620 = vunpack.c.l.b16 %v3092
    %v3621 = vunpack.c.h.b16 %v3092
    %v3622 = vunpack.c.l.b16 %v3093
    %v3623 = vunpack.c.h.b16 %v3093
    %v3624 = vunpack.c.l.b16 %v3094
    %v3625 = vunpack.c.h.b16 %v3094
    %v3626 = vunpack.c.l.b16 %v3095
    %v3627 = vunpack.c.h.b16 %v3095
    %v3628 = vunpack.c.l.b16 %v3096
    %v3629 = vunpack.c.h.b16 %v3096
    %v3630 = vunpack.c.l.b16 %v3097
    %v3631 = vunpack.c.h.b16 %v3097
    %v3632 = vunpack.c.l.b16 %v3098
    %v3633 = vunpack.c.h.b16 %v3098
    %v3634 = vunpack.c.l.b16 %v3099
    %v3635 = vunpack.c.h.b16 %v3099
    %v3636 = vunpack.c.l.b16 %v3100
    %v3637 = vunpack.c.h.b16 %v3100
    %v3638 = vunpack.c.l.b16 %v3101
    %v3639 = vunpack.c.h.b16 %v3101
    %v3640 = vunpack.c.l.b16 %v3102
    %v3641 = vunpack.c.h.b16 %v3102
    %v3642 = vunpack.c.l.b16 %v3103
    %v3643 = vunpack.c.h.b16 %v3103
    %v3644 = vunpack.c.l.b16 %v3104
    %v3645 = vunpack.c.h.b16 %v3104
    %v3646 = vunpack.c.l.b16 %v3105
    %v3647 = vunpack.c.h.b16 %v3105
    %v3648 = vunpack.c.l.b16 %v3106
    %v3649 = vunpack.c.h.b16 %v3106
    %v3650 = vunpack.c.l.b16 %v3107
    %v3651 = vunpack.c.h.b16 %v3107
    %v3652 = vunpack.c.l.b16 %v3108
    %v3653 = vunpack.c.h.b16 %v3108
    %v3654 = vunpack.c.l.b16 %v3109
    %v3655 = vunpack.c.h.b16 %v3109
    %v3656 = vunpack.c.l.b16 %v3110
    %v3657 = vunpack.c.h.b16 %v3110
    %v3658 = vunpack.c.l.b16 %v3111
    %v3659 = vunpack.c.h.b16 %v3111
    %v3660 = vunpack.c.l.b16 %v3112
    %v3661 = vunpack.c.h.b16 %v3112
    %v3662 = vunpack.c.l.b16 %v3113
    %v3663 = vunpack.c.h.b16 %v3113
    %v3664 = vunpack.c.l.b16 %v3114
    %v3665 = vunpack.c.h.b16 %v3114
    %v3666 = vunpack.c.l.b16 %v3115
    %v3667 = vunpack.c.h.b16 %v3115
    %v3668 = vunpack.c.l.b16 %v3116
    %v3669 = vunpack.c.h.b16 %v3116
    %v3670 = vunpack.c.l.b16 %v3117
    %v3671 = vunpack.c.h.b16 %v3117
    %v3672 = vunpack.c.l.b16 %v3118
    %v3673 = vunpack.c.h.b16 %v3118
    %v3674 = vunpack.c.l.b16 %v3119
    %v3675 = vunpack.c.h.b16 %v3119
    %v3676 = vunpack.c.l.b16 %v3120
    %v3677 = vunpack.c.h.b16 %v3120
    %v3678 = vunpack.c.l.b16 %v3121
    %v3679 = vunpack.c.h.b16 %v3121
    %v3680 = vunpack.c.l.b16 %v3122
    %v3681 = vunpack.c.h.b16 %v3122
    %v3682 = vunpack.c.l.b16 %v3123
    %v3683 = vunpack.c.h.b16 %v3123
    %v3684 = vunpack.c.l.b16 %v3124
    %v3685 = vunpack.c.h.b16 %v3124
    %v3686 = vunpack.c.l.b16 %v3125
    %v3687 = vunpack.c.h.b16 %v3125
    %v3688 = vunpack.c.l.b16 %v3126
    %v3689 = vunpack.c.h.b16 %v3126
    %v3690 = vunpack.c.l.b16 %v3127
    %v3691 = vunpack.c.h.b16 %v3127
    %v3692 = vunpack.c.l.b16 %v3128
    %v3693 = vunpack.c.h.b16 %v3128
    %v3694 = vunpack.c.l.b16 %v3129
    %v3695 = vunpack.c.h.b16 %v3129
    %v3696 = vunpack.c.l.b16 %v3130
    %v3697 = vunpack.c.h.b16 %v3130
    %v3698 = vunpack.c.l.b16 %v3131
    %v3699 = vunpack.c.h.b16 %v3131
    %v3700 = vunpack.c.l.b16 %v3132
    %v3701 = vunpack.c.h.b16 %v3132
    %v3702 = vunpack.c.l.b16 %v3133
    %v3703 = vunpack.c.h.b16 %v3133
    %v3704 = vunpack.c.l.b16 %v3134
    %v3705 = vunpack.c.h.b16 %v3134
    %v3706 = vunpack.c.l.b16 %v3135
    %v3707 = vunpack.c.h.b16 %v3135
    %v3708 = vunpack.c.l.b16 %v3136
    %v3709 = vunpack.c.h.b16 %v3136
    %v3710 = vunpack.c.l.b16 %v3137
    %v3711 = vunpack.c.h.b16 %v3137
    %v3712 = vunpack.c.l.b16 %v3138
    %v3713 = vunpack.c.h.b16 %v3138
    %v3714 = vunpack.c.l.b16 %v3139
    %v3715 = vunpack.c.h.b16 %v3139
    %v3716 = vunpack.c.l.b16 %v3140
    %v3717 = vunpack.c.h.b16 %v3140
    %v3718 = vunpack.c.l.b16 %v3141
    %v3719 = vunpack.c.h.b16 %v3141
    %v3720 = vunpack.c.l.b16 %v3142
    %v3721 = vunpack.c.h.b16 %v3142
    %v3722 = vunpack.c.l.b16 %v3143
    %v3723 = vunpack.c.h.b16 %v3143
    %v3724 = vunpack.c.l.b16 %v3144
    %v3725 = vunpack.c.h.b16 %v3144
    %v3726 = vunpack.c.l.b16 %v3145
    %v3727 = vunpack.c.h.b16 %v3145
    %v3728 = vunpack.c.l.b16 %v3146
    %v3729 = vunpack.c.h.b16 %v3146
    %v3730 = vunpack.c.l.b16 %v3147
    %v3731 = vunpack.c.h.b16 %v3147
    %v3732 = vunpack.c.l.b16 %v3148
    %v3733 = vunpack.c.h.b16 %v3148
    %v3734 = vunpack.c.l.b16 %v3149
    %v3735 = vunpack.c.h.b16 %v3149
    %v3736 = vunpack.c.l.b16 %v3150
    %v3737 = vunpack.c.h.b16 %v3150
    %v3738 = vunpack.c.l.b16 %v3151
    %v3739 = vunpack.c.h.b16 %v3151
    %v3740 = vunpack.c.l.b16 %v3152
    %v3741 = vunpack.c.h.b16 %v3152
    %v3742 = vunpack.c.l.b16 %v3153
    %v3743 = vunpack.c.h.b16 %v3153
    %v3744 = vunpack.c.l.b16 %v3154
    %v3745 = vunpack.c.h.b16 %v3154
    %v3746 = vunpack.c.l.b16 %v3155
    %v3747 = vunpack.c.h.b16 %v3155
    %v3748 = vunpack.c.l.b16 %v3156
    %v3749 = vunpack.c.h.b16 %v3156
    %v3750 = vunpack.c.l.b16 %v3157
    %v3751 = vunpack.c.h.b16 %v3157
    %v3752 = vunpack.c.l.b16 %v3158
    %v3753 = vunpack.c.h.b16 %v3158
    %v3754 = vunpack.c.l.b16 %v3159
    %v3755 = vunpack.c.h.b16 %v3159
    %v3756 = vunpack.c.l.b16 %v3160
    %v3757 = vunpack.c.h.b16 %v3160
    %v3758 = vunpack.c.l.b16 %v3161
    %v3759 = vunpack.c.h.b16 %v3161
    %v3760 = vunpack.c.l.b16 %v3162
    %v3761 = vunpack.c.h.b16 %v3162
    %v3762 = vunpack.c.l.b16 %v3163
    %v3763 = vunpack.c.h.b16 %v3163
    %v3764 = vunpack.c.l.b16 %v3164
    %v3765 = vunpack.c.h.b16 %v3164
    %v3766 = vunpack.c.l.b16 %v3165
    %v3767 = vunpack.c.h.b16 %v3165
    %v3768 = vunpack.c.l.b16 %v3166
    %v3769 = vunpack.c.h.b16 %v3166
    %v3770 = vunpack.c.l.b16 %v3167
    %v3771 = vunpack.c.h.b16 %v3167
    %v3772 = vunpack.c.l.b16 %v3168
    %v3773 = vunpack.c.h.b16 %v3168
    %v3774 = vunpack.c.l.b16 %v3169
    %v3775 = vunpack.c.h.b16 %v3169
    %v3776 = vunpack.c.l.b16 %v3170
    %v3777 = vunpack.c.h.b16 %v3170
    %v3778 = vunpack.c.l.b16 %v3171
    %v3779 = vunpack.c.h.b16 %v3171
    %v3780 = vunpack.c.l.b16 %v3172
    %v3781 = vunpack.c.h.b16 %v3172
    %v3782 = vunpack.c.l.b16 %v3173
    %v3783 = vunpack.c.h.b16 %v3173
    %v3784 = vunpack.c.l.b16 %v3174
    %v3785 = vunpack.c.h.b16 %v3174
    %v3786 = vunpack.c.l.b16 %v3175
    %v3787 = vunpack.c.h.b16 %v3175
    %v3788 = vunpack.c.l.b16 %v3176
    %v3789 = vunpack.c.h.b16 %v3176
    %v3790 = vunpack.c.l.b16 %v3177
    %v3791 = vunpack.c.h.b16 %v3177
    %v3792 = vunpack.c.l.b16 %v3178
    %v3793 = vunpack.c.h.b16 %v3178
    %v3794 = vunpack.c.l.b16 %v3179
    %v3795 = vunpack.c.h.b16 %v3179
    %v3796 = vunpack.c.l.b16 %v3180
    %v3797 = vunpack.c.h.b16 %v3180
    %v3798 = vunpack.c.l.b16 %v3181
    %v3799 = vunpack.c.h.b16 %v3181
    %v3800 = vunpack.c.l.b16 %v3182
    %v3801 = vunpack.c.h.b16 %v3182
    %v3802 = vunpack.c.l.b16 %v3183
    %v3803 = vunpack.c.h.b16 %v3183
    %v3804 = vunpack.c.l.b16 %v3184
    %v3805 = vunpack.c.h.b16 %v3184
    %v3806 = vunpack.c.l.b16 %v3185
    %v3807 = vunpack.c.h.b16 %v3185
    %v3808 = vpack.c.b16 %v3412, %v3408
    %v3809 = vpack.c.b16 %v3413, %v3409
    %v3810 = vpack.c.b16 %v3414, %v3410
    %v3811 = vpack.c.b16 %v3415, %v3411
    %v3812 = vpack.c.b16 %v3420, %v3416
    %v3813 = vpack.c.b16 %v3421, %v3417
    %v3814 = vpack.c.b16 %v3422, %v3418
    %v3815 = vpack.c.b16 %v3423, %v3419
    %v3816 = vpack.c.b16 %v3428, %v3424
    %v3817 = vpack.c.b16 %v3429, %v3425
    %v3818 = vpack.c.b16 %v3430, %v3426
    %v3819 = vpack.c.b16 %v3431, %v3427
    %v3820 = vpack.c.b16 %v3436, %v3432
    %v3821 = vpack.c.b16 %v3437, %v3433
    %v3822 = vpack.c.b16 %v3438, %v3434
    %v3823 = vpack.c.b16 %v3439, %v3435
    %v3824 = vpack.c.b16 %v3444, %v3440
    %v3825 = vpack.c.b16 %v3445, %v3441
    %v3826 = vpack.c.b16 %v3446, %v3442
    %v3827 = vpack.c.b16 %v3447, %v3443
    %v3828 = vpack.c.b16 %v3452, %v3448
    %v3829 = vpack.c.b16 %v3453, %v3449
    %v3830 = vpack.c.b16 %v3454, %v3450
    %v3831 = vpack.c.b16 %v3455, %v3451
    %v3832 = vpack.c.b16 %v3460, %v3456
    %v3833 = vpack.c.b16 %v3461, %v3457
    %v3834 = vpack.c.b16 %v3462, %v3458
    %v3835 = vpack.c.b16 %v3463, %v3459
    %v3836 = vpack.c.b16 %v3468, %v3464
    %v3837 = vpack.c.b16 %v3469, %v3465
    %v3838 = vpack.c.b16 %v3470, %v3466
    %v3839 = vpack.c.b16 %v3471, %v3467
    %v3840 = vpack.c.b16 %v3476, %v3472
    %v3841 = vpack.c.b16 %v3477, %v3473
    %v3842 = vpack.c.b16 %v3478, %v3474
    %v3843 = vpack.c.b16 %v3479, %v3475
    %v3844 = vpack.c.b16 %v3484, %v3480
    %v3845 = vpack.c.b16 %v3485, %v3481
    %v3846 = vpack.c.b16 %v3486, %v3482
    %v3847 = vpack.c.b16 %v3487, %v3483
    %v3848 = vpack.c.b16 %v3492, %v3488
    %v3849 = vpack.c.b16 %v3493, %v3489
    %v3850 = vpack.c.b16 %v3494, %v3490
    %v3851 = vpack.c.b16 %v3495, %v3491
    %v3852 = vpack.c.b16 %v3500, %v3496
    %v3853 = vpack.c.b16 %v3501, %v3497
    %v3854 = vpack.c.b16 %v3502, %v3498
    %v3855 = vpack.c.b16 %v3503, %v3499
    %v3856 = vpack.c.b16 %v3508, %v3504
    %v3857 = vpack.c.b16 %v3509, %v3505
    %v3858 = vpack.c.b16 %v3510, %v3506
    %v3859 = vpack.c.b16 %v3511, %v3507
    %v3860 = vpack.c.b16 %v3516, %v3512
    %v3861 = vpack.c.b16 %v3517, %v3513
    %v3862 = vpack.c.b16 %v3518, %v3514
    %v3863 = vpack.c.b16 %v3519, %v3515
    %v3864 = vpack.c.b16 %v3524, %v3520
    %v3865 = vpack.c.b16 %v3525, %v3521
    %v3866 = vpack.c.b16 %v3526, %v3522
    %v3867 = vpack.c.b16 %v3527, %v3523
    %v3868 = vpack.c.b16 %v3532, %v3528
    %v3869 = vpack.c.b16 %v3533, %v3529
    %v3870 = vpack.c.b16 %v3534, %v3530
    %v3871 = vpack.c.b16 %v3535, %v3531
    %v3872 = vpack.c.b16 %v3540, %v3536
    %v3873 = vpack.c.b16 %v3541, %v3537
    %v3874 = vpack.c.b16 %v3542, %v3538
    %v3875 = vpack.c.b16 %v3543, %v3539
    %v3876 = vpack.c.b16 %v3548, %v3544
    %v3877 = vpack.c.b16 %v3549, %v3545
    %v3878 = vpack.c.b16 %v3550, %v3546
    %v3879 = vpack.c.b16 %v3551, %v3547
    %v3880 = vpack.c.b16 %v3556, %v3552
    %v3881 = vpack.c.b16 %v3557, %v3553
    %v3882 = vpack.c.b16 %v3558, %v3554
    %v3883 = vpack.c.b16 %v3559, %v3555
    %v3884 = vpack.c.b16 %v3564, %v3560
    %v3885 = vpack.c.b16 %v3565, %v3561
    %v3886 = vpack.c.b16 %v3566, %v3562
    %v3887 = vpack.c.b16 %v3567, %v3563
    %v3888 = vpack.c.b16 %v3572, %v3568
    %v3889 = vpack.c.b16 %v3573, %v3569
    %v3890 = vpack.c.b16 %v3574, %v3570
    %v3891 = vpack.c.b16 %v3575, %v3571
    %v3892 = vpack.c.b16 %v3580, %v3576
    %v3893 = vpack.c.b16 %v3581, %v3577
    %v3894 = vpack.c.b16 %v3582, %v3578
    %v3895 = vpack.c.b16 %v3583, %v3579
    %v3896 = vpack.c.b16 %v3588, %v3584
    %v3897 = vpack.c.b16 %v3589, %v3585
    %v3898 = vpack.c.b16 %v3590, %v3586
    %v3899 = vpack.c.b16 %v3591, %v3587
    %v3900 = vpack.c.b16 %v3596, %v3592
    %v3901 = vpack.c.b16 %v3597, %v3593
    %v3902 = vpack.c.b16 %v3598, %v3594
    %v3903 = vpack.c.b16 %v3599, %v3595
    %v3904 = vpack.c.b16 %v3604, %v3600
    %v3905 = vpack.c.b16 %v3605, %v3601
    %v3906 = vpack.c.b16 %v3606, %v3602
    %v3907 = vpack.c.b16 %v3607, %v3603
    %v3908 = vpack.c.b16 %v3612, %v3608
    %v3909 = vpack.c.b16 %v3613, %v3609
    %v3910 = vpack.c.b16 %v3614, %v3610
    %v3911 = vpack.c.b16 %v3615, %v3611
    %v3912 = vpack.c.b16 %v3620, %v3616
    %v3913 = vpack.c.b16 %v3621, %v3617
    %v3914 = vpack.c.b16 %v3622, %v3618
    %v3915 = vpack.c.b16 %v3623, %v3619
    %v3916 = vpack.c.b16 %v3628, %v3624
    %v3917 = vpack.c.b16 %v3629, %v3625
    %v3918 = vpack.c.b16 %v3630, %v3626
    %v3919 = vpack.c.b16 %v3631, %v3627
    %v3920 = vpack.c.b16 %v3636, %v3632
    %v3921 = vpack.c.b16 %v3637, %v3633
    %v3922 = vpack.c.b16 %v3638, %v3634
    %v3923 = vpack.c.b16 %v3639, %v3635
    %v3924 = vpack.c.b16 %v3644, %v3640
    %v3925 = vpack.c.b16 %v3645, %v3641
    %v3926 = vpack.c.b16 %v3646, %v3642
    %v3927 = vpack.c.b16 %v3647, %v3643
    %v3928 = vpack.c.b16 %v3652, %v3648
    %v3929 = vpack.c.b16 %v3653, %v3649
    %v3930 = vpack.c.b16 %v3654, %v3650
    %v3931 = vpack.c.b16 %v3655, %v3651
    %v3932 = vpack.c.b16 %v3660, %v3656
    %v3933 = vpack.c.b16 %v3661, %v3657
    %v3934 = vpack.c.b16 %v3662, %v3658
    %v3935 = vpack.c.b16 %v3663, %v3659
    %v3936 = vpack.c.b16 %v3668, %v3664
    %v3937 = vpack.c.b16 %v3669, %v3665
    %v3938 = vpack.c.b16 %v3670, %v3666
    %v3939 = vpack.c.b16 %v3671, %v3667
    %v3940 = vpack.c.b16 %v3676, %v3672
    %v3941 = vpack.c.b16 %v3677, %v3673
    %v3942 = vpack.c.b16 %v3678, %v3674
    %v3943 = vpack.c.b16 %v3679, %v3675
    %v3944 = vpack.c.b16 %v3684, %v3680
    %v3945 = vpack.c.b16 %v3685, %v3681
    %v3946 = vpack.c.b16 %v3686, %v3682
    %v3947 = vpack.c.b16 %v3687, %v3683
    %v3948 = vpack.c.b16 %v3692, %v3688
    %v3949 = vpack.c.b16 %v3693, %v3689
    %v3950 = vpack.c.b16 %v3694, %v3690
    %v3951 = vpack.c.b16 %v3695, %v3691
    %v3952 = vpack.c.b16 %v3700, %v3696
    %v3953 = vpack.c.b16 %v3701, %v3697
    %v3954 = vpack.c.b16 %v3702, %v3698
    %v3955 = vpack.c.b16 %v3703, %v3699
    %v3956 = vpack.c.b16 %v3708, %v3704
    %v3957 = vpack.c.b16 %v3709, %v3705
    %v3958 = vpack.c.b16 %v3710, %v3706
    %v3959 = vpack.c.b16 %v3711, %v3707
    %v3960 = vpack.c.b16 %v3716, %v3712
    %v3961 = vpack.c.b16 %v3717, %v3713
    %v3962 = vpack.c.b16 %v3718, %v3714
    %v3963 = vpack.c.b16 %v3719, %v3715
    %v3964 = vpack.c.b16 %v3724, %v3720
    %v3965 = vpack.c.b16 %v3725, %v3721
    %v3966 = vpack.c.b16 %v3726, %v3722
    %v3967 = vpack.c.b16 %v3727, %v3723
    %v3968 = vpack.c.b16 %v3732, %v3728
    %v3969 = vpack.c.b16 %v3733, %v3729
    %v3970 = vpack.c.b16 %v3734, %v3730
    %v3971 = vpack.c.b16 %v3735, %v3731
    %v3972 = vpack.c.b16 %v3740, %v3736
    %v3973 = vpack.c.b16 %v3741, %v3737
    %v3974 = vpack.c.b16 %v3742, %v3738
    %v3975 = vpack.c.b16 %v3743, %v3739
    %v3976 = vpack.c.b16 %v3748, %v3744
    %v3977 = vpack.c.b16 %v3749, %v3745
    %v3978 = vpack.c.b16 %v3750, %v3746
    %v3979 = vpack.c.b16 %v3751, %v3747
    %v3980 = vpack.c.b16 %v3756, %v3752
    %v3981 = vpack.c.b16 %v3757, %v3753
    %v3982 = vpack.c.b16 %v3758, %v3754
    %v3983 = vpack.c.b16 %v3759, %v3755
    %v3984 = vpack.c.b16 %v3764, %v3760
    %v3985 = vpack.c.b16 %v3765, %v3761
    %v3986 = vpack.c.b16 %v3766, %v3762
    %v3987 = vpack.c.b16 %v3767, %v3763
    %v3988 = vpack.c.b16 %v3772, %v3768
    %v3989 = vpack.c.b16 %v3773, %v3769
    %v3990 = vpack.c.b16 %v3774, %v3770
    %v3991 = vpack.c.b16 %v3775, %v3771
    %v3992 = vpack.c.b16 %v3780, %v3776
    %v3993 = vpack.c.b16 %v3781, %v3777
    %v3994 = vpack.c.b16 %v3782, %v3778
    %v3995 = vpack.c.b16 %v3783, %v3779
    %v3996 = vpack.c.b16 %v3788, %v3784
    %v3997 = vpack.c.b16 %v3789, %v3785
    %v3998 = vpack.c.b16 %v3790, %v3786
    %v3999 = vpack.c.b16 %v3791, %v3787
    %v4000 = vpack.c.b16 %v3796, %v3792
    %v4001 = vpack.c.b16 %v3797, %v3793
    %v4002 = vpack.c.b16 %v3798, %v3794
    %v4003 = vpack.c.b16 %v3799, %v3795
    %v4004 = vpack.c.b16 %v3804, %v3800
    %v4005 = vpack.c.b16 %v3805, %v3801
    %v4006 = vpack.c.b16 %v3806, %v3802
    %v4007 = vpack.c.b16 %v3807, %v3803
    %v4209 = vsel %vm2316, %v2985, 0
    %4211 = vmatprep.subr.bf16.mxu0 %v3809
    %4212 = vmatpush1.bf16.msra.mxu0 %v3808
    %4213 = vmatprep.subr.bf16.mxu0 %v3813
    %4214 = vmatpush1.bf16.msra.mxu0 %v3812
    %4215 = vmatprep.subr.bf16.mxu0 %v3817
    %4216 = vmatpush1.bf16.msra.mxu0 %v3816
    %4217 = vmatprep.subr.bf16.mxu0 %v3821
    %4218 = vmatpush1.bf16.msra.mxu0 %v3820
    %4219 = vmatprep.subr.bf16.mxu0 %v3825
    %4220 = vmatpush1.bf16.msra.mxu0 %v3824
    %4221 = vmatprep.subr.bf16.mxu0 %v3829
    %4222 = vmatpush1.bf16.msra.mxu0 %v3828
    %4223 = vmatprep.subr.bf16.mxu0 %v3833
    %4224 = vmatpush1.bf16.msra.mxu0 %v3832
    %4225 = vmatprep.subr.bf16.mxu0 %v3837
    %4226 = vmatpush1.bf16.msra.mxu0 %v3836
    %4227 = vmatprep.subr.bf16.mxu0 %v3841
    %4228 = vmatpush1.bf16.msra.mxu0 %v3840
    %4229 = vmatprep.subr.bf16.mxu0 %v3845
    %4230 = vmatpush1.bf16.msra.mxu0 %v3844
    %4231 = vmatprep.subr.bf16.mxu0 %v3849
    %4232 = vmatpush1.bf16.msra.mxu0 %v3848
    %4233 = vmatprep.subr.bf16.mxu0 %v3853
    %4234 = vmatpush1.bf16.msra.mxu0 %v3852
    %4235 = vmatprep.subr.bf16.mxu0 %v3857
    %4236 = vmatpush1.bf16.msra.mxu0 %v3856
    %4237 = vmatprep.subr.bf16.mxu0 %v3861
    %4238 = vmatpush1.bf16.msra.mxu0 %v3860
    %4239 = vmatprep.subr.bf16.mxu0 %v3865
    %4240 = vmatpush1.bf16.msra.mxu0 %v3864
    %4241 = vmatprep.subr.bf16.mxu0 %v3869
    %4242 = vmatpush1.bf16.msra.mxu0 %v3868
    %4243 = vmatprep.mubr.bf16.mxu0 %v2980
    %4244 = vmatmul.mubr.bf16.gmra.mrb[0].mxu0 %v2979
    %v4245 = vpop.f32.mrb[0].mxu0
    %v4246 = vadd.f32 %v3191, %v4245
    %v4247 = vpop.f32.mrb[0].mxu0
    %v4248 = vadd.f32 %v3195, %v4247
    %v4249 = vpop.f32.mrb[0].mxu0
    %v4250 = vpop.f32.mrb[0].mxu0
    %4251 = vdwg.mxu0
    %4252 = vmatprep.subr.bf16.mxu0 %v3873
    %4253 = vmatpush1.bf16.msra.mxu0 %v3872
    %4254 = vmatprep.subr.bf16.mxu0 %v3877
    %4255 = vmatpush1.bf16.msra.mxu0 %v3876
    %4256 = vmatprep.subr.bf16.mxu0 %v3881
    %4257 = vmatpush1.bf16.msra.mxu0 %v3880
    %4258 = vmatprep.subr.bf16.mxu0 %v3885
    %4259 = vmatpush1.bf16.msra.mxu0 %v3884
    %4260 = vmatprep.subr.bf16.mxu0 %v3889
    %4261 = vmatpush1.bf16.msra.mxu0 %v3888
    %4262 = vmatprep.subr.bf16.mxu0 %v3893
    %4263 = vmatpush1.bf16.msra.mxu0 %v3892
    %4264 = vmatprep.subr.bf16.mxu0 %v3897
    %4265 = vmatpush1.bf16.msra.mxu0 %v3896
    %4266 = vmatprep.subr.bf16.mxu0 %v3901
    %4267 = vmatpush1.bf16.msra.mxu0 %v3900
    %4268 = vmatprep.subr.bf16.mxu0 %v3905
    %4269 = vmatpush1.bf16.msra.mxu0 %v3904
    %4270 = vmatprep.subr.bf16.mxu0 %v3909
    %4271 = vmatpush1.bf16.msra.mxu0 %v3908
    %4272 = vmatprep.subr.bf16.mxu0 %v3913
    %4273 = vmatpush1.bf16.msra.mxu0 %v3912
    %4274 = vmatprep.subr.bf16.mxu0 %v3917
    %4275 = vmatpush1.bf16.msra.mxu0 %v3916
    %4276 = vmatprep.subr.bf16.mxu0 %v3921
    %4277 = vmatpush1.bf16.msra.mxu0 %v3920
    %4278 = vmatprep.subr.bf16.mxu0 %v3925
    %4279 = vmatpush1.bf16.msra.mxu0 %v3924
    %4280 = vmatprep.subr.bf16.mxu0 %v3929
    %4281 = vmatpush1.bf16.msra.mxu0 %v3928
    %4282 = vmatprep.subr.bf16.mxu0 %v3933
    %4283 = vmatpush1.bf16.msra.mxu0 %v3932
    %4284 = vmatprep.mubr.bf16.mxu0 %v2982
    %4285 = vmatmul.mubr.bf16.gmra.mrb[0].mxu0 %v2981
    %v4286 = vpop.f32.mrb[0].mxu0
    %v4287 = vadd.f32 %v4246, %v4286
    %v4288 = vpop.f32.mrb[0].mxu0
    %v4289 = vadd.f32 %v4248, %v4288
    %v4290 = vpop.f32.mrb[0].mxu0
    %v4291 = vpop.f32.mrb[0].mxu0
    %4292 = vdwg.mxu0
    %4293 = vmatprep.subr.bf16.mxu0 %v3937
    %4294 = vmatpush1.bf16.msra.mxu0 %v3936
    %4295 = vmatprep.subr.bf16.mxu0 %v3941
    %4296 = vmatpush1.bf16.msra.mxu0 %v3940
    %4297 = vmatprep.subr.bf16.mxu0 %v3945
    %4298 = vmatpush1.bf16.msra.mxu0 %v3944
    %4299 = vmatprep.subr.bf16.mxu0 %v3949
    %4300 = vmatpush1.bf16.msra.mxu0 %v3948
    %4301 = vmatprep.subr.bf16.mxu0 %v3953
    %4302 = vmatpush1.bf16.msra.mxu0 %v3952
    %4303 = vmatprep.subr.bf16.mxu0 %v3957
    %4304 = vmatpush1.bf16.msra.mxu0 %v3956
    %4305 = vmatprep.subr.bf16.mxu0 %v3961
    %4306 = vmatpush1.bf16.msra.mxu0 %v3960
    %4307 = vmatprep.subr.bf16.mxu0 %v3965
    %4308 = vmatpush1.bf16.msra.mxu0 %v3964
    %4309 = vmatprep.subr.bf16.mxu0 %v3969
    %4310 = vmatpush1.bf16.msra.mxu0 %v3968
    %4311 = vmatprep.subr.bf16.mxu0 %v3973
    %4312 = vmatpush1.bf16.msra.mxu0 %v3972
    %4313 = vmatprep.subr.bf16.mxu0 %v3977
    %4314 = vmatpush1.bf16.msra.mxu0 %v3976
    %4315 = vmatprep.subr.bf16.mxu0 %v3981
    %4316 = vmatpush1.bf16.msra.mxu0 %v3980
    %4317 = vmatprep.subr.bf16.mxu0 %v3985
    %4318 = vmatpush1.bf16.msra.mxu0 %v3984
    %4319 = vmatprep.subr.bf16.mxu0 %v3989
    %4320 = vmatpush1.bf16.msra.mxu0 %v3988
    %4321 = vmatprep.subr.bf16.mxu0 %v3993
    %4322 = vmatpush1.bf16.msra.mxu0 %v3992
    %4323 = vmatprep.subr.bf16.mxu0 %v3997
    %4324 = vmatpush1.bf16.msra.mxu0 %v3996
    %4325 = vmatprep.mubr.bf16.mxu0 %v2984
    %4326 = vmatmul.mubr.bf16.gmra.mrb[0].mxu0 %v2983
    %v4327 = vpop.f32.mrb[0].mxu0
    %v4328 = vadd.f32 %v4287, %v4327
    %v4329 = vpop.f32.mrb[0].mxu0
    %v4330 = vadd.f32 %v4289, %v4329
    %v4331 = vpop.f32.mrb[0].mxu0
    %v4332 = vpop.f32.mrb[0].mxu0
    %4333 = vdwg.mxu0
    %4334 = vmatprep.subr.bf16.mxu0 %v4001
    %4335 = vmatpush1.bf16.msra.mxu0 %v4000
    %4336 = vmatprep.subr.bf16.mxu0 %v4005
    %4337 = vmatpush1.bf16.msra.mxu0 %v4004
    %4338 = vmatprep.subr.bf16.mxu0 0
    %4339 = vmatpush1.bf16.msra.mxu0 0
    %4340 = vmatprep.subr.bf16.mxu0 0
    %4341 = vmatpush1.bf16.msra.mxu0 0
    %4342 = vmatprep.subr.bf16.mxu0 0
    %4343 = vmatpush1.bf16.msra.mxu0 0
    %4344 = vmatprep.subr.bf16.mxu0 0
    %4345 = vmatpush1.bf16.msra.mxu0 0
    %4346 = vmatprep.subr.bf16.mxu0 0
    %4347 = vmatpush1.bf16.msra.mxu0 0
    %4348 = vmatprep.subr.bf16.mxu0 0
    %4349 = vmatpush1.bf16.msra.mxu0 0
    %4350 = vmatprep.subr.bf16.mxu0 0
    %4351 = vmatpush1.bf16.msra.mxu0 0
    %4352 = vmatprep.subr.bf16.mxu0 0
    %4353 = vmatpush1.bf16.msra.mxu0 0
    %4354 = vmatprep.subr.bf16.mxu0 0
    %4355 = vmatpush1.bf16.msra.mxu0 0
    %4356 = vmatprep.subr.bf16.mxu0 0
    %4357 = vmatpush1.bf16.msra.mxu0 0
    %4358 = vmatprep.subr.bf16.mxu0 0
    %4359 = vmatpush1.bf16.msra.mxu0 0
    %4360 = vmatprep.subr.bf16.mxu0 0
    %4361 = vmatpush1.bf16.msra.mxu0 0
    %4362 = vmatprep.subr.bf16.mxu0 0
    %4363 = vmatpush1.bf16.msra.mxu0 0
    %4364 = vmatprep.subr.bf16.mxu0 0
    %4365 = vmatpush1.bf16.msra.mxu0 0
    %4366 = vmatprep.mubr.bf16.mxu0 0
    %4367 = vmatmul.mubr.bf16.gmra.mrb[0].mxu0 %v4209
    %v4368 = vpop.f32.mrb[0].mxu0
    %v4369 = vadd.f32 %v4328, %v4368
    %v4370 = vpop.f32.mrb[0].mxu0
    %v4371 = vadd.f32 %v4330, %v4370
    %v4372 = vpop.f32.mrb[0].mxu0
    %v4373 = vpop.f32.mrb[0].mxu0
    %4374 = vdwg.mxu0
    %4375 = vmatprep.subr.bf16.mxu0 %v3811
    %4376 = vmatpush1.bf16.msra.mxu0 %v3810
    %4377 = vmatprep.subr.bf16.mxu0 %v3815
    %4378 = vmatpush1.bf16.msra.mxu0 %v3814
    %4379 = vmatprep.subr.bf16.mxu0 %v3819
    %4380 = vmatpush1.bf16.msra.mxu0 %v3818
    %4381 = vmatprep.subr.bf16.mxu0 %v3823
    %4382 = vmatpush1.bf16.msra.mxu0 %v3822
    %4383 = vmatprep.subr.bf16.mxu0 %v3827
    %4384 = vmatpush1.bf16.msra.mxu0 %v3826
    %4385 = vmatprep.subr.bf16.mxu0 %v3831
    %4386 = vmatpush1.bf16.msra.mxu0 %v3830
    %4387 = vmatprep.subr.bf16.mxu0 %v3835
    %4388 = vmatpush1.bf16.msra.mxu0 %v3834
    %4389 = vmatprep.subr.bf16.mxu0 %v3839
    %4390 = vmatpush1.bf16.msra.mxu0 %v3838
    %4391 = vmatprep.subr.bf16.mxu0 %v3843
    %4392 = vmatpush1.bf16.msra.mxu0 %v3842
    %4393 = vmatprep.subr.bf16.mxu0 %v3847
    %4394 = vmatpush1.bf16.msra.mxu0 %v3846
    %4395 = vmatprep.subr.bf16.mxu0 %v3851
    %4396 = vmatpush1.bf16.msra.mxu0 %v3850
    %4397 = vmatprep.subr.bf16.mxu0 %v3855
    %4398 = vmatpush1.bf16.msra.mxu0 %v3854
    %4399 = vmatprep.subr.bf16.mxu0 %v3859
    %4400 = vmatpush1.bf16.msra.mxu0 %v3858
    %4401 = vmatprep.subr.bf16.mxu0 %v3863
    %4402 = vmatpush1.bf16.msra.mxu0 %v3862
    %4403 = vmatprep.subr.bf16.mxu0 %v3867
    %4404 = vmatpush1.bf16.msra.mxu0 %v3866
    %4405 = vmatprep.subr.bf16.mxu0 %v3871
    %4406 = vmatpush1.bf16.msra.mxu0 %v3870
    %4407 = vmatprep.mubr.bf16.mxu0 %v2980
    %4408 = vmatmul.mubr.bf16.gmra.mrb[0].mxu0 %v2979
    %v4409 = vpop.f32.mrb[0].mxu0
    %v4410 = vadd.f32 %v3199, %v4409
    %v4411 = vpop.f32.mrb[0].mxu0
    %v4412 = vadd.f32 %v3203, %v4411
    %v4413 = vpop.f32.mrb[0].mxu0
    %v4414 = vpop.f32.mrb[0].mxu0
    %4415 = vdwg.mxu0
    %4416 = vmatprep.subr.bf16.mxu0 %v3875
    %4417 = vmatpush1.bf16.msra.mxu0 %v3874
    %4418 = vmatprep.subr.bf16.mxu0 %v3879
    %4419 = vmatpush1.bf16.msra.mxu0 %v3878
    %4420 = vmatprep.subr.bf16.mxu0 %v3883
    %4421 = vmatpush1.bf16.msra.mxu0 %v3882
    %4422 = vmatprep.subr.bf16.mxu0 %v3887
    %4423 = vmatpush1.bf16.msra.mxu0 %v3886
    %4424 = vmatprep.subr.bf16.mxu0 %v3891
    %4425 = vmatpush1.bf16.msra.mxu0 %v3890
    %4426 = vmatprep.subr.bf16.mxu0 %v3895
    %4427 = vmatpush1.bf16.msra.mxu0 %v3894
    %4428 = vmatprep.subr.bf16.mxu0 %v3899
    %4429 = vmatpush1.bf16.msra.mxu0 %v3898
    %4430 = vmatprep.subr.bf16.mxu0 %v3903
    %4431 = vmatpush1.bf16.msra.mxu0 %v3902
    %4432 = vmatprep.subr.bf16.mxu0 %v3907
    %4433 = vmatpush1.bf16.msra.mxu0 %v3906
    %4434 = vmatprep.subr.bf16.mxu0 %v3911
    %4435 = vmatpush1.bf16.msra.mxu0 %v3910
    %4436 = vmatprep.subr.bf16.mxu0 %v3915
    %4437 = vmatpush1.bf16.msra.mxu0 %v3914
    %4438 = vmatprep.subr.bf16.mxu0 %v3919
    %4439 = vmatpush1.bf16.msra.mxu0 %v3918
    %4440 = vmatprep.subr.bf16.mxu0 %v3923
    %4441 = vmatpush1.bf16.msra.mxu0 %v3922
    %4442 = vmatprep.subr.bf16.mxu0 %v3927
    %4443 = vmatpush1.bf16.msra.mxu0 %v3926
    %4444 = vmatprep.subr.bf16.mxu0 %v3931
    %4445 = vmatpush1.bf16.msra.mxu0 %v3930
    %4446 = vmatprep.subr.bf16.mxu0 %v3935
    %4447 = vmatpush1.bf16.msra.mxu0 %v3934
    %4448 = vmatprep.mubr.bf16.mxu0 %v2982
    %4449 = vmatmul.mubr.bf16.gmra.mrb[0].mxu0 %v2981
    %v4450 = vpop.f32.mrb[0].mxu0
    %v4451 = vadd.f32 %v4410, %v4450
    %v4452 = vpop.f32.mrb[0].mxu0
    %v4453 = vadd.f32 %v4412, %v4452
    %v4454 = vpop.f32.mrb[0].mxu0
    %v4455 = vpop.f32.mrb[0].mxu0
    %4456 = vdwg.mxu0
    %4457 = vmatprep.subr.bf16.mxu0 %v3939
    %4458 = vmatpush1.bf16.msra.mxu0 %v3938
    %4459 = vmatprep.subr.bf16.mxu0 %v3943
    %4460 = vmatpush1.bf16.msra.mxu0 %v3942
    %4461 = vmatprep.subr.bf16.mxu0 %v3947
    %4462 = vmatpush1.bf16.msra.mxu0 %v3946
    %4463 = vmatprep.subr.bf16.mxu0 %v3951
    %4464 = vmatpush1.bf16.msra.mxu0 %v3950
    %4465 = vmatprep.subr.bf16.mxu0 %v3955
    %4466 = vmatpush1.bf16.msra.mxu0 %v3954
    %4467 = vmatprep.subr.bf16.mxu0 %v3959
    %4468 = vmatpush1.bf16.msra.mxu0 %v3958
    %4469 = vmatprep.subr.bf16.mxu0 %v3963
    %4470 = vmatpush1.bf16.msra.mxu0 %v3962
    %4471 = vmatprep.subr.bf16.mxu0 %v3967
    %4472 = vmatpush1.bf16.msra.mxu0 %v3966
    %4473 = vmatprep.subr.bf16.mxu0 %v3971
    %4474 = vmatpush1.bf16.msra.mxu0 %v3970
    %4475 = vmatprep.subr.bf16.mxu0 %v3975
    %4476 = vmatpush1.bf16.msra.mxu0 %v3974
    %4477 = vmatprep.subr.bf16.mxu0 %v3979
    %4478 = vmatpush1.bf16.msra.mxu0 %v3978
    %4479 = vmatprep.subr.bf16.mxu0 %v3983
    %4480 = vmatpush1.bf16.msra.mxu0 %v3982
    %4481 = vmatprep.subr.bf16.mxu0 %v3987
    %4482 = vmatpush1.bf16.msra.mxu0 %v3986
    %4483 = vmatprep.subr.bf16.mxu0 %v3991
    %4484 = vmatpush1.bf16.msra.mxu0 %v3990
    %4485 = vmatprep.subr.bf16.mxu0 %v3995
    %4486 = vmatpush1.bf16.msra.mxu0 %v3994
    %4487 = vmatprep.subr.bf16.mxu0 %v3999
    %4488 = vmatpush1.bf16.msra.mxu0 %v3998
    %4489 = vmatprep.mubr.bf16.mxu0 %v2984
    %4490 = vmatmul.mubr.bf16.gmra.mrb[0].mxu0 %v2983
    %v4491 = vpop.f32.mrb[0].mxu0
    %v4492 = vadd.f32 %v4451, %v4491
    %v4493 = vpop.f32.mrb[0].mxu0
    %v4494 = vadd.f32 %v4453, %v4493
    %v4495 = vpop.f32.mrb[0].mxu0
    %v4496 = vpop.f32.mrb[0].mxu0
    %4497 = vdwg.mxu0
    %4498 = vmatprep.subr.bf16.mxu0 %v4003
    %4499 = vmatpush1.bf16.msra.mxu0 %v4002
    %4500 = vmatprep.subr.bf16.mxu0 %v4007
    %4501 = vmatpush1.bf16.msra.mxu0 %v4006
    %4502 = vmatprep.subr.bf16.mxu0 0
    %4503 = vmatpush1.bf16.msra.mxu0 0
    %4504 = vmatprep.subr.bf16.mxu0 0
    %4505 = vmatpush1.bf16.msra.mxu0 0
    %4506 = vmatprep.subr.bf16.mxu0 0
    %4507 = vmatpush1.bf16.msra.mxu0 0
    %4508 = vmatprep.subr.bf16.mxu0 0
    %4509 = vmatpush1.bf16.msra.mxu0 0
    %4510 = vmatprep.subr.bf16.mxu0 0
    %4511 = vmatpush1.bf16.msra.mxu0 0
    %4512 = vmatprep.subr.bf16.mxu0 0
    %4513 = vmatpush1.bf16.msra.mxu0 0
    %4514 = vmatprep.subr.bf16.mxu0 0
    %4515 = vmatpush1.bf16.msra.mxu0 0
    %4516 = vmatprep.subr.bf16.mxu0 0
    %4517 = vmatpush1.bf16.msra.mxu0 0
    %4518 = vmatprep.subr.bf16.mxu0 0
    %4519 = vmatpush1.bf16.msra.mxu0 0
    %4520 = vmatprep.subr.bf16.mxu0 0
    %4521 = vmatpush1.bf16.msra.mxu0 0
    %4522 = vmatprep.subr.bf16.mxu0 0
    %4523 = vmatpush1.bf16.msra.mxu0 0
    %4524 = vmatprep.subr.bf16.mxu0 0
    %4525 = vmatpush1.bf16.msra.mxu0 0
    %4526 = vmatprep.subr.bf16.mxu0 0
    %4527 = vmatpush1.bf16.msra.mxu0 0
    %4528 = vmatprep.subr.bf16.mxu0 0
    %4529 = vmatpush1.bf16.msra.mxu0 0
    %4530 = vmatprep.mubr.bf16.mxu0 0
    %4531 = vmatmul.mubr.bf16.gmra.mrb[0].mxu0 %v4209
    %v4532 = vpop.f32.mrb[0].mxu0
    %v4533 = vadd.f32 %v4492, %v4532
    %v4534 = vpop.f32.mrb[0].mxu0
    %v4535 = vadd.f32 %v4494, %v4534
    %v4536 = vpop.f32.mrb[0].mxu0
    %v4537 = vpop.f32.mrb[0].mxu0
    %4538 = vdwg.mxu0
    %v4539 = vmax.f32 %v4369, 0.0
    %v4540 = vmax.f32 %v4371, 0.0
    %v4541 = vmax.f32 %v4533, 0.0
    %v4542 = vmax.f32 %v4535, 0.0
    %v4543 = vpack.c.bf16 %v4539, %v4539
    %v4544 = vpack.c.bf16 %v4540, %v4540
    %v4545 = vpack.c.bf16 %v4541, %v4541
    %v4546 = vpack.c.bf16 %v4542, %v4542
    %v4547 = vld [vmem:[%s5] sm:$0xf]
    %v4548 = vld [vmem:[%s5 + $0x4] sm:$0xf]
    %v4549 = vld [vmem:[%s5 + $0x8] sm:$0xf]
    %v4550 = vld [vmem:[%s5 + $0xc] sm:$0xf]
    %v4551 = vld [vmem:[%s5 + $0x10] sm:$0xf]
    %v4552 = vld [vmem:[%s5 + $0x14] sm:$0xf]
    %v4553 = vld [vmem:[%s5 + $0x18] sm:$0xf]
    %v4554 = vld [vmem:[%s5 + $0x1c] sm:$0xf]
    %v4555 = vld [vmem:[%s5 + $0x20] sm:$0xf]
    %v4556 = vld [vmem:[%s5 + $0x24] sm:$0xf]
    %v4557 = vld [vmem:[%s5 + $0x28] sm:$0xf]
    %v4558 = vld [vmem:[%s5 + $0x2c] sm:$0xf]
    %v4559 = vld [vmem:[%s5 + $0x30] sm:$0xf]
    %v4560 = vld [vmem:[%s5 + $0x34] sm:$0xf]
    %v4561 = vld [vmem:[%s5 + $0x38] sm:$0xf]
    %v4562 = vld [vmem:[%s5 + $0x3c] sm:$0xf]
    %v4563 = vld [vmem:[%s5 + $0x40] sm:$0xf]
    %v4564 = vld [vmem:[%s5 + $0x44] sm:$0xf]
    %v4565 = vld [vmem:[%s5 + $0x48] sm:$0xf]
    %v4566 = vld [vmem:[%s5 + $0x4c] sm:$0xf]
    %v4567 = vld [vmem:[%s5 + $0x50] sm:$0xf]
    %v4568 = vld [vmem:[%s5 + $0x54] sm:$0xf]
    %v4569 = vld [vmem:[%s5 + $0x58] sm:$0xf]
    %v4570 = vld [vmem:[%s5 + $0x5c] sm:$0xf]
    %v4571 = vld [vmem:[%s5 + $0x60] sm:$0xf]
    %v4572 = vld [vmem:[%s5 + $0x64] sm:$0xf]
    %v4573 = vld [vmem:[%s5 + $0x68] sm:$0xf]
    %v4574 = vld [vmem:[%s5 + $0x6c] sm:$0xf]
    %v4575 = vld [vmem:[%s5 + $0x70] sm:$0xf]
    %v4576 = vld [vmem:[%s5 + $0x74] sm:$0xf]
    %v4577 = vld [vmem:[%s5 + $0x78] sm:$0xf]
    %v4578 = vld [vmem:[%s5 + $0x7c] sm:$0xf]
    %v4579 = vld [vmem:[%s5 + $0x80] sm:$0xf]
    %v4580 = vld [vmem:[%s5 + $0x84] sm:$0xf]
    %v4581 = vld [vmem:[%s5 + $0x88] sm:$0xf]
    %v4582 = vld [vmem:[%s5 + $0x8c] sm:$0xf]
    %v4583 = vld [vmem:[%s5 + $0x90] sm:$0xf]
    %v4584 = vld [vmem:[%s5 + $0x94] sm:$0xf]
    %v4585 = vld [vmem:[%s5 + $0x98] sm:$0xf]
    %v4586 = vld [vmem:[%s5 + $0x9c] sm:$0xf]
    %v4587 = vld [vmem:[%s5 + $0xa0] sm:$0xf]
    %v4588 = vld [vmem:[%s5 + $0xa4] sm:$0xf]
    %v4589 = vld [vmem:[%s5 + $0xa8] sm:$0xf]
    %v4590 = vld [vmem:[%s5 + $0xac] sm:$0xf]
    %v4591 = vld [vmem:[%s5 + $0xb0] sm:$0xf]
    %v4592 = vld [vmem:[%s5 + $0xb4] sm:$0xf]
    %v4593 = vld [vmem:[%s5 + $0xb8] sm:$0xf]
    %v4594 = vld [vmem:[%s5 + $0xbc] sm:$0xf]
    %v4595 = vld [vmem:[%s5 + $0xc0] sm:$0xf]
    %v4596 = vld [vmem:[%s5 + $0xc4] sm:$0xf]
    %v4597 = vld [vmem:[%s5 + $0xc8] sm:$0xf]
    %v4598 = vld [vmem:[%s5 + $0xcc] sm:$0xf]
    %v4599 = vld [vmem:[%s5 + $0xd0] sm:$0xf]
    %v4600 = vld [vmem:[%s5 + $0xd4] sm:$0xf]
    %v4601 = vld [vmem:[%s5 + $0xd8] sm:$0xf]
    %v4602 = vld [vmem:[%s5 + $0xdc] sm:$0xf]
    %v4603 = vld [vmem:[%s5 + $0xe0] sm:$0xf]
    %v4604 = vld [vmem:[%s5 + $0xe4] sm:$0xf]
    %v4605 = vld [vmem:[%s5 + $0xe8] sm:$0xf]
    %v4606 = vld [vmem:[%s5 + $0xec] sm:$0xf]
    %v4607 = vld [vmem:[%s5 + $0xf0] sm:$0xf]
    %v4608 = vld [vmem:[%s5 + $0xf4] sm:$0xf]
    %v4609 = vld [vmem:[%s5 + $0xf8] sm:$0x3]
    %v4610 = vld [vmem:[%s6] sm:$0x1]
    %v4612 = vlaneseq
    %v4613 = vshrl.u32 %v4612, 7
    %v4614 = vsub.s32 0, %v4613
    %v4615 = vrot.slane %v4610, %v4614
    %v4680 = vunpack.c.l.b16 %v4547
    %v4681 = vunpack.c.l.b16 %v4548
    %v4682 = vunpack.c.l.b16 %v4549
    %v4683 = vunpack.c.l.b16 %v4550
    %v4684 = vunpack.c.l.b16 %v4551
    %v4685 = vunpack.c.l.b16 %v4552
    %v4686 = vunpack.c.l.b16 %v4553
    %v4687 = vunpack.c.l.b16 %v4554
    %v4688 = vunpack.c.l.b16 %v4555
    %v4689 = vunpack.c.l.b16 %v4556
    %v4690 = vunpack.c.l.b16 %v4557
    %v4691 = vunpack.c.l.b16 %v4558
    %v4692 = vunpack.c.l.b16 %v4559
    %v4693 = vunpack.c.l.b16 %v4560
    %v4694 = vunpack.c.l.b16 %v4561
    %v4695 = vunpack.c.l.b16 %v4562
    %v4696 = vunpack.c.l.b16 %v4563
    %v4697 = vunpack.c.l.b16 %v4564
    %v4698 = vunpack.c.l.b16 %v4565
    %v4699 = vunpack.c.l.b16 %v4566
    %v4700 = vunpack.c.l.b16 %v4567
    %v4701 = vunpack.c.l.b16 %v4568
    %v4702 = vunpack.c.l.b16 %v4569
    %v4703 = vunpack.c.l.b16 %v4570
    %v4704 = vunpack.c.l.b16 %v4571
    %v4705 = vunpack.c.l.b16 %v4572
    %v4706 = vunpack.c.l.b16 %v4573
    %v4707 = vunpack.c.l.b16 %v4574
    %v4708 = vunpack.c.l.b16 %v4575
    %v4709 = vunpack.c.l.b16 %v4576
    %v4710 = vunpack.c.l.b16 %v4577
    %v4711 = vunpack.c.l.b16 %v4578
    %v4712 = vunpack.c.l.b16 %v4579
    %v4713 = vunpack.c.l.b16 %v4580
    %v4714 = vunpack.c.l.b16 %v4581
    %v4715 = vunpack.c.l.b16 %v4582
    %v4716 = vunpack.c.l.b16 %v4583
    %v4717 = vunpack.c.l.b16 %v4584
    %v4718 = vunpack.c.l.b16 %v4585
    %v4719 = vunpack.c.l.b16 %v4586
    %v4720 = vunpack.c.l.b16 %v4587
    %v4721 = vunpack.c.l.b16 %v4588
    %v4722 = vunpack.c.l.b16 %v4589
    %v4723 = vunpack.c.l.b16 %v4590
    %v4724 = vunpack.c.l.b16 %v4591
    %v4725 = vunpack.c.l.b16 %v4592
    %v4726 = vunpack.c.l.b16 %v4593
    %v4727 = vunpack.c.l.b16 %v4594
    %v4728 = vunpack.c.l.b16 %v4595
    %v4729 = vunpack.c.l.b16 %v4596
    %v4730 = vunpack.c.l.b16 %v4597
    %v4731 = vunpack.c.l.b16 %v4598
    %v4732 = vunpack.c.l.b16 %v4599
    %v4733 = vunpack.c.l.b16 %v4600
    %v4734 = vunpack.c.l.b16 %v4601
    %v4735 = vunpack.c.l.b16 %v4602
    %v4736 = vunpack.c.l.b16 %v4603
    %v4737 = vunpack.c.l.b16 %v4604
    %v4738 = vunpack.c.l.b16 %v4605
    %v4739 = vunpack.c.l.b16 %v4606
    %v4740 = vunpack.c.l.b16 %v4607
    %v4741 = vunpack.c.l.b16 %v4608
    %v4742 = vunpack.c.l.b16 %v4609
    %v4743 = vpack.c.b16 %v4681, %v4680
    %v4744 = vpack.c.b16 %v4683, %v4682
    %v4745 = vpack.c.b16 %v4685, %v4684
    %v4746 = vpack.c.b16 %v4687, %v4686
    %v4747 = vpack.c.b16 %v4689, %v4688
    %v4748 = vpack.c.b16 %v4691, %v4690
    %v4749 = vpack.c.b16 %v4693, %v4692
    %v4750 = vpack.c.b16 %v4695, %v4694
    %v4751 = vpack.c.b16 %v4697, %v4696
    %v4752 = vpack.c.b16 %v4699, %v4698
    %v4753 = vpack.c.b16 %v4701, %v4700
    %v4754 = vpack.c.b16 %v4703, %v4702
    %v4755 = vpack.c.b16 %v4705, %v4704
    %v4756 = vpack.c.b16 %v4707, %v4706
    %v4757 = vpack.c.b16 %v4709, %v4708
    %v4758 = vpack.c.b16 %v4711, %v4710
    %v4759 = vpack.c.b16 %v4713, %v4712
    %v4760 = vpack.c.b16 %v4715, %v4714
    %v4761 = vpack.c.b16 %v4717, %v4716
    %v4762 = vpack.c.b16 %v4719, %v4718
    %v4763 = vpack.c.b16 %v4721, %v4720
    %v4764 = vpack.c.b16 %v4723, %v4722
    %v4765 = vpack.c.b16 %v4725, %v4724
    %v4766 = vpack.c.b16 %v4727, %v4726
    %v4767 = vpack.c.b16 %v4729, %v4728
    %v4768 = vpack.c.b16 %v4731, %v4730
    %v4769 = vpack.c.b16 %v4733, %v4732
    %v4770 = vpack.c.b16 %v4735, %v4734
    %v4771 = vpack.c.b16 %v4737, %v4736
    %v4772 = vpack.c.b16 %v4739, %v4738
    %v4773 = vpack.c.b16 %v4741, %v4740
    %v4774 = vpack.c.b16 %v4742, %v4742
    %vm4806 = vcmask 949248
    %v4808 = vsel %vm4806, %v4546, 0
    %vm4810 = vcmask 1041408
    %v4812 = vsel %vm4810, %v4774, 0
    %4814 = vmatprep.subr.bf16.mxu0 0
    %4815 = vmatpush1.bf16.msra.mxu0 %v4743
    %4816 = vmatprep.subr.bf16.mxu0 0
    %4817 = vmatpush1.bf16.msra.mxu0 %v4744
    %4818 = vmatprep.subr.bf16.mxu0 0
    %4819 = vmatpush1.bf16.msra.mxu0 %v4745
    %4820 = vmatprep.subr.bf16.mxu0 0
    %4821 = vmatpush1.bf16.msra.mxu0 %v4746
    %4822 = vmatprep.subr.bf16.mxu0 0
    %4823 = vmatpush1.bf16.msra.mxu0 %v4747
    %4824 = vmatprep.subr.bf16.mxu0 0
    %4825 = vmatpush1.bf16.msra.mxu0 %v4748
    %4826 = vmatprep.subr.bf16.mxu0 0
    %4827 = vmatpush1.bf16.msra.mxu0 %v4749
    %4828 = vmatprep.subr.bf16.mxu0 0
    %4829 = vmatpush1.bf16.msra.mxu0 %v4750
    %4830 = vmatprep.subr.bf16.mxu0 0
    %4831 = vmatpush1.bf16.msra.mxu0 %v4751
    %4832 = vmatprep.subr.bf16.mxu0 0
    %4833 = vmatpush1.bf16.msra.mxu0 %v4752
    %4834 = vmatprep.subr.bf16.mxu0 0
    %4835 = vmatpush1.bf16.msra.mxu0 %v4753
    %4836 = vmatprep.subr.bf16.mxu0 0
    %4837 = vmatpush1.bf16.msra.mxu0 %v4754
    %4838 = vmatprep.subr.bf16.mxu0 0
    %4839 = vmatpush1.bf16.msra.mxu0 %v4755
    %4840 = vmatprep.subr.bf16.mxu0 0
    %4841 = vmatpush1.bf16.msra.mxu0 %v4756
    %4842 = vmatprep.subr.bf16.mxu0 0
    %4843 = vmatpush1.bf16.msra.mxu0 %v4757
    %4844 = vmatprep.subr.bf16.mxu0 0
    %4845 = vmatpush1.bf16.msra.mxu0 %v4758
    %4846 = vmatprep.mubr.bf16.mxu0 %v4544
    %4847 = vmatmul.mubr.bf16.gmra.mrb[0].mxu0 %v4543
    %v4848 = vpop.f32.mrb[0].mxu0
    %v4849 = vadd.f32 %v4615, %v4848
    %v4850 = vpop.f32.mrb[0].mxu0
    %v4851 = vpop.f32.mrb[0].mxu0
    %v4852 = vpop.f32.mrb[0].mxu0
    %4853 = vdwg.mxu0
    %4854 = vmatprep.subr.bf16.mxu0 0
    %4855 = vmatpush1.bf16.msra.mxu0 %v4759
    %4856 = vmatprep.subr.bf16.mxu0 0
    %4857 = vmatpush1.bf16.msra.mxu0 %v4760
    %4858 = vmatprep.subr.bf16.mxu0 0
    %4859 = vmatpush1.bf16.msra.mxu0 %v4761
    %4860 = vmatprep.subr.bf16.mxu0 0
    %4861 = vmatpush1.bf16.msra.mxu0 %v4762
    %4862 = vmatprep.subr.bf16.mxu0 0
    %4863 = vmatpush1.bf16.msra.mxu0 %v4763
    %4864 = vmatprep.subr.bf16.mxu0 0
    %4865 = vmatpush1.bf16.msra.mxu0 %v4764
    %4866 = vmatprep.subr.bf16.mxu0 0
    %4867 = vmatpush1.bf16.msra.mxu0 %v4765
    %4868 = vmatprep.subr.bf16.mxu0 0
    %4869 = vmatpush1.bf16.msra.mxu0 %v4766
    %4870 = vmatprep.subr.bf16.mxu0 0
    %4871 = vmatpush1.bf16.msra.mxu0 %v4767
    %4872 = vmatprep.subr.bf16.mxu0 0
    %4873 = vmatpush1.bf16.msra.mxu0 %v4768
    %4874 = vmatprep.subr.bf16.mxu0 0
    %4875 = vmatpush1.bf16.msra.mxu0 %v4769
    %4876 = vmatprep.subr.bf16.mxu0 0
    %4877 = vmatpush1.bf16.msra.mxu0 %v4770
    %4878 = vmatprep.subr.bf16.mxu0 0
    %4879 = vmatpush1.bf16.msra.mxu0 %v4771
    %4880 = vmatprep.subr.bf16.mxu0 0
    %4881 = vmatpush1.bf16.msra.mxu0 %v4772
    %4882 = vmatprep.subr.bf16.mxu0 0
    %4883 = vmatpush1.bf16.msra.mxu0 %v4773
    %4884 = vmatprep.subr.bf16.mxu0 0
    %4885 = vmatpush1.bf16.msra.mxu0 %v4812
    %4886 = vmatprep.mubr.bf16.mxu0 %v4808
    %4887 = vmatmul.mubr.bf16.gmra.mrb[0].mxu0 %v4545
    %v4888 = vpop.f32.mrb[0].mxu0
    %v4889 = vadd.f32 %v4849, %v4888
    %v4890 = vpop.f32.mrb[0].mxu0
    %v4891 = vpop.f32.mrb[0].mxu0
    %v4892 = vpop.f32.mrb[0].mxu0
    %4893 = vdwg.mxu0
    %vm4894 = vcmask 74752
    %4895 = vst.msk [vmem:[#allocation2] sm:$0x3] %vm4894, %v4889
    // Predicated region
    $region30: #{lenet_forward.5} parent=1 // pred_check
      _
    $region31: #{lenet_forward.5} parent=1 // pred_check_branch
      %4897 = sbr.rel (0) target = $region33
    $region32: #{lenet_forward.5} parent=1 // pred_region
      %s4899 = ssub.s32 32, 32
      %4900 = vsyncadd [#allocation3], %s4899
      %s4902 = sshll.u32 [#allocation2], 4
      %s4903 = int_to_ptr.vmem [resolvable:$true] %s4902
      %4905 = dma.vmem_to_hbm [thread:$0]  %s4903, 32, %s7, [#allocation3]
    $region33: #{lenet_forward.5} parent=1 // pred_fallthru
      _
    // Predicated region
    $region34: #{lenet_forward.5} parent=1 // pred_check
      _
    $region35: #{lenet_forward.5} parent=1 // pred_check_branch
      %4907 = sbr.rel (0) target = $region37
    $region36: #{lenet_forward.5} parent=1 // pred_region
      %4908 = dma.done [#allocation3], 32
    $region37: #{lenet_forward.5} parent=1 // pred_fallthru
      _
    %4909 = vsyncpa [#allocation3], 1

</llo_original>
